<compile_context>
chip_gen: v7x
topology: tpu7x:2x2x1
jax: 0.10.0
libtpu: 0.0.40
codegen_flags: <defaults>
</compile_context>

<pallas_src>
import functools

import jax
import jax.numpy as jnp
from jax import lax
from jax.experimental import pallas as pl
from jax.experimental.pallas import tpu as pltpu


# ------------------------------ Fused kernel -------------------------------- #

def fused_attn_kernel(x_ref, ps_ref, wq_ref, wk_ref, wv_ref, wout_ref, bout_ref,
                      o_ref, *, heads, scale):
    # Per grid step:
    #   x_ref   : (bb, N, dim)        patch tokens for `bb` batch elements
    #   ps_ref  : (bb, M, dim)        partial-structure tokens
    #   wq/wk/wv: (heads, dim, dh)    per-head projection weights (head-major)
    #   wout_ref: (heads, dh, dim)    per-head output-projection weights
    #   bout_ref: (1, dim)
    #   o_ref   : (bb, N, dim)
    bb, N, dim = o_ref.shape

    bias = bout_ref[...]                                        # (1, dim), hoisted

    for b in range(bb):                                         # static unrolled batch loop
        x_b = x_ref[b]                                          # (N, dim)
        ps_b = ps_ref[b]                                        # (M, dim)
        # Combined token matrix lives in vregs (no VMEM scratch, no HBM concat).
        comb = jnp.concatenate([x_b, ps_b], axis=0)             # (L, dim)

        # Fused head-merge + output-projection accumulator (f32).
        acc = jnp.zeros((N, dim), dtype=jnp.float32)

        for h in range(heads):                                  # static unrolled head loop
            # Leading-axis slices of the head-major weight refs are free
            # (no lane slicing / relayout).
            wq_h = wq_ref[h]                                    # (dim, dh)
            wk_h = wk_ref[h]
            wv_h = wv_ref[h]

            # Only the first N (patch) tokens need q; softmax scale folded into q.
            q_h = jnp.dot(x_b, wq_h, preferred_element_type=jnp.float32) * scale  # (N, dh)
            k_h = jnp.dot(comb, wk_h, preferred_element_type=jnp.float32)         # (L, dh)
            v_h = jnp.dot(comb, wv_h, preferred_element_type=jnp.float32)         # (L, dh)

            # q @ k^T without materializing a transpose: contract the last axes.
            dots = lax.dot_general(
                q_h, k_h, (((1,), (1,)), ((), ())),
                preferred_element_type=jnp.float32,
            )                                                                      # (N, L)

            # Numerically-stable, EXACT softmax (divide, not approx reciprocal).
            m = jnp.max(dots, axis=-1, keepdims=True)
            e = jnp.exp(dots - m)
            p = e / jnp.sum(e, axis=-1, keepdims=True)
            # dropout(p=0.0) in eval mode is the identity -> nothing to do.

            out_h = jnp.dot(p, v_h, preferred_element_type=jnp.float32)           # (N, dh)

            # Merge-heads + output projection fused: y += out_h @ W_out[h].
            acc = acc + jnp.dot(
                out_h, wout_ref[h], preferred_element_type=jnp.float32
            )                                                                      # (N, dim)

        o_ref[b] = (acc + bias).astype(o_ref.dtype)


# --------------------------------- Wrapper ----------------------------------- #

def attention_partial_structure(x, partial_structure, w_qkv, w_out, b_out, *,
                                heads, batch_block=None):
    """x: (B, N, dim), partial_structure: (B, M, dim).

    w_qkv: (dim, 3*inner)  (transposed PyTorch to_qkv weight, no bias)
    w_out: (inner, dim)    (transposed PyTorch to_out[0] weight)
    b_out: (1, dim)
    Returns (B, N, dim).
    """
    B, N, dim = x.shape
    M = partial_structure.shape[1]
    inner3 = w_qkv.shape[1]
    inner = inner3 // 3
    dh = inner // heads
    scale = float(dh) ** -0.5

    if batch_block is None:
        # Tiny batches: fold everything into one grid step (amortize per-step
        # overhead).  Larger even batches: 2 parallel steps of B/2 elements each
        # so both v7x TensorCores work (no-op annotation on v5e/v6e).
        batch_block = B if (B <= 2 or B % 2 != 0) else B // 2
    assert B % batch_block == 0, "batch_block must divide B"
    steps = B // batch_block

    # Wrapper-side layout plumbing: move the head axis to the front (major axis)
    # so the kernel never slices at dh-lane granularity.
    w_q, w_k, w_v = jnp.split(w_qkv, 3, axis=1)                 # each (dim, inner)
    w_q = w_q.reshape(dim, heads, dh).transpose(1, 0, 2)        # (heads, dim, dh)
    w_k = w_k.reshape(dim, heads, dh).transpose(1, 0, 2)
    w_v = w_v.reshape(dim, heads, dh).transpose(1, 0, 2)
    w_o = w_out.reshape(heads, dh, dim)                         # (heads, dh, dim)

    kernel = functools.partial(fused_attn_kernel, heads=heads, scale=scale)

    return pl.pallas_call(
        kernel,
        out_shape=jax.ShapeDtypeStruct((B, N, dim), x.dtype),
        grid=(steps,),
        in_specs=[
            pl.BlockSpec((batch_block, N, dim), lambda s: (s, 0, 0)),
            pl.BlockSpec((batch_block, M, dim), lambda s: (s, 0, 0)),
            # Grid-invariant weights: constant index_map -> no re-DMA between steps.
            pl.BlockSpec((heads, dim, dh), lambda s: (0, 0, 0)),
            pl.BlockSpec((heads, dim, dh), lambda s: (0, 0, 0)),
            pl.BlockSpec((heads, dim, dh), lambda s: (0, 0, 0)),
            pl.BlockSpec((heads, dh, dim), lambda s: (0, 0, 0)),
            pl.BlockSpec((1, dim), lambda s: (0, 0)),
        ],
        out_specs=pl.BlockSpec((batch_block, N, dim), lambda s: (s, 0, 0)),
        compiler_params=pltpu.CompilerParams(dimension_semantics=("parallel",)),
    )(x, partial_structure, w_q, w_k, w_v, w_o, b_out)


# ----------------------------- Pure-JAX reference ----------------------------- #

def reference(x, partial_structure, w_qkv, w_out, b_out, *, heads):
    B, N, dim = x.shape
    L = N + partial_structure.shape[1]
    inner = w_qkv.shape[1] // 3
    dh = inner // heads
    scale = float(dh) ** -0.5
    combined = jnp.concatenate([x, partial_structure], axis=1)
    qkv = combined @ w_qkv
    q, k, v = jnp.split(qkv, 3, axis=-1)
    to_heads = lambda t: t.reshape(B, L, heads, dh).transpose(0, 2, 1, 3)
    q, k, v = to_heads(q), to_heads(k), to_heads(v)
    mq = q[:, :, :N, :]
    dots = jnp.einsum("bhnd,bhld->bhnl", mq, k) * scale
    attn = jax.nn.softmax(dots, axis=-1)
    out = jnp.einsum("bhnl,bhld->bhnd", attn, v)
    out = out.transpose(0, 2, 1, 3).reshape(B, N, inner)
    return out @ w_out + b_out


# ----------------------------------- Main ------------------------------------- #

if __name__ == "__main__":
    # Small shapes consistent with the module.
    B, N, M = 2, 8, 8            # batch, patch_num, partial-structure tokens
    dim = 32                     # token embedding dim
    heads, dim_head = 4, 16      # inner_dim = 64, project_out = True
    inner = heads * dim_head

    key = jax.random.PRNGKey(0)
    kx, kp, kq, kw, kb = jax.random.split(key, 5)

    x = jax.random.normal(kx, (B, N, dim), dtype=jnp.float32)
    partial_structure = jax.random.normal(kp, (B, M, dim), dtype=jnp.float32)

    # Deterministic parameter init (PyTorch Linear-style uniform bounds),
    # stored pre-transposed as (in_features, out_features).
    bound_qkv = 1.0 / (dim ** 0.5)
    w_qkv = jax.random.uniform(kq, (dim, 3 * inner), jnp.float32,
                               minval=-bound_qkv, maxval=bound_qkv)
    bound_out = 1.0 / (inner ** 0.5)
    w_out = jax.random.uniform(kw, (inner, dim), jnp.float32,
                               minval=-bound_out, maxval=bound_out)
    b_out = jax.random.uniform(kb, (1, dim), jnp.float32,
                               minval=-bound_out, maxval=bound_out)

    y = attention_partial_structure(
        x, partial_structure, w_qkv, w_out, b_out, heads=heads
    )
    y = jax.block_until_ready(y)

    y_ref = reference(x, partial_structure, w_qkv, w_out, b_out, heads=heads)
    assert y.shape == (B, N, dim)
    # Exact softmax divide -> only matmul accumulation-order noise remains.
    assert jnp.allclose(y, y_ref, atol=1e-4, rtol=1e-4), "mismatch vs reference"

    print("KERNEL_OK")
</pallas_src>

<mosaic_0001>
module attributes {stable_mosaic.version = 11 : i64} {
  func.func @fused_attn_kernel(%arg0: i32, %arg1: memref<2x8x32xf32, #tpu.memory_space<vmem>>, %arg2: memref<2x8x32xf32, #tpu.memory_space<vmem>>, %arg3: memref<4x32x16xf32, #tpu.memory_space<vmem>>, %arg4: memref<4x32x16xf32, #tpu.memory_space<vmem>>, %arg5: memref<4x32x16xf32, #tpu.memory_space<vmem>>, %arg6: memref<4x16x32xf32, #tpu.memory_space<vmem>>, %arg7: memref<1x32xf32, #tpu.memory_space<vmem>>, %arg8: memref<2x8x32xf32, #tpu.memory_space<vmem>>) attributes {dimension_semantics = [#tpu.dimension_semantics<parallel>], iteration_bounds = array<i64: 1>, scalar_prefetch = 0 : i64, scratch_operands = 0 : i64, tpu.core_type = #tpu.core_type<tc>, window_params = [{transform_indices = @transform_0, window_bounds = array<i64: 2, 8, 32>}, {transform_indices = @transform_1, window_bounds = array<i64: 2, 8, 32>}, {pipeline_mode = #tpu.pipeline_mode<synchronous>, transform_indices = @transform_2, window_bounds = array<i64: 4, 32, 16>}, {pipeline_mode = #tpu.pipeline_mode<synchronous>, transform_indices = @transform_3, window_bounds = array<i64: 4, 32, 16>}, {pipeline_mode = #tpu.pipeline_mode<synchronous>, transform_indices = @transform_4, window_bounds = array<i64: 4, 32, 16>}, {pipeline_mode = #tpu.pipeline_mode<synchronous>, transform_indices = @transform_5, window_bounds = array<i64: 4, 16, 32>}, {pipeline_mode = #tpu.pipeline_mode<synchronous>, transform_indices = @transform_6, window_bounds = array<i64: 1, 32>}, {transform_indices = @transform_7, window_bounds = array<i64: 2, 8, 32>}]} {
    %c0 = arith.constant 0 : index
    %c0_0 = arith.constant 0 : index
    %0 = vector.load %arg7[%c0, %c0_0] : memref<1x32xf32, #tpu.memory_space<vmem>>, vector<1x32xf32>
    %c0_1 = arith.constant 0 : index
    %c0_2 = arith.constant 0 : index
    %c0_3 = arith.constant 0 : index
    %1 = vector.load %arg1[%c0_1, %c0_2, %c0_3] : memref<2x8x32xf32, #tpu.memory_space<vmem>>, vector<1x8x32xf32>
    %2 = vector.shape_cast %1 : vector<1x8x32xf32> to vector<8x32xf32>
    %c0_4 = arith.constant 0 : index
    %c0_5 = arith.constant 0 : index
    %c0_6 = arith.constant 0 : index
    %3 = vector.load %arg2[%c0_4, %c0_5, %c0_6] : memref<2x8x32xf32, #tpu.memory_space<vmem>>, vector<1x8x32xf32>
    %4 = vector.shape_cast %3 : vector<1x8x32xf32> to vector<8x32xf32>
    %5 = tpu.concatenate %2, %4 in 0 : vector<8x32xf32>, vector<8x32xf32> -> vector<16x32xf32>
    %cst = arith.constant 0.000000e+00 : f32
    %6 = vector.broadcast %cst : f32 to vector<8x32xf32>
    %c0_7 = arith.constant 0 : index
    %c0_8 = arith.constant 0 : index
    %c0_9 = arith.constant 0 : index
    %7 = vector.load %arg3[%c0_7, %c0_8, %c0_9] : memref<4x32x16xf32, #tpu.memory_space<vmem>>, vector<1x32x16xf32>
    %8 = vector.shape_cast %7 : vector<1x32x16xf32> to vector<32x16xf32>
    %c0_10 = arith.constant 0 : index
    %c0_11 = arith.constant 0 : index
    %c0_12 = arith.constant 0 : index
    %9 = vector.load %arg4[%c0_10, %c0_11, %c0_12] : memref<4x32x16xf32, #tpu.memory_space<vmem>>, vector<1x32x16xf32>
    %10 = vector.shape_cast %9 : vector<1x32x16xf32> to vector<32x16xf32>
    %c0_13 = arith.constant 0 : index
    %c0_14 = arith.constant 0 : index
    %c0_15 = arith.constant 0 : index
    %11 = vector.load %arg5[%c0_13, %c0_14, %c0_15] : memref<4x32x16xf32, #tpu.memory_space<vmem>>, vector<1x32x16xf32>
    %12 = vector.shape_cast %11 : vector<1x32x16xf32> to vector<32x16xf32>
    %cst_16 = arith.constant dense<0.000000e+00> : vector<8x16xf32>
    %13 = tpu.matmul %2, %8, %cst_16 {dimension_numbers = #tpu.dot_dimension_numbers<[1], [0], [0], [1], [0, 0, 1, 1], [], []>} : vector<8x32xf32>, vector<32x16xf32>, vector<8x16xf32> -> vector<8x16xf32>
    %cst_17 = arith.constant 2.500000e-01 : f32
    %14 = vector.broadcast %cst_17 : f32 to vector<8x16xf32>
    %15 = arith.mulf %13, %14 : vector<8x16xf32>
    %cst_18 = arith.constant dense<0.000000e+00> : vector<16x16xf32>
    %16 = tpu.matmul %5, %10, %cst_18 {dimension_numbers = #tpu.dot_dimension_numbers<[1], [0], [0], [1], [0, 0, 1, 1], [], []>} : vector<16x32xf32>, vector<32x16xf32>, vector<16x16xf32> -> vector<16x16xf32>
    %cst_19 = arith.constant dense<0.000000e+00> : vector<16x16xf32>
    %17 = tpu.matmul %5, %12, %cst_19 {dimension_numbers = #tpu.dot_dimension_numbers<[1], [0], [0], [1], [0, 0, 1, 1], [], []>} : vector<16x32xf32>, vector<32x16xf32>, vector<16x16xf32> -> vector<16x16xf32>
    %cst_20 = arith.constant dense<0.000000e+00> : vector<8x16xf32>
    %18 = tpu.matmul %15, %16, %cst_20 {dimension_numbers = #tpu.dot_dimension_numbers<[1], [1], [0], [0], [0, 0, 1, 0], [], []>} : vector<8x16xf32>, vector<16x16xf32>, vector<8x16xf32> -> vector<8x16xf32>
    %cst_21 = arith.constant dense<0xFF800000> : vector<8xf32>
    %19 = vector.multi_reduction <maximumf>, %18, %cst_21 [1] : vector<8x16xf32> to vector<8xf32>
    %20 = vector.shape_cast %19 : vector<8xf32> to vector<8x1xf32>
    %21 = vector.broadcast %20 : vector<8x1xf32> to vector<8x16xf32>
    %22 = arith.subf %18, %21 : vector<8x16xf32>
    %23 = math.exp %22 : vector<8x16xf32>
    %cst_22 = arith.constant dense<0.000000e+00> : vector<8xf32>
    %24 = vector.multi_reduction <add>, %23, %cst_22 [1] : vector<8x16xf32> to vector<8xf32>
    %25 = vector.shape_cast %24 : vector<8xf32> to vector<8x1xf32>
    %26 = vector.broadcast %25 : vector<8x1xf32> to vector<8x16xf32>
    %27 = arith.divf %23, %26 : vector<8x16xf32>
    %cst_23 = arith.constant dense<0.000000e+00> : vector<8x16xf32>
    %28 = tpu.matmul %27, %17, %cst_23 {dimension_numbers = #tpu.dot_dimension_numbers<[1], [0], [0], [1], [0, 0, 1, 1], [], []>} : vector<8x16xf32>, vector<16x16xf32>, vector<8x16xf32> -> vector<8x16xf32>
    %c0_24 = arith.constant 0 : index
    %c0_25 = arith.constant 0 : index
    %c0_26 = arith.constant 0 : index
    %29 = vector.load %arg6[%c0_24, %c0_25, %c0_26] : memref<4x16x32xf32, #tpu.memory_space<vmem>>, vector<1x16x32xf32>
    %30 = vector.shape_cast %29 : vector<1x16x32xf32> to vector<16x32xf32>
    %cst_27 = arith.constant dense<0.000000e+00> : vector<8x32xf32>
    %31 = tpu.matmul %28, %30, %cst_27 {dimension_numbers = #tpu.dot_dimension_numbers<[1], [0], [0], [1], [0, 0, 1, 1], [], []>} : vector<8x16xf32>, vector<16x32xf32>, vector<8x32xf32> -> vector<8x32xf32>
    %32 = arith.addf %6, %31 : vector<8x32xf32>
    %c1 = arith.constant 1 : index
    %c0_28 = arith.constant 0 : index
    %c0_29 = arith.constant 0 : index
    %33 = vector.load %arg3[%c1, %c0_28, %c0_29] : memref<4x32x16xf32, #tpu.memory_space<vmem>>, vector<1x32x16xf32>
    %34 = vector.shape_cast %33 : vector<1x32x16xf32> to vector<32x16xf32>
    %c1_30 = arith.constant 1 : index
    %c0_31 = arith.constant 0 : index
    %c0_32 = arith.constant 0 : index
    %35 = vector.load %arg4[%c1_30, %c0_31, %c0_32] : memref<4x32x16xf32, #tpu.memory_space<vmem>>, vector<1x32x16xf32>
    %36 = vector.shape_cast %35 : vector<1x32x16xf32> to vector<32x16xf32>
    %c1_33 = arith.constant 1 : index
    %c0_34 = arith.constant 0 : index
    %c0_35 = arith.constant 0 : index
    %37 = vector.load %arg5[%c1_33, %c0_34, %c0_35] : memref<4x32x16xf32, #tpu.memory_space<vmem>>, vector<1x32x16xf32>
    %38 = vector.shape_cast %37 : vector<1x32x16xf32> to vector<32x16xf32>
    %cst_36 = arith.constant dense<0.000000e+00> : vector<8x16xf32>
    %39 = tpu.matmul %2, %34, %cst_36 {dimension_numbers = #tpu.dot_dimension_numbers<[1], [0], [0], [1], [0, 0, 1, 1], [], []>} : vector<8x32xf32>, vector<32x16xf32>, vector<8x16xf32> -> vector<8x16xf32>
    %cst_37 = arith.constant 2.500000e-01 : f32
    %40 = vector.broadcast %cst_37 : f32 to vector<8x16xf32>
    %41 = arith.mulf %39, %40 : vector<8x16xf32>
    %cst_38 = arith.constant dense<0.000000e+00> : vector<16x16xf32>
    %42 = tpu.matmul %5, %36, %cst_38 {dimension_numbers = #tpu.dot_dimension_numbers<[1], [0], [0], [1], [0, 0, 1, 1], [], []>} : vector<16x32xf32>, vector<32x16xf32>, vector<16x16xf32> -> vector<16x16xf32>
    %cst_39 = arith.constant dense<0.000000e+00> : vector<16x16xf32>
    %43 = tpu.matmul %5, %38, %cst_39 {dimension_numbers = #tpu.dot_dimension_numbers<[1], [0], [0], [1], [0, 0, 1, 1], [], []>} : vector<16x32xf32>, vector<32x16xf32>, vector<16x16xf32> -> vector<16x16xf32>
    %cst_40 = arith.constant dense<0.000000e+00> : vector<8x16xf32>
    %44 = tpu.matmul %41, %42, %cst_40 {dimension_numbers = #tpu.dot_dimension_numbers<[1], [1], [0], [0], [0, 0, 1, 0], [], []>} : vector<8x16xf32>, vector<16x16xf32>, vector<8x16xf32> -> vector<8x16xf32>
    %cst_41 = arith.constant dense<0xFF800000> : vector<8xf32>
    %45 = vector.multi_reduction <maximumf>, %44, %cst_41 [1] : vector<8x16xf32> to vector<8xf32>
    %46 = vector.shape_cast %45 : vector<8xf32> to vector<8x1xf32>
    %47 = vector.broadcast %46 : vector<8x1xf32> to vector<8x16xf32>
    %48 = arith.subf %44, %47 : vector<8x16xf32>
    %49 = math.exp %48 : vector<8x16xf32>
    %cst_42 = arith.constant dense<0.000000e+00> : vector<8xf32>
    %50 = vector.multi_reduction <add>, %49, %cst_42 [1] : vector<8x16xf32> to vector<8xf32>
    %51 = vector.shape_cast %50 : vector<8xf32> to vector<8x1xf32>
    %52 = vector.broadcast %51 : vector<8x1xf32> to vector<8x16xf32>
    %53 = arith.divf %49, %52 : vector<8x16xf32>
    %cst_43 = arith.constant dense<0.000000e+00> : vector<8x16xf32>
    %54 = tpu.matmul %53, %43, %cst_43 {dimension_numbers = #tpu.dot_dimension_numbers<[1], [0], [0], [1], [0, 0, 1, 1], [], []>} : vector<8x16xf32>, vector<16x16xf32>, vector<8x16xf32> -> vector<8x16xf32>
    %c1_44 = arith.constant 1 : index
    %c0_45 = arith.constant 0 : index
    %c0_46 = arith.constant 0 : index
    %55 = vector.load %arg6[%c1_44, %c0_45, %c0_46] : memref<4x16x32xf32, #tpu.memory_space<vmem>>, vector<1x16x32xf32>
    %56 = vector.shape_cast %55 : vector<1x16x32xf32> to vector<16x32xf32>
    %cst_47 = arith.constant dense<0.000000e+00> : vector<8x32xf32>
    %57 = tpu.matmul %54, %56, %cst_47 {dimension_numbers = #tpu.dot_dimension_numbers<[1], [0], [0], [1], [0, 0, 1, 1], [], []>} : vector<8x16xf32>, vector<16x32xf32>, vector<8x32xf32> -> vector<8x32xf32>
    %58 = arith.addf %32, %57 : vector<8x32xf32>
    %c2 = arith.constant 2 : index
    %c0_48 = arith.constant 0 : index
    %c0_49 = arith.constant 0 : index
    %59 = vector.load %arg3[%c2, %c0_48, %c0_49] : memref<4x32x16xf32, #tpu.memory_space<vmem>>, vector<1x32x16xf32>
    %60 = vector.shape_cast %59 : vector<1x32x16xf32> to vector<32x16xf32>
    %c2_50 = arith.constant 2 : index
    %c0_51 = arith.constant 0 : index
    %c0_52 = arith.constant 0 : index
    %61 = vector.load %arg4[%c2_50, %c0_51, %c0_52] : memref<4x32x16xf32, #tpu.memory_space<vmem>>, vector<1x32x16xf32>
    %62 = vector.shape_cast %61 : vector<1x32x16xf32> to vector<32x16xf32>
    %c2_53 = arith.constant 2 : index
    %c0_54 = arith.constant 0 : index
    %c0_55 = arith.constant 0 : index
    %63 = vector.load %arg5[%c2_53, %c0_54, %c0_55] : memref<4x32x16xf32, #tpu.memory_space<vmem>>, vector<1x32x16xf32>
    %64 = vector.shape_cast %63 : vector<1x32x16xf32> to vector<32x16xf32>
    %cst_56 = arith.constant dense<0.000000e+00> : vector<8x16xf32>
    %65 = tpu.matmul %2, %60, %cst_56 {dimension_numbers = #tpu.dot_dimension_numbers<[1], [0], [0], [1], [0, 0, 1, 1], [], []>} : vector<8x32xf32>, vector<32x16xf32>, vector<8x16xf32> -> vector<8x16xf32>
    %cst_57 = arith.constant 2.500000e-01 : f32
    %66 = vector.broadcast %cst_57 : f32 to vector<8x16xf32>
    %67 = arith.mulf %65, %66 : vector<8x16xf32>
    %cst_58 = arith.constant dense<0.000000e+00> : vector<16x16xf32>
    %68 = tpu.matmul %5, %62, %cst_58 {dimension_numbers = #tpu.dot_dimension_numbers<[1], [0], [0], [1], [0, 0, 1, 1], [], []>} : vector<16x32xf32>, vector<32x16xf32>, vector<16x16xf32> -> vector<16x16xf32>
    %cst_59 = arith.constant dense<0.000000e+00> : vector<16x16xf32>
    %69 = tpu.matmul %5, %64, %cst_59 {dimension_numbers = #tpu.dot_dimension_numbers<[1], [0], [0], [1], [0, 0, 1, 1], [], []>} : vector<16x32xf32>, vector<32x16xf32>, vector<16x16xf32> -> vector<16x16xf32>
    %cst_60 = arith.constant dense<0.000000e+00> : vector<8x16xf32>
    %70 = tpu.matmul %67, %68, %cst_60 {dimension_numbers = #tpu.dot_dimension_numbers<[1], [1], [0], [0], [0, 0, 1, 0], [], []>} : vector<8x16xf32>, vector<16x16xf32>, vector<8x16xf32> -> vector<8x16xf32>
    %cst_61 = arith.constant dense<0xFF800000> : vector<8xf32>
    %71 = vector.multi_reduction <maximumf>, %70, %cst_61 [1] : vector<8x16xf32> to vector<8xf32>
    %72 = vector.shape_cast %71 : vector<8xf32> to vector<8x1xf32>
    %73 = vector.broadcast %72 : vector<8x1xf32> to vector<8x16xf32>
    %74 = arith.subf %70, %73 : vector<8x16xf32>
    %75 = math.exp %74 : vector<8x16xf32>
    %cst_62 = arith.constant dense<0.000000e+00> : vector<8xf32>
    %76 = vector.multi_reduction <add>, %75, %cst_62 [1] : vector<8x16xf32> to vector<8xf32>
    %77 = vector.shape_cast %76 : vector<8xf32> to vector<8x1xf32>
    %78 = vector.broadcast %77 : vector<8x1xf32> to vector<8x16xf32>
    %79 = arith.divf %75, %78 : vector<8x16xf32>
    %cst_63 = arith.constant dense<0.000000e+00> : vector<8x16xf32>
    %80 = tpu.matmul %79, %69, %cst_63 {dimension_numbers = #tpu.dot_dimension_numbers<[1], [0], [0], [1], [0, 0, 1, 1], [], []>} : vector<8x16xf32>, vector<16x16xf32>, vector<8x16xf32> -> vector<8x16xf32>
    %c2_64 = arith.constant 2 : index
    %c0_65 = arith.constant 0 : index
    %c0_66 = arith.constant 0 : index
    %81 = vector.load %arg6[%c2_64, %c0_65, %c0_66] : memref<4x16x32xf32, #tpu.memory_space<vmem>>, vector<1x16x32xf32>
    %82 = vector.shape_cast %81 : vector<1x16x32xf32> to vector<16x32xf32>
    %cst_67 = arith.constant dense<0.000000e+00> : vector<8x32xf32>
    %83 = tpu.matmul %80, %82, %cst_67 {dimension_numbers = #tpu.dot_dimension_numbers<[1], [0], [0], [1], [0, 0, 1, 1], [], []>} : vector<8x16xf32>, vector<16x32xf32>, vector<8x32xf32> -> vector<8x32xf32>
    %84 = arith.addf %58, %83 : vector<8x32xf32>
    %c3 = arith.constant 3 : index
    %c0_68 = arith.constant 0 : index
    %c0_69 = arith.constant 0 : index
    %85 = vector.load %arg3[%c3, %c0_68, %c0_69] : memref<4x32x16xf32, #tpu.memory_space<vmem>>, vector<1x32x16xf32>
    %86 = vector.shape_cast %85 : vector<1x32x16xf32> to vector<32x16xf32>
    %c3_70 = arith.constant 3 : index
    %c0_71 = arith.constant 0 : index
    %c0_72 = arith.constant 0 : index
    %87 = vector.load %arg4[%c3_70, %c0_71, %c0_72] : memref<4x32x16xf32, #tpu.memory_space<vmem>>, vector<1x32x16xf32>
    %88 = vector.shape_cast %87 : vector<1x32x16xf32> to vector<32x16xf32>
    %c3_73 = arith.constant 3 : index
    %c0_74 = arith.constant 0 : index
    %c0_75 = arith.constant 0 : index
    %89 = vector.load %arg5[%c3_73, %c0_74, %c0_75] : memref<4x32x16xf32, #tpu.memory_space<vmem>>, vector<1x32x16xf32>
    %90 = vector.shape_cast %89 : vector<1x32x16xf32> to vector<32x16xf32>
    %cst_76 = arith.constant dense<0.000000e+00> : vector<8x16xf32>
    %91 = tpu.matmul %2, %86, %cst_76 {dimension_numbers = #tpu.dot_dimension_numbers<[1], [0], [0], [1], [0, 0, 1, 1], [], []>} : vector<8x32xf32>, vector<32x16xf32>, vector<8x16xf32> -> vector<8x16xf32>
    %cst_77 = arith.constant 2.500000e-01 : f32
    %92 = vector.broadcast %cst_77 : f32 to vector<8x16xf32>
    %93 = arith.mulf %91, %92 : vector<8x16xf32>
    %cst_78 = arith.constant dense<0.000000e+00> : vector<16x16xf32>
    %94 = tpu.matmul %5, %88, %cst_78 {dimension_numbers = #tpu.dot_dimension_numbers<[1], [0], [0], [1], [0, 0, 1, 1], [], []>} : vector<16x32xf32>, vector<32x16xf32>, vector<16x16xf32> -> vector<16x16xf32>
    %cst_79 = arith.constant dense<0.000000e+00> : vector<16x16xf32>
    %95 = tpu.matmul %5, %90, %cst_79 {dimension_numbers = #tpu.dot_dimension_numbers<[1], [0], [0], [1], [0, 0, 1, 1], [], []>} : vector<16x32xf32>, vector<32x16xf32>, vector<16x16xf32> -> vector<16x16xf32>
    %cst_80 = arith.constant dense<0.000000e+00> : vector<8x16xf32>
    %96 = tpu.matmul %93, %94, %cst_80 {dimension_numbers = #tpu.dot_dimension_numbers<[1], [1], [0], [0], [0, 0, 1, 0], [], []>} : vector<8x16xf32>, vector<16x16xf32>, vector<8x16xf32> -> vector<8x16xf32>
    %cst_81 = arith.constant dense<0xFF800000> : vector<8xf32>
    %97 = vector.multi_reduction <maximumf>, %96, %cst_81 [1] : vector<8x16xf32> to vector<8xf32>
    %98 = vector.shape_cast %97 : vector<8xf32> to vector<8x1xf32>
    %99 = vector.broadcast %98 : vector<8x1xf32> to vector<8x16xf32>
    %100 = arith.subf %96, %99 : vector<8x16xf32>
    %101 = math.exp %100 : vector<8x16xf32>
    %cst_82 = arith.constant dense<0.000000e+00> : vector<8xf32>
    %102 = vector.multi_reduction <add>, %101, %cst_82 [1] : vector<8x16xf32> to vector<8xf32>
    %103 = vector.shape_cast %102 : vector<8xf32> to vector<8x1xf32>
    %104 = vector.broadcast %103 : vector<8x1xf32> to vector<8x16xf32>
    %105 = arith.divf %101, %104 : vector<8x16xf32>
    %cst_83 = arith.constant dense<0.000000e+00> : vector<8x16xf32>
    %106 = tpu.matmul %105, %95, %cst_83 {dimension_numbers = #tpu.dot_dimension_numbers<[1], [0], [0], [1], [0, 0, 1, 1], [], []>} : vector<8x16xf32>, vector<16x16xf32>, vector<8x16xf32> -> vector<8x16xf32>
    %c3_84 = arith.constant 3 : index
    %c0_85 = arith.constant 0 : index
    %c0_86 = arith.constant 0 : index
    %107 = vector.load %arg6[%c3_84, %c0_85, %c0_86] : memref<4x16x32xf32, #tpu.memory_space<vmem>>, vector<1x16x32xf32>
    %108 = vector.shape_cast %107 : vector<1x16x32xf32> to vector<16x32xf32>
    %cst_87 = arith.constant dense<0.000000e+00> : vector<8x32xf32>
    %109 = tpu.matmul %106, %108, %cst_87 {dimension_numbers = #tpu.dot_dimension_numbers<[1], [0], [0], [1], [0, 0, 1, 1], [], []>} : vector<8x16xf32>, vector<16x32xf32>, vector<8x32xf32> -> vector<8x32xf32>
    %110 = arith.addf %84, %109 : vector<8x32xf32>
    %111 = vector.broadcast %0 : vector<1x32xf32> to vector<8x32xf32>
    %112 = arith.addf %110, %111 : vector<8x32xf32>
    %c0_88 = arith.constant 0 : index
    %c0_89 = arith.constant 0 : index
    %c0_90 = arith.constant 0 : index
    %113 = vector.load %arg8[%c0_88, %c0_89, %c0_90] : memref<2x8x32xf32, #tpu.memory_space<vmem>>, vector<1x8x32xf32>
    %114 = vector.shape_cast %113 : vector<1x8x32xf32> to vector<8x32xf32>
    %115 = vector.shape_cast %112 : vector<8x32xf32> to vector<1x8x32xf32>
    tpu.vector_store %arg8[%c0_88, %c0_89, %c0_90], %115 {strides = array<i32>} : memref<2x8x32xf32, #tpu.memory_space<vmem>>, vector<1x8x32xf32>,
    %c1_91 = arith.constant 1 : index
    %c0_92 = arith.constant 0 : index
    %c0_93 = arith.constant 0 : index
    %116 = vector.load %arg1[%c1_91, %c0_92, %c0_93] : memref<2x8x32xf32, #tpu.memory_space<vmem>>, vector<1x8x32xf32>
    %117 = vector.shape_cast %116 : vector<1x8x32xf32> to vector<8x32xf32>
    %c1_94 = arith.constant 1 : index
    %c0_95 = arith.constant 0 : index
    %c0_96 = arith.constant 0 : index
    %118 = vector.load %arg2[%c1_94, %c0_95, %c0_96] : memref<2x8x32xf32, #tpu.memory_space<vmem>>, vector<1x8x32xf32>
    %119 = vector.shape_cast %118 : vector<1x8x32xf32> to vector<8x32xf32>
    %120 = tpu.concatenate %117, %119 in 0 : vector<8x32xf32>, vector<8x32xf32> -> vector<16x32xf32>
    %cst_97 = arith.constant 0.000000e+00 : f32
    %121 = vector.broadcast %cst_97 : f32 to vector<8x32xf32>
    %c0_98 = arith.constant 0 : index
    %c0_99 = arith.constant 0 : index
    %c0_100 = arith.constant 0 : index
    %122 = vector.load %arg3[%c0_98, %c0_99, %c0_100] : memref<4x32x16xf32, #tpu.memory_space<vmem>>, vector<1x32x16xf32>
    %123 = vector.shape_cast %122 : vector<1x32x16xf32> to vector<32x16xf32>
    %c0_101 = arith.constant 0 : index
    %c0_102 = arith.constant 0 : index
    %c0_103 = arith.constant 0 : index
    %124 = vector.load %arg4[%c0_101, %c0_102, %c0_103] : memref<4x32x16xf32, #tpu.memory_space<vmem>>, vector<1x32x16xf32>
    %125 = vector.shape_cast %124 : vector<1x32x16xf32> to vector<32x16xf32>
    %c0_104 = arith.constant 0 : index
    %c0_105 = arith.constant 0 : index
    %c0_106 = arith.constant 0 : index
    %126 = vector.load %arg5[%c0_104, %c0_105, %c0_106] : memref<4x32x16xf32, #tpu.memory_space<vmem>>, vector<1x32x16xf32>
    %127 = vector.shape_cast %126 : vector<1x32x16xf32> to vector<32x16xf32>
    %cst_107 = arith.constant dense<0.000000e+00> : vector<8x16xf32>
    %128 = tpu.matmul %117, %123, %cst_107 {dimension_numbers = #tpu.dot_dimension_numbers<[1], [0], [0], [1], [0, 0, 1, 1], [], []>} : vector<8x32xf32>, vector<32x16xf32>, vector<8x16xf32> -> vector<8x16xf32>
    %cst_108 = arith.constant 2.500000e-01 : f32
    %129 = vector.broadcast %cst_108 : f32 to vector<8x16xf32>
    %130 = arith.mulf %128, %129 : vector<8x16xf32>
    %cst_109 = arith.constant dense<0.000000e+00> : vector<16x16xf32>
    %131 = tpu.matmul %120, %125, %cst_109 {dimension_numbers = #tpu.dot_dimension_numbers<[1], [0], [0], [1], [0, 0, 1, 1], [], []>} : vector<16x32xf32>, vector<32x16xf32>, vector<16x16xf32> -> vector<16x16xf32>
    %cst_110 = arith.constant dense<0.000000e+00> : vector<16x16xf32>
    %132 = tpu.matmul %120, %127, %cst_110 {dimension_numbers = #tpu.dot_dimension_numbers<[1], [0], [0], [1], [0, 0, 1, 1], [], []>} : vector<16x32xf32>, vector<32x16xf32>, vector<16x16xf32> -> vector<16x16xf32>
    %cst_111 = arith.constant dense<0.000000e+00> : vector<8x16xf32>
    %133 = tpu.matmul %130, %131, %cst_111 {dimension_numbers = #tpu.dot_dimension_numbers<[1], [1], [0], [0], [0, 0, 1, 0], [], []>} : vector<8x16xf32>, vector<16x16xf32>, vector<8x16xf32> -> vector<8x16xf32>
    %cst_112 = arith.constant dense<0xFF800000> : vector<8xf32>
    %134 = vector.multi_reduction <maximumf>, %133, %cst_112 [1] : vector<8x16xf32> to vector<8xf32>
    %135 = vector.shape_cast %134 : vector<8xf32> to vector<8x1xf32>
    %136 = vector.broadcast %135 : vector<8x1xf32> to vector<8x16xf32>
    %137 = arith.subf %133, %136 : vector<8x16xf32>
    %138 = math.exp %137 : vector<8x16xf32>
    %cst_113 = arith.constant dense<0.000000e+00> : vector<8xf32>
    %139 = vector.multi_reduction <add>, %138, %cst_113 [1] : vector<8x16xf32> to vector<8xf32>
    %140 = vector.shape_cast %139 : vector<8xf32> to vector<8x1xf32>
    %141 = vector.broadcast %140 : vector<8x1xf32> to vector<8x16xf32>
    %142 = arith.divf %138, %141 : vector<8x16xf32>
    %cst_114 = arith.constant dense<0.000000e+00> : vector<8x16xf32>
    %143 = tpu.matmul %142, %132, %cst_114 {dimension_numbers = #tpu.dot_dimension_numbers<[1], [0], [0], [1], [0, 0, 1, 1], [], []>} : vector<8x16xf32>, vector<16x16xf32>, vector<8x16xf32> -> vector<8x16xf32>
    %c0_115 = arith.constant 0 : index
    %c0_116 = arith.constant 0 : index
    %c0_117 = arith.constant 0 : index
    %144 = vector.load %arg6[%c0_115, %c0_116, %c0_117] : memref<4x16x32xf32, #tpu.memory_space<vmem>>, vector<1x16x32xf32>
    %145 = vector.shape_cast %144 : vector<1x16x32xf32> to vector<16x32xf32>
    %cst_118 = arith.constant dense<0.000000e+00> : vector<8x32xf32>
    %146 = tpu.matmul %143, %145, %cst_118 {dimension_numbers = #tpu.dot_dimension_numbers<[1], [0], [0], [1], [0, 0, 1, 1], [], []>} : vector<8x16xf32>, vector<16x32xf32>, vector<8x32xf32> -> vector<8x32xf32>
    %147 = arith.addf %121, %146 : vector<8x32xf32>
    %c1_119 = arith.constant 1 : index
    %c0_120 = arith.constant 0 : index
    %c0_121 = arith.constant 0 : index
    %148 = vector.load %arg3[%c1_119, %c0_120, %c0_121] : memref<4x32x16xf32, #tpu.memory_space<vmem>>, vector<1x32x16xf32>
    %149 = vector.shape_cast %148 : vector<1x32x16xf32> to vector<32x16xf32>
    %c1_122 = arith.constant 1 : index
    %c0_123 = arith.constant 0 : index
    %c0_124 = arith.constant 0 : index
    %150 = vector.load %arg4[%c1_122, %c0_123, %c0_124] : memref<4x32x16xf32, #tpu.memory_space<vmem>>, vector<1x32x16xf32>
    %151 = vector.shape_cast %150 : vector<1x32x16xf32> to vector<32x16xf32>
    %c1_125 = arith.constant 1 : index
    %c0_126 = arith.constant 0 : index
    %c0_127 = arith.constant 0 : index
    %152 = vector.load %arg5[%c1_125, %c0_126, %c0_127] : memref<4x32x16xf32, #tpu.memory_space<vmem>>, vector<1x32x16xf32>
    %153 = vector.shape_cast %152 : vector<1x32x16xf32> to vector<32x16xf32>
    %cst_128 = arith.constant dense<0.000000e+00> : vector<8x16xf32>
    %154 = tpu.matmul %117, %149, %cst_128 {dimension_numbers = #tpu.dot_dimension_numbers<[1], [0], [0], [1], [0, 0, 1, 1], [], []>} : vector<8x32xf32>, vector<32x16xf32>, vector<8x16xf32> -> vector<8x16xf32>
    %cst_129 = arith.constant 2.500000e-01 : f32
    %155 = vector.broadcast %cst_129 : f32 to vector<8x16xf32>
    %156 = arith.mulf %154, %155 : vector<8x16xf32>
    %cst_130 = arith.constant dense<0.000000e+00> : vector<16x16xf32>
    %157 = tpu.matmul %120, %151, %cst_130 {dimension_numbers = #tpu.dot_dimension_numbers<[1], [0], [0], [1], [0, 0, 1, 1], [], []>} : vector<16x32xf32>, vector<32x16xf32>, vector<16x16xf32> -> vector<16x16xf32>
    %cst_131 = arith.constant dense<0.000000e+00> : vector<16x16xf32>
    %158 = tpu.matmul %120, %153, %cst_131 {dimension_numbers = #tpu.dot_dimension_numbers<[1], [0], [0], [1], [0, 0, 1, 1], [], []>} : vector<16x32xf32>, vector<32x16xf32>, vector<16x16xf32> -> vector<16x16xf32>
    %cst_132 = arith.constant dense<0.000000e+00> : vector<8x16xf32>
    %159 = tpu.matmul %156, %157, %cst_132 {dimension_numbers = #tpu.dot_dimension_numbers<[1], [1], [0], [0], [0, 0, 1, 0], [], []>} : vector<8x16xf32>, vector<16x16xf32>, vector<8x16xf32> -> vector<8x16xf32>
    %cst_133 = arith.constant dense<0xFF800000> : vector<8xf32>
    %160 = vector.multi_reduction <maximumf>, %159, %cst_133 [1] : vector<8x16xf32> to vector<8xf32>
    %161 = vector.shape_cast %160 : vector<8xf32> to vector<8x1xf32>
    %162 = vector.broadcast %161 : vector<8x1xf32> to vector<8x16xf32>
    %163 = arith.subf %159, %162 : vector<8x16xf32>
    %164 = math.exp %163 : vector<8x16xf32>
    %cst_134 = arith.constant dense<0.000000e+00> : vector<8xf32>
    %165 = vector.multi_reduction <add>, %164, %cst_134 [1] : vector<8x16xf32> to vector<8xf32>
    %166 = vector.shape_cast %165 : vector<8xf32> to vector<8x1xf32>
    %167 = vector.broadcast %166 : vector<8x1xf32> to vector<8x16xf32>
    %168 = arith.divf %164, %167 : vector<8x16xf32>
    %cst_135 = arith.constant dense<0.000000e+00> : vector<8x16xf32>
    %169 = tpu.matmul %168, %158, %cst_135 {dimension_numbers = #tpu.dot_dimension_numbers<[1], [0], [0], [1], [0, 0, 1, 1], [], []>} : vector<8x16xf32>, vector<16x16xf32>, vector<8x16xf32> -> vector<8x16xf32>
    %c1_136 = arith.constant 1 : index
    %c0_137 = arith.constant 0 : index
    %c0_138 = arith.constant 0 : index
    %170 = vector.load %arg6[%c1_136, %c0_137, %c0_138] : memref<4x16x32xf32, #tpu.memory_space<vmem>>, vector<1x16x32xf32>
    %171 = vector.shape_cast %170 : vector<1x16x32xf32> to vector<16x32xf32>
    %cst_139 = arith.constant dense<0.000000e+00> : vector<8x32xf32>
    %172 = tpu.matmul %169, %171, %cst_139 {dimension_numbers = #tpu.dot_dimension_numbers<[1], [0], [0], [1], [0, 0, 1, 1], [], []>} : vector<8x16xf32>, vector<16x32xf32>, vector<8x32xf32> -> vector<8x32xf32>
    %173 = arith.addf %147, %172 : vector<8x32xf32>
    %c2_140 = arith.constant 2 : index
    %c0_141 = arith.constant 0 : index
    %c0_142 = arith.constant 0 : index
    %174 = vector.load %arg3[%c2_140, %c0_141, %c0_142] : memref<4x32x16xf32, #tpu.memory_space<vmem>>, vector<1x32x16xf32>
    %175 = vector.shape_cast %174 : vector<1x32x16xf32> to vector<32x16xf32>
    %c2_143 = arith.constant 2 : index
    %c0_144 = arith.constant 0 : index
    %c0_145 = arith.constant 0 : index
    %176 = vector.load %arg4[%c2_143, %c0_144, %c0_145] : memref<4x32x16xf32, #tpu.memory_space<vmem>>, vector<1x32x16xf32>
    %177 = vector.shape_cast %176 : vector<1x32x16xf32> to vector<32x16xf32>
    %c2_146 = arith.constant 2 : index
    %c0_147 = arith.constant 0 : index
    %c0_148 = arith.constant 0 : index
    %178 = vector.load %arg5[%c2_146, %c0_147, %c0_148] : memref<4x32x16xf32, #tpu.memory_space<vmem>>, vector<1x32x16xf32>
    %179 = vector.shape_cast %178 : vector<1x32x16xf32> to vector<32x16xf32>
    %cst_149 = arith.constant dense<0.000000e+00> : vector<8x16xf32>
    %180 = tpu.matmul %117, %175, %cst_149 {dimension_numbers = #tpu.dot_dimension_numbers<[1], [0], [0], [1], [0, 0, 1, 1], [], []>} : vector<8x32xf32>, vector<32x16xf32>, vector<8x16xf32> -> vector<8x16xf32>
    %cst_150 = arith.constant 2.500000e-01 : f32
    %181 = vector.broadcast %cst_150 : f32 to vector<8x16xf32>
    %182 = arith.mulf %180, %181 : vector<8x16xf32>
    %cst_151 = arith.constant dense<0.000000e+00> : vector<16x16xf32>
    %183 = tpu.matmul %120, %177, %cst_151 {dimension_numbers = #tpu.dot_dimension_numbers<[1], [0], [0], [1], [0, 0, 1, 1], [], []>} : vector<16x32xf32>, vector<32x16xf32>, vector<16x16xf32> -> vector<16x16xf32>
    %cst_152 = arith.constant dense<0.000000e+00> : vector<16x16xf32>
    %184 = tpu.matmul %120, %179, %cst_152 {dimension_numbers = #tpu.dot_dimension_numbers<[1], [0], [0], [1], [0, 0, 1, 1], [], []>} : vector<16x32xf32>, vector<32x16xf32>, vector<16x16xf32> -> vector<16x16xf32>
    %cst_153 = arith.constant dense<0.000000e+00> : vector<8x16xf32>
    %185 = tpu.matmul %182, %183, %cst_153 {dimension_numbers = #tpu.dot_dimension_numbers<[1], [1], [0], [0], [0, 0, 1, 0], [], []>} : vector<8x16xf32>, vector<16x16xf32>, vector<8x16xf32> -> vector<8x16xf32>
    %cst_154 = arith.constant dense<0xFF800000> : vector<8xf32>
    %186 = vector.multi_reduction <maximumf>, %185, %cst_154 [1] : vector<8x16xf32> to vector<8xf32>
    %187 = vector.shape_cast %186 : vector<8xf32> to vector<8x1xf32>
    %188 = vector.broadcast %187 : vector<8x1xf32> to vector<8x16xf32>
    %189 = arith.subf %185, %188 : vector<8x16xf32>
    %190 = math.exp %189 : vector<8x16xf32>
    %cst_155 = arith.constant dense<0.000000e+00> : vector<8xf32>
    %191 = vector.multi_reduction <add>, %190, %cst_155 [1] : vector<8x16xf32> to vector<8xf32>
    %192 = vector.shape_cast %191 : vector<8xf32> to vector<8x1xf32>
    %193 = vector.broadcast %192 : vector<8x1xf32> to vector<8x16xf32>
    %194 = arith.divf %190, %193 : vector<8x16xf32>
    %cst_156 = arith.constant dense<0.000000e+00> : vector<8x16xf32>
    %195 = tpu.matmul %194, %184, %cst_156 {dimension_numbers = #tpu.dot_dimension_numbers<[1], [0], [0], [1], [0, 0, 1, 1], [], []>} : vector<8x16xf32>, vector<16x16xf32>, vector<8x16xf32> -> vector<8x16xf32>
    %c2_157 = arith.constant 2 : index
    %c0_158 = arith.constant 0 : index
    %c0_159 = arith.constant 0 : index
    %196 = vector.load %arg6[%c2_157, %c0_158, %c0_159] : memref<4x16x32xf32, #tpu.memory_space<vmem>>, vector<1x16x32xf32>
    %197 = vector.shape_cast %196 : vector<1x16x32xf32> to vector<16x32xf32>
    %cst_160 = arith.constant dense<0.000000e+00> : vector<8x32xf32>
    %198 = tpu.matmul %195, %197, %cst_160 {dimension_numbers = #tpu.dot_dimension_numbers<[1], [0], [0], [1], [0, 0, 1, 1], [], []>} : vector<8x16xf32>, vector<16x32xf32>, vector<8x32xf32> -> vector<8x32xf32>
    %199 = arith.addf %173, %198 : vector<8x32xf32>
    %c3_161 = arith.constant 3 : index
    %c0_162 = arith.constant 0 : index
    %c0_163 = arith.constant 0 : index
    %200 = vector.load %arg3[%c3_161, %c0_162, %c0_163] : memref<4x32x16xf32, #tpu.memory_space<vmem>>, vector<1x32x16xf32>
    %201 = vector.shape_cast %200 : vector<1x32x16xf32> to vector<32x16xf32>
    %c3_164 = arith.constant 3 : index
    %c0_165 = arith.constant 0 : index
    %c0_166 = arith.constant 0 : index
    %202 = vector.load %arg4[%c3_164, %c0_165, %c0_166] : memref<4x32x16xf32, #tpu.memory_space<vmem>>, vector<1x32x16xf32>
    %203 = vector.shape_cast %202 : vector<1x32x16xf32> to vector<32x16xf32>
    %c3_167 = arith.constant 3 : index
    %c0_168 = arith.constant 0 : index
    %c0_169 = arith.constant 0 : index
    %204 = vector.load %arg5[%c3_167, %c0_168, %c0_169] : memref<4x32x16xf32, #tpu.memory_space<vmem>>, vector<1x32x16xf32>
    %205 = vector.shape_cast %204 : vector<1x32x16xf32> to vector<32x16xf32>
    %cst_170 = arith.constant dense<0.000000e+00> : vector<8x16xf32>
    %206 = tpu.matmul %117, %201, %cst_170 {dimension_numbers = #tpu.dot_dimension_numbers<[1], [0], [0], [1], [0, 0, 1, 1], [], []>} : vector<8x32xf32>, vector<32x16xf32>, vector<8x16xf32> -> vector<8x16xf32>
    %cst_171 = arith.constant 2.500000e-01 : f32
    %207 = vector.broadcast %cst_171 : f32 to vector<8x16xf32>
    %208 = arith.mulf %206, %207 : vector<8x16xf32>
    %cst_172 = arith.constant dense<0.000000e+00> : vector<16x16xf32>
    %209 = tpu.matmul %120, %203, %cst_172 {dimension_numbers = #tpu.dot_dimension_numbers<[1], [0], [0], [1], [0, 0, 1, 1], [], []>} : vector<16x32xf32>, vector<32x16xf32>, vector<16x16xf32> -> vector<16x16xf32>
    %cst_173 = arith.constant dense<0.000000e+00> : vector<16x16xf32>
    %210 = tpu.matmul %120, %205, %cst_173 {dimension_numbers = #tpu.dot_dimension_numbers<[1], [0], [0], [1], [0, 0, 1, 1], [], []>} : vector<16x32xf32>, vector<32x16xf32>, vector<16x16xf32> -> vector<16x16xf32>
    %cst_174 = arith.constant dense<0.000000e+00> : vector<8x16xf32>
    %211 = tpu.matmul %208, %209, %cst_174 {dimension_numbers = #tpu.dot_dimension_numbers<[1], [1], [0], [0], [0, 0, 1, 0], [], []>} : vector<8x16xf32>, vector<16x16xf32>, vector<8x16xf32> -> vector<8x16xf32>
    %cst_175 = arith.constant dense<0xFF800000> : vector<8xf32>
    %212 = vector.multi_reduction <maximumf>, %211, %cst_175 [1] : vector<8x16xf32> to vector<8xf32>
    %213 = vector.shape_cast %212 : vector<8xf32> to vector<8x1xf32>
    %214 = vector.broadcast %213 : vector<8x1xf32> to vector<8x16xf32>
    %215 = arith.subf %211, %214 : vector<8x16xf32>
    %216 = math.exp %215 : vector<8x16xf32>
    %cst_176 = arith.constant dense<0.000000e+00> : vector<8xf32>
    %217 = vector.multi_reduction <add>, %216, %cst_176 [1] : vector<8x16xf32> to vector<8xf32>
    %218 = vector.shape_cast %217 : vector<8xf32> to vector<8x1xf32>
    %219 = vector.broadcast %218 : vector<8x1xf32> to vector<8x16xf32>
    %220 = arith.divf %216, %219 : vector<8x16xf32>
    %cst_177 = arith.constant dense<0.000000e+00> : vector<8x16xf32>
    %221 = tpu.matmul %220, %210, %cst_177 {dimension_numbers = #tpu.dot_dimension_numbers<[1], [0], [0], [1], [0, 0, 1, 1], [], []>} : vector<8x16xf32>, vector<16x16xf32>, vector<8x16xf32> -> vector<8x16xf32>
    %c3_178 = arith.constant 3 : index
    %c0_179 = arith.constant 0 : index
    %c0_180 = arith.constant 0 : index
    %222 = vector.load %arg6[%c3_178, %c0_179, %c0_180] : memref<4x16x32xf32, #tpu.memory_space<vmem>>, vector<1x16x32xf32>
    %223 = vector.shape_cast %222 : vector<1x16x32xf32> to vector<16x32xf32>
    %cst_181 = arith.constant dense<0.000000e+00> : vector<8x32xf32>
    %224 = tpu.matmul %221, %223, %cst_181 {dimension_numbers = #tpu.dot_dimension_numbers<[1], [0], [0], [1], [0, 0, 1, 1], [], []>} : vector<8x16xf32>, vector<16x32xf32>, vector<8x32xf32> -> vector<8x32xf32>
    %225 = arith.addf %199, %224 : vector<8x32xf32>
    %226 = vector.broadcast %0 : vector<1x32xf32> to vector<8x32xf32>
    %227 = arith.addf %225, %226 : vector<8x32xf32>
    %c1_182 = arith.constant 1 : index
    %c0_183 = arith.constant 0 : index
    %c0_184 = arith.constant 0 : index
    %228 = vector.load %arg8[%c1_182, %c0_183, %c0_184] : memref<2x8x32xf32, #tpu.memory_space<vmem>>, vector<1x8x32xf32>
    %229 = vector.shape_cast %228 : vector<1x8x32xf32> to vector<8x32xf32>
    %230 = vector.shape_cast %227 : vector<8x32xf32> to vector<1x8x32xf32>
    tpu.vector_store %arg8[%c1_182, %c0_183, %c0_184], %230 {strides = array<i32>} : memref<2x8x32xf32, #tpu.memory_space<vmem>>, vector<1x8x32xf32>,
    return
  }
  func.func @transform_0(%arg0: i32) -> (i32, i32, i32) {
    %c0_i32 = arith.constant 0 : i32
    %c0_i32_0 = arith.constant 0 : i32
    %c0_i32_1 = arith.constant 0 : i32
    return %arg0, %c0_i32, %c0_i32_0 : i32, i32, i32
  }
  func.func @transform_1(%arg0: i32) -> (i32, i32, i32) {
    %c0_i32 = arith.constant 0 : i32
    %c0_i32_0 = arith.constant 0 : i32
    %c0_i32_1 = arith.constant 0 : i32
    return %arg0, %c0_i32, %c0_i32_0 : i32, i32, i32
  }
  func.func @transform_2(%arg0: i32) -> (i32, i32, i32) {
    %c0_i32 = arith.constant 0 : i32
    %c0_i32_0 = arith.constant 0 : i32
    %c0_i32_1 = arith.constant 0 : i32
    %c0_i32_2 = arith.constant 0 : i32
    return %c0_i32, %c0_i32_0, %c0_i32_1 : i32, i32, i32
  }
  func.func @transform_3(%arg0: i32) -> (i32, i32, i32) {
    %c0_i32 = arith.constant 0 : i32
    %c0_i32_0 = arith.constant 0 : i32
    %c0_i32_1 = arith.constant 0 : i32
    %c0_i32_2 = arith.constant 0 : i32
    return %c0_i32, %c0_i32_0, %c0_i32_1 : i32, i32, i32
  }
  func.func @transform_4(%arg0: i32) -> (i32, i32, i32) {
    %c0_i32 = arith.constant 0 : i32
    %c0_i32_0 = arith.constant 0 : i32
    %c0_i32_1 = arith.constant 0 : i32
    %c0_i32_2 = arith.constant 0 : i32
    return %c0_i32, %c0_i32_0, %c0_i32_1 : i32, i32, i32
  }
  func.func @transform_5(%arg0: i32) -> (i32, i32, i32) {
    %c0_i32 = arith.constant 0 : i32
    %c0_i32_0 = arith.constant 0 : i32
    %c0_i32_1 = arith.constant 0 : i32
    %c0_i32_2 = arith.constant 0 : i32
    return %c0_i32, %c0_i32_0, %c0_i32_1 : i32, i32, i32
  }
  func.func @transform_6(%arg0: i32) -> (i32, i32) {
    %c0_i32 = arith.constant 0 : i32
    %c0_i32_0 = arith.constant 0 : i32
    %c0_i32_1 = arith.constant 0 : i32
    return %c0_i32, %c0_i32_0 : i32, i32
  }
  func.func @transform_7(%arg0: i32) -> (i32, i32, i32) {
    %c0_i32 = arith.constant 0 : i32
    %c0_i32_0 = arith.constant 0 : i32
    %c0_i32_1 = arith.constant 0 : i32
    return %arg0, %c0_i32, %c0_i32_0 : i32, i32, i32
  }
}

</mosaic_0001>

<llo_original>
// kernel: tpu_custom_call.1
$region0: #{tpu_custom_call.1}
  #allocation0 [shape = 'u32[]', space=smem, size = 0x4, offset = 0x4, fixed_abs, tag = 'smem constant byte address 0x4 - core index']
  #allocation1 [shape = 'u32[144,128]{1,0:T(1,128)}', space=vmem, size = 0x12000, scoped, tag = 'internal scratch']
  %s0 = inlined_call_operand.vmem [shape: f32[2,8,32], index: 0, kind: input, shape index: {}]
  %s1 = inlined_call_operand.vmem [shape: f32[2,8,32], index: 1, kind: input, shape index: {}]
  %s2 = inlined_call_operand.vmem [shape: f32[4,32,16], index: 2, kind: input, shape index: {}]
  %s3 = inlined_call_operand.vmem [shape: f32[4,32,16], index: 3, kind: input, shape index: {}]
  %s4 = inlined_call_operand.vmem [shape: f32[4,32,16], index: 4, kind: input, shape index: {}]
  %s5 = inlined_call_operand.vmem [shape: f32[4,16,32], index: 5, kind: input, shape index: {}]
  %s6 = inlined_call_operand.vmem [shape: f32[1,32], index: 6, kind: input, shape index: {}]
  %s7 = inlined_call_operand.hbm [shape: f32[2,8,32], index: 7, kind: output, shape index: {}]
  %s8 = sld [smem:[#allocation0]]
  $region38: #{tpu_custom_call.1} parent=0
    _
  %s10 = ssub.s32 1, %s8
  %s11 = scalar_select 0, %s10, %s8
  $region1: #{tpu_custom_call.1} parent=0
    #allocation2 [shape = 'u8[8192]{0}', space=vmem, size = 0x2000, scoped, tag = 'output window, operand 0, single buffered']
    #allocation3 [shape = 's32[1]{0}', space=sflag, size = 0x4, scoped, tag = 'scoped memory for tpu_custom_call.1']
    %12 = vsyncpa [#allocation3], 0
    // Predicated region
    $region2: #{tpu_custom_call.1} parent=1 // pred_check
      _
    $region3: #{tpu_custom_call.1} parent=1 // pred_check_branch
      %14 = sbr.rel (0) target = $region5
    $region4: #{tpu_custom_call.1} parent=1 // pred_region
      _
    $region5: #{tpu_custom_call.1} parent=1 // pred_fallthru
      _
    // Predicated region
    $region6: #{tpu_custom_call.1} parent=1 // pred_check
      _
    $region7: #{tpu_custom_call.1} parent=1 // pred_check_branch
      %16 = sbr.rel (0) target = $region9
    $region8: #{tpu_custom_call.1} parent=1 // pred_region
      _
    $region9: #{tpu_custom_call.1} parent=1 // pred_fallthru
      _
    // Predicated region
    $region10: #{tpu_custom_call.1} parent=1 // pred_check
      _
    $region11: #{tpu_custom_call.1} parent=1 // pred_check_branch
      %18 = sbr.rel (0) target = $region13
    $region12: #{tpu_custom_call.1} parent=1 // pred_region
      _
    $region13: #{tpu_custom_call.1} parent=1 // pred_fallthru
      _
    // Predicated region
    $region14: #{tpu_custom_call.1} parent=1 // pred_check
      _
    $region15: #{tpu_custom_call.1} parent=1 // pred_check_branch
      %20 = sbr.rel (0) target = $region17
    $region16: #{tpu_custom_call.1} parent=1 // pred_region
      _
    $region17: #{tpu_custom_call.1} parent=1 // pred_fallthru
      _
    // Predicated region
    $region18: #{tpu_custom_call.1} parent=1 // pred_check
      _
    $region19: #{tpu_custom_call.1} parent=1 // pred_check_branch
      %22 = sbr.rel (0) target = $region21
    $region20: #{tpu_custom_call.1} parent=1 // pred_region
      _
    $region21: #{tpu_custom_call.1} parent=1 // pred_fallthru
      _
    // Predicated region
    $region22: #{tpu_custom_call.1} parent=1 // pred_check
      _
    $region23: #{tpu_custom_call.1} parent=1 // pred_check_branch
      %24 = sbr.rel (0) target = $region25
    $region24: #{tpu_custom_call.1} parent=1 // pred_region
      _
    $region25: #{tpu_custom_call.1} parent=1 // pred_fallthru
      _
    // Predicated region
    $region26: #{tpu_custom_call.1} parent=1 // pred_check
      _
    $region27: #{tpu_custom_call.1} parent=1 // pred_check_branch
      %26 = sbr.rel (0) target = $region29
    $region28: #{tpu_custom_call.1} parent=1 // pred_region
      _
    $region29: #{tpu_custom_call.1} parent=1 // pred_fallthru
      _
    %v27 = vld [vmem:[%s6] sm:$0x1]
    %v28 = vld [vmem:[%s0] sm:$0xff]
    %v29 = vld [vmem:[%s1] sm:$0xff]
    %v30 = vld [vmem:[%s2] sm:$0xff]
    %v31 = vld [vmem:[%s2 + $0x8] sm:$0xff]
    %v32 = vld [vmem:[%s2 + $0x10] sm:$0xff]
    %v33 = vld [vmem:[%s2 + $0x18] sm:$0xff]
    %v34 = vld [vmem:[%s3] sm:$0xff]
    %v35 = vld [vmem:[%s3 + $0x8] sm:$0xff]
    %v36 = vld [vmem:[%s3 + $0x10] sm:$0xff]
    %v37 = vld [vmem:[%s3 + $0x18] sm:$0xff]
    %v38 = vld [vmem:[%s4] sm:$0xff]
    %v39 = vld [vmem:[%s4 + $0x8] sm:$0xff]
    %v40 = vld [vmem:[%s4 + $0x10] sm:$0xff]
    %v41 = vld [vmem:[%s4 + $0x18] sm:$0xff]
    %vm42 = vcmask 261120
    %v44 = vsel %vm42, %v28, 0
    %46 = vmatprep.subr.mxu0 0.0
    %47 = vmatpush1.msra.mxu0 %v30
    %48 = vmatprep.subr.mxu0 0.0
    %49 = vmatpush1.msra.mxu0 %v31
    %50 = vmatprep.subr.mxu0 0.0
    %51 = vmatpush1.msra.mxu0 %v32
    %52 = vmatprep.subr.mxu0 0.0
    %53 = vmatpush1.msra.mxu0 %v33
    %54 = vmatprep.subr.mxu0 0.0
    %55 = vmatpush1.msra.mxu0 0.0
    %56 = vmatprep.subr.mxu0 0.0
    %57 = vmatpush1.msra.mxu0 0.0
    %58 = vmatprep.subr.mxu0 0.0
    %59 = vmatpush1.msra.mxu0 0.0
    %60 = vmatprep.subr.mxu0 0.0
    %61 = vmatpush1.msra.mxu0 0.0
    %62 = vmatprep.subr.mxu0 0.0
    %63 = vmatpush1.msra.mxu0 0.0
    %64 = vmatprep.subr.mxu0 0.0
    %65 = vmatpush1.msra.mxu0 0.0
    %66 = vmatprep.subr.mxu0 0.0
    %67 = vmatpush1.msra.mxu0 0.0
    %68 = vmatprep.subr.mxu0 0.0
    %69 = vmatpush1.msra.mxu0 0.0
    %70 = vmatprep.subr.mxu0 0.0
    %71 = vmatpush1.msra.mxu0 0.0
    %72 = vmatprep.subr.mxu0 0.0
    %73 = vmatpush1.msra.mxu0 0.0
    %74 = vmatprep.subr.mxu0 0.0
    %75 = vmatpush1.msra.mxu0 0.0
    %76 = vmatprep.subr.mxu0 0.0
    %77 = vmatpush1.msra.mxu0 0.0
    %78 = vmatprep.subr.mxu0 0.0
    %79 = vmatpush1.msra.mxu0 0.0
    %80 = vmatprep.subr.mxu0 0.0
    %81 = vmatpush1.msra.mxu0 0.0
    %82 = vmatprep.subr.mxu0 0.0
    %83 = vmatpush1.msra.mxu0 0.0
    %84 = vmatprep.subr.mxu0 0.0
    %85 = vmatpush1.msra.mxu0 0.0
    %86 = vmatprep.subr.mxu0 0.0
    %87 = vmatpush1.msra.mxu0 0.0
    %88 = vmatprep.subr.mxu0 0.0
    %89 = vmatpush1.msra.mxu0 0.0
    %90 = vmatprep.subr.mxu0 0.0
    %91 = vmatpush1.msra.mxu0 0.0
    %92 = vmatprep.subr.mxu0 0.0
    %93 = vmatpush1.msra.mxu0 0.0
    %94 = vmatprep.subr.mxu0 0.0
    %95 = vmatpush1.msra.mxu0 0.0
    %96 = vmatprep.subr.mxu0 0.0
    %97 = vmatpush1.msra.mxu0 0.0
    %98 = vmatprep.subr.mxu0 0.0
    %99 = vmatpush1.msra.mxu0 0.0
    %100 = vmatprep.subr.mxu0 0.0
    %101 = vmatpush1.msra.mxu0 0.0
    %102 = vmatprep.subr.mxu0 0.0
    %103 = vmatpush1.msra.mxu0 0.0
    %104 = vmatprep.subr.mxu0 0.0
    %105 = vmatpush1.msra.mxu0 0.0
    %106 = vmatprep.subr.mxu0 0.0
    %107 = vmatpush1.msra.mxu0 0.0
    %108 = vmatprep.subr.mxu0 0.0
    %109 = vmatpush1.msra.mxu0 0.0
    %110 = vmatprep.mubr.f32.mxu0 0.0
    %111 = vmatmul.mubr.f32.gmra.mrb[0].mxu0 %v44
    %v112 = vpop.f32.mrb[0].mxu0
    %v113 = vadd.f32 0.0, %v112
    %v114 = vpop.f32.mrb[0].mxu0
    %115 = vdwg.mxu0
    %v116 = vmul.f32 %v113, 0.25
    %v118 = vsel %vm42, %v29, 0
    %120 = vmatprep.subr.mxu0 0.0
    %121 = vmatpush1.msra.mxu0 %v34
    %122 = vmatprep.subr.mxu0 0.0
    %123 = vmatpush1.msra.mxu0 %v35
    %124 = vmatprep.subr.mxu0 0.0
    %125 = vmatpush1.msra.mxu0 %v36
    %126 = vmatprep.subr.mxu0 0.0
    %127 = vmatpush1.msra.mxu0 %v37
    %128 = vmatprep.subr.mxu0 0.0
    %129 = vmatpush1.msra.mxu0 0.0
    %130 = vmatprep.subr.mxu0 0.0
    %131 = vmatpush1.msra.mxu0 0.0
    %132 = vmatprep.subr.mxu0 0.0
    %133 = vmatpush1.msra.mxu0 0.0
    %134 = vmatprep.subr.mxu0 0.0
    %135 = vmatpush1.msra.mxu0 0.0
    %136 = vmatprep.subr.mxu0 0.0
    %137 = vmatpush1.msra.mxu0 0.0
    %138 = vmatprep.subr.mxu0 0.0
    %139 = vmatpush1.msra.mxu0 0.0
    %140 = vmatprep.subr.mxu0 0.0
    %141 = vmatpush1.msra.mxu0 0.0
    %142 = vmatprep.subr.mxu0 0.0
    %143 = vmatpush1.msra.mxu0 0.0
    %144 = vmatprep.subr.mxu0 0.0
    %145 = vmatpush1.msra.mxu0 0.0
    %146 = vmatprep.subr.mxu0 0.0
    %147 = vmatpush1.msra.mxu0 0.0
    %148 = vmatprep.subr.mxu0 0.0
    %149 = vmatpush1.msra.mxu0 0.0
    %150 = vmatprep.subr.mxu0 0.0
    %151 = vmatpush1.msra.mxu0 0.0
    %152 = vmatprep.subr.mxu0 0.0
    %153 = vmatpush1.msra.mxu0 0.0
    %154 = vmatprep.subr.mxu0 0.0
    %155 = vmatpush1.msra.mxu0 0.0
    %156 = vmatprep.subr.mxu0 0.0
    %157 = vmatpush1.msra.mxu0 0.0
    %158 = vmatprep.subr.mxu0 0.0
    %159 = vmatpush1.msra.mxu0 0.0
    %160 = vmatprep.subr.mxu0 0.0
    %161 = vmatpush1.msra.mxu0 0.0
    %162 = vmatprep.subr.mxu0 0.0
    %163 = vmatpush1.msra.mxu0 0.0
    %164 = vmatprep.subr.mxu0 0.0
    %165 = vmatpush1.msra.mxu0 0.0
    %166 = vmatprep.subr.mxu0 0.0
    %167 = vmatpush1.msra.mxu0 0.0
    %168 = vmatprep.subr.mxu0 0.0
    %169 = vmatpush1.msra.mxu0 0.0
    %170 = vmatprep.subr.mxu0 0.0
    %171 = vmatpush1.msra.mxu0 0.0
    %172 = vmatprep.subr.mxu0 0.0
    %173 = vmatpush1.msra.mxu0 0.0
    %174 = vmatprep.subr.mxu0 0.0
    %175 = vmatpush1.msra.mxu0 0.0
    %176 = vmatprep.subr.mxu0 0.0
    %177 = vmatpush1.msra.mxu0 0.0
    %178 = vmatprep.subr.mxu0 0.0
    %179 = vmatpush1.msra.mxu0 0.0
    %180 = vmatprep.subr.mxu0 0.0
    %181 = vmatpush1.msra.mxu0 0.0
    %182 = vmatprep.subr.mxu0 0.0
    %183 = vmatpush1.msra.mxu0 0.0
    %184 = vmatprep.mubr.f32.mxu0 0.0
    %185 = vmatmul.mubr.f32.gmra.mrb[0].mxu0 %v44
    %v186 = vpop.f32.mrb[0].mxu0
    %v187 = vadd.f32 0.0, %v186
    %v188 = vpop.f32.mrb[0].mxu0
    %189 = vmatprep.mubr.f32.mxu0 0.0
    %190 = vmatmul.mubr.f32.gmra.mrb[0].mxu0 %v118
    %v191 = vpop.f32.mrb[0].mxu0
    %v192 = vadd.f32 0.0, %v191
    %v193 = vpop.f32.mrb[0].mxu0
    %194 = vdwg.mxu0
    %195 = vmatprep.subr.mxu0 0.0
    %196 = vmatpush1.msra.mxu0 %v38
    %197 = vmatprep.subr.mxu0 0.0
    %198 = vmatpush1.msra.mxu0 %v39
    %199 = vmatprep.subr.mxu0 0.0
    %200 = vmatpush1.msra.mxu0 %v40
    %201 = vmatprep.subr.mxu0 0.0
    %202 = vmatpush1.msra.mxu0 %v41
    %203 = vmatprep.subr.mxu0 0.0
    %204 = vmatpush1.msra.mxu0 0.0
    %205 = vmatprep.subr.mxu0 0.0
    %206 = vmatpush1.msra.mxu0 0.0
    %207 = vmatprep.subr.mxu0 0.0
    %208 = vmatpush1.msra.mxu0 0.0
    %209 = vmatprep.subr.mxu0 0.0
    %210 = vmatpush1.msra.mxu0 0.0
    %211 = vmatprep.subr.mxu0 0.0
    %212 = vmatpush1.msra.mxu0 0.0
    %213 = vmatprep.subr.mxu0 0.0
    %214 = vmatpush1.msra.mxu0 0.0
    %215 = vmatprep.subr.mxu0 0.0
    %216 = vmatpush1.msra.mxu0 0.0
    %217 = vmatprep.subr.mxu0 0.0
    %218 = vmatpush1.msra.mxu0 0.0
    %219 = vmatprep.subr.mxu0 0.0
    %220 = vmatpush1.msra.mxu0 0.0
    %221 = vmatprep.subr.mxu0 0.0
    %222 = vmatpush1.msra.mxu0 0.0
    %223 = vmatprep.subr.mxu0 0.0
    %224 = vmatpush1.msra.mxu0 0.0
    %225 = vmatprep.subr.mxu0 0.0
    %226 = vmatpush1.msra.mxu0 0.0
    %227 = vmatprep.subr.mxu0 0.0
    %228 = vmatpush1.msra.mxu0 0.0
    %229 = vmatprep.subr.mxu0 0.0
    %230 = vmatpush1.msra.mxu0 0.0
    %231 = vmatprep.subr.mxu0 0.0
    %232 = vmatpush1.msra.mxu0 0.0
    %233 = vmatprep.subr.mxu0 0.0
    %234 = vmatpush1.msra.mxu0 0.0
    %235 = vmatprep.subr.mxu0 0.0
    %236 = vmatpush1.msra.mxu0 0.0
    %237 = vmatprep.subr.mxu0 0.0
    %238 = vmatpush1.msra.mxu0 0.0
    %239 = vmatprep.subr.mxu0 0.0
    %240 = vmatpush1.msra.mxu0 0.0
    %241 = vmatprep.subr.mxu0 0.0
    %242 = vmatpush1.msra.mxu0 0.0
    %243 = vmatprep.subr.mxu0 0.0
    %244 = vmatpush1.msra.mxu0 0.0
    %245 = vmatprep.subr.mxu0 0.0
    %246 = vmatpush1.msra.mxu0 0.0
    %247 = vmatprep.subr.mxu0 0.0
    %248 = vmatpush1.msra.mxu0 0.0
    %249 = vmatprep.subr.mxu0 0.0
    %250 = vmatpush1.msra.mxu0 0.0
    %251 = vmatprep.subr.mxu0 0.0
    %252 = vmatpush1.msra.mxu0 0.0
    %253 = vmatprep.subr.mxu0 0.0
    %254 = vmatpush1.msra.mxu0 0.0
    %255 = vmatprep.subr.mxu0 0.0
    %256 = vmatpush1.msra.mxu0 0.0
    %257 = vmatprep.subr.mxu0 0.0
    %258 = vmatpush1.msra.mxu0 0.0
    %259 = vmatprep.mubr.f32.mxu0 0.0
    %260 = vmatmul.mubr.f32.gmra.mrb[0].mxu0 %v44
    %v261 = vpop.f32.mrb[0].mxu0
    %v262 = vadd.f32 0.0, %v261
    %v263 = vpop.f32.mrb[0].mxu0
    %264 = vmatprep.mubr.f32.mxu0 0.0
    %265 = vmatmul.mubr.f32.gmra.mrb[0].mxu0 %v118
    %v266 = vpop.f32.mrb[0].mxu0
    %v267 = vadd.f32 0.0, %v266
    %v268 = vpop.f32.mrb[0].mxu0
    %269 = vdwg.mxu0
    %vm270 = vcmask 130048
    %v272 = vsel %vm270, %v116, 0
    %v275 = vsel %vm270, %v187, 0
    %v278 = vsel %vm270, %v192, 0
    %280 = vmatprep.subr.mxu0 0.0
    %281 = vmatpush1.xpose.msra.mxu0 %v275
    %282 = vmatprep.subr.mxu0 0.0
    %283 = vmatpush1.xpose.msra.mxu0 %v278
    %284 = vmatprep.subr.mxu0 0.0
    %285 = vmatpush1.xpose.msra.mxu0 0.0
    %286 = vmatprep.subr.mxu0 0.0
    %287 = vmatpush1.xpose.msra.mxu0 0.0
    %288 = vmatprep.subr.mxu0 0.0
    %289 = vmatpush1.xpose.msra.mxu0 0.0
    %290 = vmatprep.subr.mxu0 0.0
    %291 = vmatpush1.xpose.msra.mxu0 0.0
    %292 = vmatprep.subr.mxu0 0.0
    %293 = vmatpush1.xpose.msra.mxu0 0.0
    %294 = vmatprep.subr.mxu0 0.0
    %295 = vmatpush1.xpose.msra.mxu0 0.0
    %296 = vmatprep.subr.mxu0 0.0
    %297 = vmatpush1.xpose.msra.mxu0 0.0
    %298 = vmatprep.subr.mxu0 0.0
    %299 = vmatpush1.xpose.msra.mxu0 0.0
    %300 = vmatprep.subr.mxu0 0.0
    %301 = vmatpush1.xpose.msra.mxu0 0.0
    %302 = vmatprep.subr.mxu0 0.0
    %303 = vmatpush1.xpose.msra.mxu0 0.0
    %304 = vmatprep.subr.mxu0 0.0
    %305 = vmatpush1.xpose.msra.mxu0 0.0
    %306 = vmatprep.subr.mxu0 0.0
    %307 = vmatpush1.xpose.msra.mxu0 0.0
    %308 = vmatprep.subr.mxu0 0.0
    %309 = vmatpush1.xpose.msra.mxu0 0.0
    %310 = vmatprep.subr.mxu0 0.0
    %311 = vmatpush1.xpose.msra.mxu0 0.0
    %312 = vmatprep.subr.mxu0 0.0
    %313 = vmatpush1.xpose.msra.mxu0 0.0
    %314 = vmatprep.subr.mxu0 0.0
    %315 = vmatpush1.xpose.msra.mxu0 0.0
    %316 = vmatprep.subr.mxu0 0.0
    %317 = vmatpush1.xpose.msra.mxu0 0.0
    %318 = vmatprep.subr.mxu0 0.0
    %319 = vmatpush1.xpose.msra.mxu0 0.0
    %320 = vmatprep.subr.mxu0 0.0
    %321 = vmatpush1.xpose.msra.mxu0 0.0
    %322 = vmatprep.subr.mxu0 0.0
    %323 = vmatpush1.xpose.msra.mxu0 0.0
    %324 = vmatprep.subr.mxu0 0.0
    %325 = vmatpush1.xpose.msra.mxu0 0.0
    %326 = vmatprep.subr.mxu0 0.0
    %327 = vmatpush1.xpose.msra.mxu0 0.0
    %328 = vmatprep.subr.mxu0 0.0
    %329 = vmatpush1.xpose.msra.mxu0 0.0
    %330 = vmatprep.subr.mxu0 0.0
    %331 = vmatpush1.xpose.msra.mxu0 0.0
    %332 = vmatprep.subr.mxu0 0.0
    %333 = vmatpush1.xpose.msra.mxu0 0.0
    %334 = vmatprep.subr.mxu0 0.0
    %335 = vmatpush1.xpose.msra.mxu0 0.0
    %336 = vmatprep.subr.mxu0 0.0
    %337 = vmatpush1.xpose.msra.mxu0 0.0
    %338 = vmatprep.subr.mxu0 0.0
    %339 = vmatpush1.xpose.msra.mxu0 0.0
    %340 = vmatprep.subr.mxu0 0.0
    %341 = vmatpush1.xpose.msra.mxu0 0.0
    %342 = vmatprep.subr.mxu0 0.0
    %343 = vmatpush1.xpose.msra.mxu0 0.0
    %344 = vmatprep.mubr.f32.mxu0 0.0
    %345 = vmatmul.mubr.f32.gmra.mrb[0].mxu0 %v272
    %v346 = vpop.f32.mrb[0].mxu0
    %v347 = vadd.f32 0.0, %v346
    %v348 = vpop.f32.mrb[0].mxu0
    %349 = vdwg.mxu0
    %v350 = vsel %vm270, %v347, -inf
    %351 = vmax.xlane.f32.xlu0 %v350
    %v352 = vpop.xlane.xlu0 %351
    %v353 = vsub.f32 %v347, %v352
    %v354 = vmul.f32 %v353, 1.442695
    %v355 = vpow.pop %v354
    %v356 = vsel %vm270, %v355, 0.0
    %357 = vadd.xlane.f32.xlu0 %v356
    %v358 = vpop.xlane.xlu0 %357
    %v359 = vrcp.pop %v358
    %v360 = vmul.f32 %v355, %v359
    %v362 = vsel %vm270, %v360, 0
    %364 = vmatprep.subr.mxu0 0.0
    %365 = vmatpush1.msra.mxu0 %v262
    %366 = vmatprep.subr.mxu0 0.0
    %367 = vmatpush1.msra.mxu0 %v267
    %368 = vmatprep.subr.mxu0 0.0
    %369 = vmatpush1.msra.mxu0 0.0
    %370 = vmatprep.subr.mxu0 0.0
    %371 = vmatpush1.msra.mxu0 0.0
    %372 = vmatprep.subr.mxu0 0.0
    %373 = vmatpush1.msra.mxu0 0.0
    %374 = vmatprep.subr.mxu0 0.0
    %375 = vmatpush1.msra.mxu0 0.0
    %376 = vmatprep.subr.mxu0 0.0
    %377 = vmatpush1.msra.mxu0 0.0
    %378 = vmatprep.subr.mxu0 0.0
    %379 = vmatpush1.msra.mxu0 0.0
    %380 = vmatprep.subr.mxu0 0.0
    %381 = vmatpush1.msra.mxu0 0.0
    %382 = vmatprep.subr.mxu0 0.0
    %383 = vmatpush1.msra.mxu0 0.0
    %384 = vmatprep.subr.mxu0 0.0
    %385 = vmatpush1.msra.mxu0 0.0
    %386 = vmatprep.subr.mxu0 0.0
    %387 = vmatpush1.msra.mxu0 0.0
    %388 = vmatprep.subr.mxu0 0.0
    %389 = vmatpush1.msra.mxu0 0.0
    %390 = vmatprep.subr.mxu0 0.0
    %391 = vmatpush1.msra.mxu0 0.0
    %392 = vmatprep.subr.mxu0 0.0
    %393 = vmatpush1.msra.mxu0 0.0
    %394 = vmatprep.subr.mxu0 0.0
    %395 = vmatpush1.msra.mxu0 0.0
    %396 = vmatprep.subr.mxu0 0.0
    %397 = vmatpush1.msra.mxu0 0.0
    %398 = vmatprep.subr.mxu0 0.0
    %399 = vmatpush1.msra.mxu0 0.0
    %400 = vmatprep.subr.mxu0 0.0
    %401 = vmatpush1.msra.mxu0 0.0
    %402 = vmatprep.subr.mxu0 0.0
    %403 = vmatpush1.msra.mxu0 0.0
    %404 = vmatprep.subr.mxu0 0.0
    %405 = vmatpush1.msra.mxu0 0.0
    %406 = vmatprep.subr.mxu0 0.0
    %407 = vmatpush1.msra.mxu0 0.0
    %408 = vmatprep.subr.mxu0 0.0
    %409 = vmatpush1.msra.mxu0 0.0
    %410 = vmatprep.subr.mxu0 0.0
    %411 = vmatpush1.msra.mxu0 0.0
    %412 = vmatprep.subr.mxu0 0.0
    %413 = vmatpush1.msra.mxu0 0.0
    %414 = vmatprep.subr.mxu0 0.0
    %415 = vmatpush1.msra.mxu0 0.0
    %416 = vmatprep.subr.mxu0 0.0
    %417 = vmatpush1.msra.mxu0 0.0
    %418 = vmatprep.subr.mxu0 0.0
    %419 = vmatpush1.msra.mxu0 0.0
    %420 = vmatprep.subr.mxu0 0.0
    %421 = vmatpush1.msra.mxu0 0.0
    %422 = vmatprep.subr.mxu0 0.0
    %423 = vmatpush1.msra.mxu0 0.0
    %424 = vmatprep.subr.mxu0 0.0
    %425 = vmatpush1.msra.mxu0 0.0
    %426 = vmatprep.subr.mxu0 0.0
    %427 = vmatpush1.msra.mxu0 0.0
    %428 = vmatprep.mubr.f32.mxu0 0.0
    %429 = vmatmul.mubr.f32.gmra.mrb[0].mxu0 %v362
    %v430 = vpop.f32.mrb[0].mxu0
    %v431 = vadd.f32 0.0, %v430
    %v432 = vpop.f32.mrb[0].mxu0
    %433 = vdwg.mxu0
    %v434 = vld [vmem:[%s5] sm:$0xff]
    %v435 = vld [vmem:[%s5 + $0x8] sm:$0xff]
    %s436 = scalar_lea.vmem %s2, 32
    %v437 = vld [vmem:[%s436] sm:$0xff]
    %v438 = vld [vmem:[%s436 + $0x8] sm:$0xff]
    %v439 = vld [vmem:[%s436 + $0x10] sm:$0xff]
    %v440 = vld [vmem:[%s436 + $0x18] sm:$0xff]
    %s441 = scalar_lea.vmem %s3, 32
    %v442 = vld [vmem:[%s441] sm:$0xff]
    %v443 = vld [vmem:[%s441 + $0x8] sm:$0xff]
    %v444 = vld [vmem:[%s441 + $0x10] sm:$0xff]
    %v445 = vld [vmem:[%s441 + $0x18] sm:$0xff]
    %s446 = scalar_lea.vmem %s4, 32
    %v447 = vld [vmem:[%s446] sm:$0xff]
    %v448 = vld [vmem:[%s446 + $0x8] sm:$0xff]
    %v449 = vld [vmem:[%s446 + $0x10] sm:$0xff]
    %v450 = vld [vmem:[%s446 + $0x18] sm:$0xff]
    %451 = vmatprep.subr.mxu0 0.0
    %452 = vmatpush1.msra.mxu0 %v437
    %453 = vmatprep.subr.mxu0 0.0
    %454 = vmatpush1.msra.mxu0 %v438
    %455 = vmatprep.subr.mxu0 0.0
    %456 = vmatpush1.msra.mxu0 %v439
    %457 = vmatprep.subr.mxu0 0.0
    %458 = vmatpush1.msra.mxu0 %v440
    %459 = vmatprep.subr.mxu0 0.0
    %460 = vmatpush1.msra.mxu0 0.0
    %461 = vmatprep.subr.mxu0 0.0
    %462 = vmatpush1.msra.mxu0 0.0
    %463 = vmatprep.subr.mxu0 0.0
    %464 = vmatpush1.msra.mxu0 0.0
    %465 = vmatprep.subr.mxu0 0.0
    %466 = vmatpush1.msra.mxu0 0.0
    %467 = vmatprep.subr.mxu0 0.0
    %468 = vmatpush1.msra.mxu0 0.0
    %469 = vmatprep.subr.mxu0 0.0
    %470 = vmatpush1.msra.mxu0 0.0
    %471 = vmatprep.subr.mxu0 0.0
    %472 = vmatpush1.msra.mxu0 0.0
    %473 = vmatprep.subr.mxu0 0.0
    %474 = vmatpush1.msra.mxu0 0.0
    %475 = vmatprep.subr.mxu0 0.0
    %476 = vmatpush1.msra.mxu0 0.0
    %477 = vmatprep.subr.mxu0 0.0
    %478 = vmatpush1.msra.mxu0 0.0
    %479 = vmatprep.subr.mxu0 0.0
    %480 = vmatpush1.msra.mxu0 0.0
    %481 = vmatprep.subr.mxu0 0.0
    %482 = vmatpush1.msra.mxu0 0.0
    %483 = vmatprep.subr.mxu0 0.0
    %484 = vmatpush1.msra.mxu0 0.0
    %485 = vmatprep.subr.mxu0 0.0
    %486 = vmatpush1.msra.mxu0 0.0
    %487 = vmatprep.subr.mxu0 0.0
    %488 = vmatpush1.msra.mxu0 0.0
    %489 = vmatprep.subr.mxu0 0.0
    %490 = vmatpush1.msra.mxu0 0.0
    %491 = vmatprep.subr.mxu0 0.0
    %492 = vmatpush1.msra.mxu0 0.0
    %493 = vmatprep.subr.mxu0 0.0
    %494 = vmatpush1.msra.mxu0 0.0
    %495 = vmatprep.subr.mxu0 0.0
    %496 = vmatpush1.msra.mxu0 0.0
    %497 = vmatprep.subr.mxu0 0.0
    %498 = vmatpush1.msra.mxu0 0.0
    %499 = vmatprep.subr.mxu0 0.0
    %500 = vmatpush1.msra.mxu0 0.0
    %501 = vmatprep.subr.mxu0 0.0
    %502 = vmatpush1.msra.mxu0 0.0
    %503 = vmatprep.subr.mxu0 0.0
    %504 = vmatpush1.msra.mxu0 0.0
    %505 = vmatprep.subr.mxu0 0.0
    %506 = vmatpush1.msra.mxu0 0.0
    %507 = vmatprep.subr.mxu0 0.0
    %508 = vmatpush1.msra.mxu0 0.0
    %509 = vmatprep.subr.mxu0 0.0
    %510 = vmatpush1.msra.mxu0 0.0
    %511 = vmatprep.subr.mxu0 0.0
    %512 = vmatpush1.msra.mxu0 0.0
    %513 = vmatprep.subr.mxu0 0.0
    %514 = vmatpush1.msra.mxu0 0.0
    %515 = vmatprep.mubr.f32.mxu0 0.0
    %516 = vmatmul.mubr.f32.gmra.mrb[0].mxu0 %v44
    %v517 = vpop.f32.mrb[0].mxu0
    %v518 = vadd.f32 0.0, %v517
    %v519 = vpop.f32.mrb[0].mxu0
    %520 = vdwg.mxu0
    %v521 = vmul.f32 %v518, 0.25
    %522 = vmatprep.subr.mxu0 0.0
    %523 = vmatpush1.msra.mxu0 %v442
    %524 = vmatprep.subr.mxu0 0.0
    %525 = vmatpush1.msra.mxu0 %v443
    %526 = vmatprep.subr.mxu0 0.0
    %527 = vmatpush1.msra.mxu0 %v444
    %528 = vmatprep.subr.mxu0 0.0
    %529 = vmatpush1.msra.mxu0 %v445
    %530 = vmatprep.subr.mxu0 0.0
    %531 = vmatpush1.msra.mxu0 0.0
    %532 = vmatprep.subr.mxu0 0.0
    %533 = vmatpush1.msra.mxu0 0.0
    %534 = vmatprep.subr.mxu0 0.0
    %535 = vmatpush1.msra.mxu0 0.0
    %536 = vmatprep.subr.mxu0 0.0
    %537 = vmatpush1.msra.mxu0 0.0
    %538 = vmatprep.subr.mxu0 0.0
    %539 = vmatpush1.msra.mxu0 0.0
    %540 = vmatprep.subr.mxu0 0.0
    %541 = vmatpush1.msra.mxu0 0.0
    %542 = vmatprep.subr.mxu0 0.0
    %543 = vmatpush1.msra.mxu0 0.0
    %544 = vmatprep.subr.mxu0 0.0
    %545 = vmatpush1.msra.mxu0 0.0
    %546 = vmatprep.subr.mxu0 0.0
    %547 = vmatpush1.msra.mxu0 0.0
    %548 = vmatprep.subr.mxu0 0.0
    %549 = vmatpush1.msra.mxu0 0.0
    %550 = vmatprep.subr.mxu0 0.0
    %551 = vmatpush1.msra.mxu0 0.0
    %552 = vmatprep.subr.mxu0 0.0
    %553 = vmatpush1.msra.mxu0 0.0
    %554 = vmatprep.subr.mxu0 0.0
    %555 = vmatpush1.msra.mxu0 0.0
    %556 = vmatprep.subr.mxu0 0.0
    %557 = vmatpush1.msra.mxu0 0.0
    %558 = vmatprep.subr.mxu0 0.0
    %559 = vmatpush1.msra.mxu0 0.0
    %560 = vmatprep.subr.mxu0 0.0
    %561 = vmatpush1.msra.mxu0 0.0
    %562 = vmatprep.subr.mxu0 0.0
    %563 = vmatpush1.msra.mxu0 0.0
    %564 = vmatprep.subr.mxu0 0.0
    %565 = vmatpush1.msra.mxu0 0.0
    %566 = vmatprep.subr.mxu0 0.0
    %567 = vmatpush1.msra.mxu0 0.0
    %568 = vmatprep.subr.mxu0 0.0
    %569 = vmatpush1.msra.mxu0 0.0
    %570 = vmatprep.subr.mxu0 0.0
    %571 = vmatpush1.msra.mxu0 0.0
    %572 = vmatprep.subr.mxu0 0.0
    %573 = vmatpush1.msra.mxu0 0.0
    %574 = vmatprep.subr.mxu0 0.0
    %575 = vmatpush1.msra.mxu0 0.0
    %576 = vmatprep.subr.mxu0 0.0
    %577 = vmatpush1.msra.mxu0 0.0
    %578 = vmatprep.subr.mxu0 0.0
    %579 = vmatpush1.msra.mxu0 0.0
    %580 = vmatprep.subr.mxu0 0.0
    %581 = vmatpush1.msra.mxu0 0.0
    %582 = vmatprep.subr.mxu0 0.0
    %583 = vmatpush1.msra.mxu0 0.0
    %584 = vmatprep.subr.mxu0 0.0
    %585 = vmatpush1.msra.mxu0 0.0
    %586 = vmatprep.mubr.f32.mxu0 0.0
    %587 = vmatmul.mubr.f32.gmra.mrb[0].mxu0 %v44
    %v588 = vpop.f32.mrb[0].mxu0
    %v589 = vadd.f32 0.0, %v588
    %v590 = vpop.f32.mrb[0].mxu0
    %591 = vmatprep.mubr.f32.mxu0 0.0
    %592 = vmatmul.mubr.f32.gmra.mrb[0].mxu0 %v118
    %v593 = vpop.f32.mrb[0].mxu0
    %v594 = vadd.f32 0.0, %v593
    %v595 = vpop.f32.mrb[0].mxu0
    %596 = vdwg.mxu0
    %597 = vmatprep.subr.mxu0 0.0
    %598 = vmatpush1.msra.mxu0 %v447
    %599 = vmatprep.subr.mxu0 0.0
    %600 = vmatpush1.msra.mxu0 %v448
    %601 = vmatprep.subr.mxu0 0.0
    %602 = vmatpush1.msra.mxu0 %v449
    %603 = vmatprep.subr.mxu0 0.0
    %604 = vmatpush1.msra.mxu0 %v450
    %605 = vmatprep.subr.mxu0 0.0
    %606 = vmatpush1.msra.mxu0 0.0
    %607 = vmatprep.subr.mxu0 0.0
    %608 = vmatpush1.msra.mxu0 0.0
    %609 = vmatprep.subr.mxu0 0.0
    %610 = vmatpush1.msra.mxu0 0.0
    %611 = vmatprep.subr.mxu0 0.0
    %612 = vmatpush1.msra.mxu0 0.0
    %613 = vmatprep.subr.mxu0 0.0
    %614 = vmatpush1.msra.mxu0 0.0
    %615 = vmatprep.subr.mxu0 0.0
    %616 = vmatpush1.msra.mxu0 0.0
    %617 = vmatprep.subr.mxu0 0.0
    %618 = vmatpush1.msra.mxu0 0.0
    %619 = vmatprep.subr.mxu0 0.0
    %620 = vmatpush1.msra.mxu0 0.0
    %621 = vmatprep.subr.mxu0 0.0
    %622 = vmatpush1.msra.mxu0 0.0
    %623 = vmatprep.subr.mxu0 0.0
    %624 = vmatpush1.msra.mxu0 0.0
    %625 = vmatprep.subr.mxu0 0.0
    %626 = vmatpush1.msra.mxu0 0.0
    %627 = vmatprep.subr.mxu0 0.0
    %628 = vmatpush1.msra.mxu0 0.0
    %629 = vmatprep.subr.mxu0 0.0
    %630 = vmatpush1.msra.mxu0 0.0
    %631 = vmatprep.subr.mxu0 0.0
    %632 = vmatpush1.msra.mxu0 0.0
    %633 = vmatprep.subr.mxu0 0.0
    %634 = vmatpush1.msra.mxu0 0.0
    %635 = vmatprep.subr.mxu0 0.0
    %636 = vmatpush1.msra.mxu0 0.0
    %637 = vmatprep.subr.mxu0 0.0
    %638 = vmatpush1.msra.mxu0 0.0
    %639 = vmatprep.subr.mxu0 0.0
    %640 = vmatpush1.msra.mxu0 0.0
    %641 = vmatprep.subr.mxu0 0.0
    %642 = vmatpush1.msra.mxu0 0.0
    %643 = vmatprep.subr.mxu0 0.0
    %644 = vmatpush1.msra.mxu0 0.0
    %645 = vmatprep.subr.mxu0 0.0
    %646 = vmatpush1.msra.mxu0 0.0
    %647 = vmatprep.subr.mxu0 0.0
    %648 = vmatpush1.msra.mxu0 0.0
    %649 = vmatprep.subr.mxu0 0.0
    %650 = vmatpush1.msra.mxu0 0.0
    %651 = vmatprep.subr.mxu0 0.0
    %652 = vmatpush1.msra.mxu0 0.0
    %653 = vmatprep.subr.mxu0 0.0
    %654 = vmatpush1.msra.mxu0 0.0
    %655 = vmatprep.subr.mxu0 0.0
    %656 = vmatpush1.msra.mxu0 0.0
    %657 = vmatprep.subr.mxu0 0.0
    %658 = vmatpush1.msra.mxu0 0.0
    %659 = vmatprep.subr.mxu0 0.0
    %660 = vmatpush1.msra.mxu0 0.0
    %661 = vmatprep.mubr.f32.mxu0 0.0
    %662 = vmatmul.mubr.f32.gmra.mrb[0].mxu0 %v44
    %v663 = vpop.f32.mrb[0].mxu0
    %v664 = vadd.f32 0.0, %v663
    %v665 = vpop.f32.mrb[0].mxu0
    %666 = vmatprep.mubr.f32.mxu0 0.0
    %667 = vmatmul.mubr.f32.gmra.mrb[0].mxu0 %v118
    %v668 = vpop.f32.mrb[0].mxu0
    %v669 = vadd.f32 0.0, %v668
    %v670 = vpop.f32.mrb[0].mxu0
    %671 = vdwg.mxu0
    %v673 = vsel %vm270, %v521, 0
    %v676 = vsel %vm270, %v589, 0
    %v679 = vsel %vm270, %v594, 0
    %681 = vmatprep.subr.mxu0 0.0
    %682 = vmatpush1.xpose.msra.mxu0 %v676
    %683 = vmatprep.subr.mxu0 0.0
    %684 = vmatpush1.xpose.msra.mxu0 %v679
    %685 = vmatprep.subr.mxu0 0.0
    %686 = vmatpush1.xpose.msra.mxu0 0.0
    %687 = vmatprep.subr.mxu0 0.0
    %688 = vmatpush1.xpose.msra.mxu0 0.0
    %689 = vmatprep.subr.mxu0 0.0
    %690 = vmatpush1.xpose.msra.mxu0 0.0
    %691 = vmatprep.subr.mxu0 0.0
    %692 = vmatpush1.xpose.msra.mxu0 0.0
    %693 = vmatprep.subr.mxu0 0.0
    %694 = vmatpush1.xpose.msra.mxu0 0.0
    %695 = vmatprep.subr.mxu0 0.0
    %696 = vmatpush1.xpose.msra.mxu0 0.0
    %697 = vmatprep.subr.mxu0 0.0
    %698 = vmatpush1.xpose.msra.mxu0 0.0
    %699 = vmatprep.subr.mxu0 0.0
    %700 = vmatpush1.xpose.msra.mxu0 0.0
    %701 = vmatprep.subr.mxu0 0.0
    %702 = vmatpush1.xpose.msra.mxu0 0.0
    %703 = vmatprep.subr.mxu0 0.0
    %704 = vmatpush1.xpose.msra.mxu0 0.0
    %705 = vmatprep.subr.mxu0 0.0
    %706 = vmatpush1.xpose.msra.mxu0 0.0
    %707 = vmatprep.subr.mxu0 0.0
    %708 = vmatpush1.xpose.msra.mxu0 0.0
    %709 = vmatprep.subr.mxu0 0.0
    %710 = vmatpush1.xpose.msra.mxu0 0.0
    %711 = vmatprep.subr.mxu0 0.0
    %712 = vmatpush1.xpose.msra.mxu0 0.0
    %713 = vmatprep.subr.mxu0 0.0
    %714 = vmatpush1.xpose.msra.mxu0 0.0
    %715 = vmatprep.subr.mxu0 0.0
    %716 = vmatpush1.xpose.msra.mxu0 0.0
    %717 = vmatprep.subr.mxu0 0.0
    %718 = vmatpush1.xpose.msra.mxu0 0.0
    %719 = vmatprep.subr.mxu0 0.0
    %720 = vmatpush1.xpose.msra.mxu0 0.0
    %721 = vmatprep.subr.mxu0 0.0
    %722 = vmatpush1.xpose.msra.mxu0 0.0
    %723 = vmatprep.subr.mxu0 0.0
    %724 = vmatpush1.xpose.msra.mxu0 0.0
    %725 = vmatprep.subr.mxu0 0.0
    %726 = vmatpush1.xpose.msra.mxu0 0.0
    %727 = vmatprep.subr.mxu0 0.0
    %728 = vmatpush1.xpose.msra.mxu0 0.0
    %729 = vmatprep.subr.mxu0 0.0
    %730 = vmatpush1.xpose.msra.mxu0 0.0
    %731 = vmatprep.subr.mxu0 0.0
    %732 = vmatpush1.xpose.msra.mxu0 0.0
    %733 = vmatprep.subr.mxu0 0.0
    %734 = vmatpush1.xpose.msra.mxu0 0.0
    %735 = vmatprep.subr.mxu0 0.0
    %736 = vmatpush1.xpose.msra.mxu0 0.0
    %737 = vmatprep.subr.mxu0 0.0
    %738 = vmatpush1.xpose.msra.mxu0 0.0
    %739 = vmatprep.subr.mxu0 0.0
    %740 = vmatpush1.xpose.msra.mxu0 0.0
    %741 = vmatprep.subr.mxu0 0.0
    %742 = vmatpush1.xpose.msra.mxu0 0.0
    %743 = vmatprep.subr.mxu0 0.0
    %744 = vmatpush1.xpose.msra.mxu0 0.0
    %745 = vmatprep.mubr.f32.mxu0 0.0
    %746 = vmatmul.mubr.f32.gmra.mrb[0].mxu0 %v673
    %v747 = vpop.f32.mrb[0].mxu0
    %v748 = vadd.f32 0.0, %v747
    %v749 = vpop.f32.mrb[0].mxu0
    %750 = vdwg.mxu0
    %v751 = vsel %vm270, %v748, -inf
    %752 = vmax.xlane.f32.xlu0 %v751
    %v753 = vpop.xlane.xlu0 %752
    %v754 = vsub.f32 %v748, %v753
    %v755 = vmul.f32 %v754, 1.442695
    %v756 = vpow.pop %v755
    %v757 = vsel %vm270, %v756, 0.0
    %758 = vadd.xlane.f32.xlu0 %v757
    %v759 = vpop.xlane.xlu0 %758
    %v760 = vrcp.pop %v759
    %v761 = vmul.f32 %v756, %v760
    %v763 = vsel %vm270, %v761, 0
    %765 = vmatprep.subr.mxu0 0.0
    %766 = vmatpush1.msra.mxu0 %v664
    %767 = vmatprep.subr.mxu0 0.0
    %768 = vmatpush1.msra.mxu0 %v669
    %769 = vmatprep.subr.mxu0 0.0
    %770 = vmatpush1.msra.mxu0 0.0
    %771 = vmatprep.subr.mxu0 0.0
    %772 = vmatpush1.msra.mxu0 0.0
    %773 = vmatprep.subr.mxu0 0.0
    %774 = vmatpush1.msra.mxu0 0.0
    %775 = vmatprep.subr.mxu0 0.0
    %776 = vmatpush1.msra.mxu0 0.0
    %777 = vmatprep.subr.mxu0 0.0
    %778 = vmatpush1.msra.mxu0 0.0
    %779 = vmatprep.subr.mxu0 0.0
    %780 = vmatpush1.msra.mxu0 0.0
    %781 = vmatprep.subr.mxu0 0.0
    %782 = vmatpush1.msra.mxu0 0.0
    %783 = vmatprep.subr.mxu0 0.0
    %784 = vmatpush1.msra.mxu0 0.0
    %785 = vmatprep.subr.mxu0 0.0
    %786 = vmatpush1.msra.mxu0 0.0
    %787 = vmatprep.subr.mxu0 0.0
    %788 = vmatpush1.msra.mxu0 0.0
    %789 = vmatprep.subr.mxu0 0.0
    %790 = vmatpush1.msra.mxu0 0.0
    %791 = vmatprep.subr.mxu0 0.0
    %792 = vmatpush1.msra.mxu0 0.0
    %793 = vmatprep.subr.mxu0 0.0
    %794 = vmatpush1.msra.mxu0 0.0
    %795 = vmatprep.subr.mxu0 0.0
    %796 = vmatpush1.msra.mxu0 0.0
    %797 = vmatprep.subr.mxu0 0.0
    %798 = vmatpush1.msra.mxu0 0.0
    %799 = vmatprep.subr.mxu0 0.0
    %800 = vmatpush1.msra.mxu0 0.0
    %801 = vmatprep.subr.mxu0 0.0
    %802 = vmatpush1.msra.mxu0 0.0
    %803 = vmatprep.subr.mxu0 0.0
    %804 = vmatpush1.msra.mxu0 0.0
    %805 = vmatprep.subr.mxu0 0.0
    %806 = vmatpush1.msra.mxu0 0.0
    %807 = vmatprep.subr.mxu0 0.0
    %808 = vmatpush1.msra.mxu0 0.0
    %809 = vmatprep.subr.mxu0 0.0
    %810 = vmatpush1.msra.mxu0 0.0
    %811 = vmatprep.subr.mxu0 0.0
    %812 = vmatpush1.msra.mxu0 0.0
    %813 = vmatprep.subr.mxu0 0.0
    %814 = vmatpush1.msra.mxu0 0.0
    %815 = vmatprep.subr.mxu0 0.0
    %816 = vmatpush1.msra.mxu0 0.0
    %817 = vmatprep.subr.mxu0 0.0
    %818 = vmatpush1.msra.mxu0 0.0
    %819 = vmatprep.subr.mxu0 0.0
    %820 = vmatpush1.msra.mxu0 0.0
    %821 = vmatprep.subr.mxu0 0.0
    %822 = vmatpush1.msra.mxu0 0.0
    %823 = vmatprep.subr.mxu0 0.0
    %824 = vmatpush1.msra.mxu0 0.0
    %825 = vmatprep.subr.mxu0 0.0
    %826 = vmatpush1.msra.mxu0 0.0
    %827 = vmatprep.subr.mxu0 0.0
    %828 = vmatpush1.msra.mxu0 0.0
    %829 = vmatprep.mubr.f32.mxu0 0.0
    %830 = vmatmul.mubr.f32.gmra.mrb[0].mxu0 %v763
    %v831 = vpop.f32.mrb[0].mxu0
    %v832 = vadd.f32 0.0, %v831
    %v833 = vpop.f32.mrb[0].mxu0
    %834 = vdwg.mxu0
    %s835 = scalar_lea.vmem %s5, 16
    %v836 = vld [vmem:[%s835] sm:$0xff]
    %v837 = vld [vmem:[%s835 + $0x8] sm:$0xff]
    %v839 = vsel %vm270, %v832, 0
    %841 = vmatprep.subr.mxu0 0.0
    %842 = vmatpush1.msra.mxu0 %v836
    %843 = vmatprep.subr.mxu0 0.0
    %844 = vmatpush1.msra.mxu0 %v837
    %845 = vmatprep.subr.mxu0 0.0
    %846 = vmatpush1.msra.mxu0 0.0
    %847 = vmatprep.subr.mxu0 0.0
    %848 = vmatpush1.msra.mxu0 0.0
    %849 = vmatprep.subr.mxu0 0.0
    %850 = vmatpush1.msra.mxu0 0.0
    %851 = vmatprep.subr.mxu0 0.0
    %852 = vmatpush1.msra.mxu0 0.0
    %853 = vmatprep.subr.mxu0 0.0
    %854 = vmatpush1.msra.mxu0 0.0
    %855 = vmatprep.subr.mxu0 0.0
    %856 = vmatpush1.msra.mxu0 0.0
    %857 = vmatprep.subr.mxu0 0.0
    %858 = vmatpush1.msra.mxu0 0.0
    %859 = vmatprep.subr.mxu0 0.0
    %860 = vmatpush1.msra.mxu0 0.0
    %861 = vmatprep.subr.mxu0 0.0
    %862 = vmatpush1.msra.mxu0 0.0
    %863 = vmatprep.subr.mxu0 0.0
    %864 = vmatpush1.msra.mxu0 0.0
    %865 = vmatprep.subr.mxu0 0.0
    %866 = vmatpush1.msra.mxu0 0.0
    %867 = vmatprep.subr.mxu0 0.0
    %868 = vmatpush1.msra.mxu0 0.0
    %869 = vmatprep.subr.mxu0 0.0
    %870 = vmatpush1.msra.mxu0 0.0
    %871 = vmatprep.subr.mxu0 0.0
    %872 = vmatpush1.msra.mxu0 0.0
    %873 = vmatprep.subr.mxu0 0.0
    %874 = vmatpush1.msra.mxu0 0.0
    %875 = vmatprep.subr.mxu0 0.0
    %876 = vmatpush1.msra.mxu0 0.0
    %877 = vmatprep.subr.mxu0 0.0
    %878 = vmatpush1.msra.mxu0 0.0
    %879 = vmatprep.subr.mxu0 0.0
    %880 = vmatpush1.msra.mxu0 0.0
    %881 = vmatprep.subr.mxu0 0.0
    %882 = vmatpush1.msra.mxu0 0.0
    %883 = vmatprep.subr.mxu0 0.0
    %884 = vmatpush1.msra.mxu0 0.0
    %885 = vmatprep.subr.mxu0 0.0
    %886 = vmatpush1.msra.mxu0 0.0
    %887 = vmatprep.subr.mxu0 0.0
    %888 = vmatpush1.msra.mxu0 0.0
    %889 = vmatprep.subr.mxu0 0.0
    %890 = vmatpush1.msra.mxu0 0.0
    %891 = vmatprep.subr.mxu0 0.0
    %892 = vmatpush1.msra.mxu0 0.0
    %893 = vmatprep.subr.mxu0 0.0
    %894 = vmatpush1.msra.mxu0 0.0
    %895 = vmatprep.subr.mxu0 0.0
    %896 = vmatpush1.msra.mxu0 0.0
    %897 = vmatprep.subr.mxu0 0.0
    %898 = vmatpush1.msra.mxu0 0.0
    %899 = vmatprep.subr.mxu0 0.0
    %900 = vmatpush1.msra.mxu0 0.0
    %901 = vmatprep.subr.mxu0 0.0
    %902 = vmatpush1.msra.mxu0 0.0
    %903 = vmatprep.subr.mxu0 0.0
    %904 = vmatpush1.msra.mxu0 0.0
    %905 = vmatprep.mubr.f32.mxu0 0.0
    %906 = vmatmul.mubr.f32.gmra.mrb[0].mxu0 %v839
    %v907 = vpop.f32.mrb[0].mxu0
    %v908 = vadd.f32 0.0, %v907
    %v909 = vpop.f32.mrb[0].mxu0
    %910 = vdwg.mxu0
    %v912 = vsel %vm270, %v431, 0
    %914 = vmatprep.subr.mxu0 0.0
    %915 = vmatpush1.msra.mxu0 %v434
    %916 = vmatprep.subr.mxu0 0.0
    %917 = vmatpush1.msra.mxu0 %v435
    %918 = vmatprep.subr.mxu0 0.0
    %919 = vmatpush1.msra.mxu0 0.0
    %920 = vmatprep.subr.mxu0 0.0
    %921 = vmatpush1.msra.mxu0 0.0
    %922 = vmatprep.subr.mxu0 0.0
    %923 = vmatpush1.msra.mxu0 0.0
    %924 = vmatprep.subr.mxu0 0.0
    %925 = vmatpush1.msra.mxu0 0.0
    %926 = vmatprep.subr.mxu0 0.0
    %927 = vmatpush1.msra.mxu0 0.0
    %928 = vmatprep.subr.mxu0 0.0
    %929 = vmatpush1.msra.mxu0 0.0
    %930 = vmatprep.subr.mxu0 0.0
    %931 = vmatpush1.msra.mxu0 0.0
    %932 = vmatprep.subr.mxu0 0.0
    %933 = vmatpush1.msra.mxu0 0.0
    %934 = vmatprep.subr.mxu0 0.0
    %935 = vmatpush1.msra.mxu0 0.0
    %936 = vmatprep.subr.mxu0 0.0
    %937 = vmatpush1.msra.mxu0 0.0
    %938 = vmatprep.subr.mxu0 0.0
    %939 = vmatpush1.msra.mxu0 0.0
    %940 = vmatprep.subr.mxu0 0.0
    %941 = vmatpush1.msra.mxu0 0.0
    %942 = vmatprep.subr.mxu0 0.0
    %943 = vmatpush1.msra.mxu0 0.0
    %944 = vmatprep.subr.mxu0 0.0
    %945 = vmatpush1.msra.mxu0 0.0
    %946 = vmatprep.subr.mxu0 0.0
    %947 = vmatpush1.msra.mxu0 0.0
    %948 = vmatprep.subr.mxu0 0.0
    %949 = vmatpush1.msra.mxu0 0.0
    %950 = vmatprep.subr.mxu0 0.0
    %951 = vmatpush1.msra.mxu0 0.0
    %952 = vmatprep.subr.mxu0 0.0
    %953 = vmatpush1.msra.mxu0 0.0
    %954 = vmatprep.subr.mxu0 0.0
    %955 = vmatpush1.msra.mxu0 0.0
    %956 = vmatprep.subr.mxu0 0.0
    %957 = vmatpush1.msra.mxu0 0.0
    %958 = vmatprep.subr.mxu0 0.0
    %959 = vmatpush1.msra.mxu0 0.0
    %960 = vmatprep.subr.mxu0 0.0
    %961 = vmatpush1.msra.mxu0 0.0
    %962 = vmatprep.subr.mxu0 0.0
    %963 = vmatpush1.msra.mxu0 0.0
    %964 = vmatprep.subr.mxu0 0.0
    %965 = vmatpush1.msra.mxu0 0.0
    %966 = vmatprep.subr.mxu0 0.0
    %967 = vmatpush1.msra.mxu0 0.0
    %968 = vmatprep.subr.mxu0 0.0
    %969 = vmatpush1.msra.mxu0 0.0
    %970 = vmatprep.subr.mxu0 0.0
    %971 = vmatpush1.msra.mxu0 0.0
    %972 = vmatprep.subr.mxu0 0.0
    %973 = vmatpush1.msra.mxu0 0.0
    %974 = vmatprep.subr.mxu0 0.0
    %975 = vmatpush1.msra.mxu0 0.0
    %976 = vmatprep.subr.mxu0 0.0
    %977 = vmatpush1.msra.mxu0 0.0
    %978 = vmatprep.mubr.f32.mxu0 0.0
    %979 = vmatmul.mubr.f32.gmra.mrb[0].mxu0 %v912
    %v980 = vpop.f32.mrb[0].mxu0
    %v981 = vadd.f32 %v908, %v980
    %v982 = vpop.f32.mrb[0].mxu0
    %983 = vdwg.mxu0
    %s984 = scalar_lea.vmem %s2, 64
    %v985 = vld [vmem:[%s984] sm:$0xff]
    %v986 = vld [vmem:[%s984 + $0x8] sm:$0xff]
    %v987 = vld [vmem:[%s984 + $0x10] sm:$0xff]
    %v988 = vld [vmem:[%s984 + $0x18] sm:$0xff]
    %s989 = scalar_lea.vmem %s3, 64
    %v990 = vld [vmem:[%s989] sm:$0xff]
    %v991 = vld [vmem:[%s989 + $0x8] sm:$0xff]
    %v992 = vld [vmem:[%s989 + $0x10] sm:$0xff]
    %v993 = vld [vmem:[%s989 + $0x18] sm:$0xff]
    %s994 = scalar_lea.vmem %s4, 64
    %v995 = vld [vmem:[%s994] sm:$0xff]
    %v996 = vld [vmem:[%s994 + $0x8] sm:$0xff]
    %v997 = vld [vmem:[%s994 + $0x10] sm:$0xff]
    %v998 = vld [vmem:[%s994 + $0x18] sm:$0xff]
    %999 = vmatprep.subr.mxu0 0.0
    %1000 = vmatpush1.msra.mxu0 %v985
    %1001 = vmatprep.subr.mxu0 0.0
    %1002 = vmatpush1.msra.mxu0 %v986
    %1003 = vmatprep.subr.mxu0 0.0
    %1004 = vmatpush1.msra.mxu0 %v987
    %1005 = vmatprep.subr.mxu0 0.0
    %1006 = vmatpush1.msra.mxu0 %v988
    %1007 = vmatprep.subr.mxu0 0.0
    %1008 = vmatpush1.msra.mxu0 0.0
    %1009 = vmatprep.subr.mxu0 0.0
    %1010 = vmatpush1.msra.mxu0 0.0
    %1011 = vmatprep.subr.mxu0 0.0
    %1012 = vmatpush1.msra.mxu0 0.0
    %1013 = vmatprep.subr.mxu0 0.0
    %1014 = vmatpush1.msra.mxu0 0.0
    %1015 = vmatprep.subr.mxu0 0.0
    %1016 = vmatpush1.msra.mxu0 0.0
    %1017 = vmatprep.subr.mxu0 0.0
    %1018 = vmatpush1.msra.mxu0 0.0
    %1019 = vmatprep.subr.mxu0 0.0
    %1020 = vmatpush1.msra.mxu0 0.0
    %1021 = vmatprep.subr.mxu0 0.0
    %1022 = vmatpush1.msra.mxu0 0.0
    %1023 = vmatprep.subr.mxu0 0.0
    %1024 = vmatpush1.msra.mxu0 0.0
    %1025 = vmatprep.subr.mxu0 0.0
    %1026 = vmatpush1.msra.mxu0 0.0
    %1027 = vmatprep.subr.mxu0 0.0
    %1028 = vmatpush1.msra.mxu0 0.0
    %1029 = vmatprep.subr.mxu0 0.0
    %1030 = vmatpush1.msra.mxu0 0.0
    %1031 = vmatprep.subr.mxu0 0.0
    %1032 = vmatpush1.msra.mxu0 0.0
    %1033 = vmatprep.subr.mxu0 0.0
    %1034 = vmatpush1.msra.mxu0 0.0
    %1035 = vmatprep.subr.mxu0 0.0
    %1036 = vmatpush1.msra.mxu0 0.0
    %1037 = vmatprep.subr.mxu0 0.0
    %1038 = vmatpush1.msra.mxu0 0.0
    %1039 = vmatprep.subr.mxu0 0.0
    %1040 = vmatpush1.msra.mxu0 0.0
    %1041 = vmatprep.subr.mxu0 0.0
    %1042 = vmatpush1.msra.mxu0 0.0
    %1043 = vmatprep.subr.mxu0 0.0
    %1044 = vmatpush1.msra.mxu0 0.0
    %1045 = vmatprep.subr.mxu0 0.0
    %1046 = vmatpush1.msra.mxu0 0.0
    %1047 = vmatprep.subr.mxu0 0.0
    %1048 = vmatpush1.msra.mxu0 0.0
    %1049 = vmatprep.subr.mxu0 0.0
    %1050 = vmatpush1.msra.mxu0 0.0
    %1051 = vmatprep.subr.mxu0 0.0
    %1052 = vmatpush1.msra.mxu0 0.0
    %1053 = vmatprep.subr.mxu0 0.0
    %1054 = vmatpush1.msra.mxu0 0.0
    %1055 = vmatprep.subr.mxu0 0.0
    %1056 = vmatpush1.msra.mxu0 0.0
    %1057 = vmatprep.subr.mxu0 0.0
    %1058 = vmatpush1.msra.mxu0 0.0
    %1059 = vmatprep.subr.mxu0 0.0
    %1060 = vmatpush1.msra.mxu0 0.0
    %1061 = vmatprep.subr.mxu0 0.0
    %1062 = vmatpush1.msra.mxu0 0.0
    %1063 = vmatprep.mubr.f32.mxu0 0.0
    %1064 = vmatmul.mubr.f32.gmra.mrb[0].mxu0 %v44
    %v1065 = vpop.f32.mrb[0].mxu0
    %v1066 = vadd.f32 0.0, %v1065
    %v1067 = vpop.f32.mrb[0].mxu0
    %1068 = vdwg.mxu0
    %v1069 = vmul.f32 %v1066, 0.25
    %1070 = vmatprep.subr.mxu0 0.0
    %1071 = vmatpush1.msra.mxu0 %v990
    %1072 = vmatprep.subr.mxu0 0.0
    %1073 = vmatpush1.msra.mxu0 %v991
    %1074 = vmatprep.subr.mxu0 0.0
    %1075 = vmatpush1.msra.mxu0 %v992
    %1076 = vmatprep.subr.mxu0 0.0
    %1077 = vmatpush1.msra.mxu0 %v993
    %1078 = vmatprep.subr.mxu0 0.0
    %1079 = vmatpush1.msra.mxu0 0.0
    %1080 = vmatprep.subr.mxu0 0.0
    %1081 = vmatpush1.msra.mxu0 0.0
    %1082 = vmatprep.subr.mxu0 0.0
    %1083 = vmatpush1.msra.mxu0 0.0
    %1084 = vmatprep.subr.mxu0 0.0
    %1085 = vmatpush1.msra.mxu0 0.0
    %1086 = vmatprep.subr.mxu0 0.0
    %1087 = vmatpush1.msra.mxu0 0.0
    %1088 = vmatprep.subr.mxu0 0.0
    %1089 = vmatpush1.msra.mxu0 0.0
    %1090 = vmatprep.subr.mxu0 0.0
    %1091 = vmatpush1.msra.mxu0 0.0
    %1092 = vmatprep.subr.mxu0 0.0
    %1093 = vmatpush1.msra.mxu0 0.0
    %1094 = vmatprep.subr.mxu0 0.0
    %1095 = vmatpush1.msra.mxu0 0.0
    %1096 = vmatprep.subr.mxu0 0.0
    %1097 = vmatpush1.msra.mxu0 0.0
    %1098 = vmatprep.subr.mxu0 0.0
    %1099 = vmatpush1.msra.mxu0 0.0
    %1100 = vmatprep.subr.mxu0 0.0
    %1101 = vmatpush1.msra.mxu0 0.0
    %1102 = vmatprep.subr.mxu0 0.0
    %1103 = vmatpush1.msra.mxu0 0.0
    %1104 = vmatprep.subr.mxu0 0.0
    %1105 = vmatpush1.msra.mxu0 0.0
    %1106 = vmatprep.subr.mxu0 0.0
    %1107 = vmatpush1.msra.mxu0 0.0
    %1108 = vmatprep.subr.mxu0 0.0
    %1109 = vmatpush1.msra.mxu0 0.0
    %1110 = vmatprep.subr.mxu0 0.0
    %1111 = vmatpush1.msra.mxu0 0.0
    %1112 = vmatprep.subr.mxu0 0.0
    %1113 = vmatpush1.msra.mxu0 0.0
    %1114 = vmatprep.subr.mxu0 0.0
    %1115 = vmatpush1.msra.mxu0 0.0
    %1116 = vmatprep.subr.mxu0 0.0
    %1117 = vmatpush1.msra.mxu0 0.0
    %1118 = vmatprep.subr.mxu0 0.0
    %1119 = vmatpush1.msra.mxu0 0.0
    %1120 = vmatprep.subr.mxu0 0.0
    %1121 = vmatpush1.msra.mxu0 0.0
    %1122 = vmatprep.subr.mxu0 0.0
    %1123 = vmatpush1.msra.mxu0 0.0
    %1124 = vmatprep.subr.mxu0 0.0
    %1125 = vmatpush1.msra.mxu0 0.0
    %1126 = vmatprep.subr.mxu0 0.0
    %1127 = vmatpush1.msra.mxu0 0.0
    %1128 = vmatprep.subr.mxu0 0.0
    %1129 = vmatpush1.msra.mxu0 0.0
    %1130 = vmatprep.subr.mxu0 0.0
    %1131 = vmatpush1.msra.mxu0 0.0
    %1132 = vmatprep.subr.mxu0 0.0
    %1133 = vmatpush1.msra.mxu0 0.0
    %1134 = vmatprep.mubr.f32.mxu0 0.0
    %1135 = vmatmul.mubr.f32.gmra.mrb[0].mxu0 %v44
    %v1136 = vpop.f32.mrb[0].mxu0
    %v1137 = vadd.f32 0.0, %v1136
    %v1138 = vpop.f32.mrb[0].mxu0
    %1139 = vmatprep.mubr.f32.mxu0 0.0
    %1140 = vmatmul.mubr.f32.gmra.mrb[0].mxu0 %v118
    %v1141 = vpop.f32.mrb[0].mxu0
    %v1142 = vadd.f32 0.0, %v1141
    %v1143 = vpop.f32.mrb[0].mxu0
    %1144 = vdwg.mxu0
    %1145 = vmatprep.subr.mxu0 0.0
    %1146 = vmatpush1.msra.mxu0 %v995
    %1147 = vmatprep.subr.mxu0 0.0
    %1148 = vmatpush1.msra.mxu0 %v996
    %1149 = vmatprep.subr.mxu0 0.0
    %1150 = vmatpush1.msra.mxu0 %v997
    %1151 = vmatprep.subr.mxu0 0.0
    %1152 = vmatpush1.msra.mxu0 %v998
    %1153 = vmatprep.subr.mxu0 0.0
    %1154 = vmatpush1.msra.mxu0 0.0
    %1155 = vmatprep.subr.mxu0 0.0
    %1156 = vmatpush1.msra.mxu0 0.0
    %1157 = vmatprep.subr.mxu0 0.0
    %1158 = vmatpush1.msra.mxu0 0.0
    %1159 = vmatprep.subr.mxu0 0.0
    %1160 = vmatpush1.msra.mxu0 0.0
    %1161 = vmatprep.subr.mxu0 0.0
    %1162 = vmatpush1.msra.mxu0 0.0
    %1163 = vmatprep.subr.mxu0 0.0
    %1164 = vmatpush1.msra.mxu0 0.0
    %1165 = vmatprep.subr.mxu0 0.0
    %1166 = vmatpush1.msra.mxu0 0.0
    %1167 = vmatprep.subr.mxu0 0.0
    %1168 = vmatpush1.msra.mxu0 0.0
    %1169 = vmatprep.subr.mxu0 0.0
    %1170 = vmatpush1.msra.mxu0 0.0
    %1171 = vmatprep.subr.mxu0 0.0
    %1172 = vmatpush1.msra.mxu0 0.0
    %1173 = vmatprep.subr.mxu0 0.0
    %1174 = vmatpush1.msra.mxu0 0.0
    %1175 = vmatprep.subr.mxu0 0.0
    %1176 = vmatpush1.msra.mxu0 0.0
    %1177 = vmatprep.subr.mxu0 0.0
    %1178 = vmatpush1.msra.mxu0 0.0
    %1179 = vmatprep.subr.mxu0 0.0
    %1180 = vmatpush1.msra.mxu0 0.0
    %1181 = vmatprep.subr.mxu0 0.0
    %1182 = vmatpush1.msra.mxu0 0.0
    %1183 = vmatprep.subr.mxu0 0.0
    %1184 = vmatpush1.msra.mxu0 0.0
    %1185 = vmatprep.subr.mxu0 0.0
    %1186 = vmatpush1.msra.mxu0 0.0
    %1187 = vmatprep.subr.mxu0 0.0
    %1188 = vmatpush1.msra.mxu0 0.0
    %1189 = vmatprep.subr.mxu0 0.0
    %1190 = vmatpush1.msra.mxu0 0.0
    %1191 = vmatprep.subr.mxu0 0.0
    %1192 = vmatpush1.msra.mxu0 0.0
    %1193 = vmatprep.subr.mxu0 0.0
    %1194 = vmatpush1.msra.mxu0 0.0
    %1195 = vmatprep.subr.mxu0 0.0
    %1196 = vmatpush1.msra.mxu0 0.0
    %1197 = vmatprep.subr.mxu0 0.0
    %1198 = vmatpush1.msra.mxu0 0.0
    %1199 = vmatprep.subr.mxu0 0.0
    %1200 = vmatpush1.msra.mxu0 0.0
    %1201 = vmatprep.subr.mxu0 0.0
    %1202 = vmatpush1.msra.mxu0 0.0
    %1203 = vmatprep.subr.mxu0 0.0
    %1204 = vmatpush1.msra.mxu0 0.0
    %1205 = vmatprep.subr.mxu0 0.0
    %1206 = vmatpush1.msra.mxu0 0.0
    %1207 = vmatprep.subr.mxu0 0.0
    %1208 = vmatpush1.msra.mxu0 0.0
    %1209 = vmatprep.mubr.f32.mxu0 0.0
    %1210 = vmatmul.mubr.f32.gmra.mrb[0].mxu0 %v44
    %v1211 = vpop.f32.mrb[0].mxu0
    %v1212 = vadd.f32 0.0, %v1211
    %v1213 = vpop.f32.mrb[0].mxu0
    %1214 = vmatprep.mubr.f32.mxu0 0.0
    %1215 = vmatmul.mubr.f32.gmra.mrb[0].mxu0 %v118
    %v1216 = vpop.f32.mrb[0].mxu0
    %v1217 = vadd.f32 0.0, %v1216
    %v1218 = vpop.f32.mrb[0].mxu0
    %1219 = vdwg.mxu0
    %v1221 = vsel %vm270, %v1069, 0
    %v1224 = vsel %vm270, %v1137, 0
    %v1227 = vsel %vm270, %v1142, 0
    %1229 = vmatprep.subr.mxu0 0.0
    %1230 = vmatpush1.xpose.msra.mxu0 %v1224
    %1231 = vmatprep.subr.mxu0 0.0
    %1232 = vmatpush1.xpose.msra.mxu0 %v1227
    %1233 = vmatprep.subr.mxu0 0.0
    %1234 = vmatpush1.xpose.msra.mxu0 0.0
    %1235 = vmatprep.subr.mxu0 0.0
    %1236 = vmatpush1.xpose.msra.mxu0 0.0
    %1237 = vmatprep.subr.mxu0 0.0
    %1238 = vmatpush1.xpose.msra.mxu0 0.0
    %1239 = vmatprep.subr.mxu0 0.0
    %1240 = vmatpush1.xpose.msra.mxu0 0.0
    %1241 = vmatprep.subr.mxu0 0.0
    %1242 = vmatpush1.xpose.msra.mxu0 0.0
    %1243 = vmatprep.subr.mxu0 0.0
    %1244 = vmatpush1.xpose.msra.mxu0 0.0
    %1245 = vmatprep.subr.mxu0 0.0
    %1246 = vmatpush1.xpose.msra.mxu0 0.0
    %1247 = vmatprep.subr.mxu0 0.0
    %1248 = vmatpush1.xpose.msra.mxu0 0.0
    %1249 = vmatprep.subr.mxu0 0.0
    %1250 = vmatpush1.xpose.msra.mxu0 0.0
    %1251 = vmatprep.subr.mxu0 0.0
    %1252 = vmatpush1.xpose.msra.mxu0 0.0
    %1253 = vmatprep.subr.mxu0 0.0
    %1254 = vmatpush1.xpose.msra.mxu0 0.0
    %1255 = vmatprep.subr.mxu0 0.0
    %1256 = vmatpush1.xpose.msra.mxu0 0.0
    %1257 = vmatprep.subr.mxu0 0.0
    %1258 = vmatpush1.xpose.msra.mxu0 0.0
    %1259 = vmatprep.subr.mxu0 0.0
    %1260 = vmatpush1.xpose.msra.mxu0 0.0
    %1261 = vmatprep.subr.mxu0 0.0
    %1262 = vmatpush1.xpose.msra.mxu0 0.0
    %1263 = vmatprep.subr.mxu0 0.0
    %1264 = vmatpush1.xpose.msra.mxu0 0.0
    %1265 = vmatprep.subr.mxu0 0.0
    %1266 = vmatpush1.xpose.msra.mxu0 0.0
    %1267 = vmatprep.subr.mxu0 0.0
    %1268 = vmatpush1.xpose.msra.mxu0 0.0
    %1269 = vmatprep.subr.mxu0 0.0
    %1270 = vmatpush1.xpose.msra.mxu0 0.0
    %1271 = vmatprep.subr.mxu0 0.0
    %1272 = vmatpush1.xpose.msra.mxu0 0.0
    %1273 = vmatprep.subr.mxu0 0.0
    %1274 = vmatpush1.xpose.msra.mxu0 0.0
    %1275 = vmatprep.subr.mxu0 0.0
    %1276 = vmatpush1.xpose.msra.mxu0 0.0
    %1277 = vmatprep.subr.mxu0 0.0
    %1278 = vmatpush1.xpose.msra.mxu0 0.0
    %1279 = vmatprep.subr.mxu0 0.0
    %1280 = vmatpush1.xpose.msra.mxu0 0.0
    %1281 = vmatprep.subr.mxu0 0.0
    %1282 = vmatpush1.xpose.msra.mxu0 0.0
    %1283 = vmatprep.subr.mxu0 0.0
    %1284 = vmatpush1.xpose.msra.mxu0 0.0
    %1285 = vmatprep.subr.mxu0 0.0
    %1286 = vmatpush1.xpose.msra.mxu0 0.0
    %1287 = vmatprep.subr.mxu0 0.0
    %1288 = vmatpush1.xpose.msra.mxu0 0.0
    %1289 = vmatprep.subr.mxu0 0.0
    %1290 = vmatpush1.xpose.msra.mxu0 0.0
    %1291 = vmatprep.subr.mxu0 0.0
    %1292 = vmatpush1.xpose.msra.mxu0 0.0
    %1293 = vmatprep.mubr.f32.mxu0 0.0
    %1294 = vmatmul.mubr.f32.gmra.mrb[0].mxu0 %v1221
    %v1295 = vpop.f32.mrb[0].mxu0
    %v1296 = vadd.f32 0.0, %v1295
    %v1297 = vpop.f32.mrb[0].mxu0
    %1298 = vdwg.mxu0
    %v1299 = vsel %vm270, %v1296, -inf
    %1300 = vmax.xlane.f32.xlu0 %v1299
    %v1301 = vpop.xlane.xlu0 %1300
    %v1302 = vsub.f32 %v1296, %v1301
    %v1303 = vmul.f32 %v1302, 1.442695
    %v1304 = vpow.pop %v1303
    %v1305 = vsel %vm270, %v1304, 0.0
    %1306 = vadd.xlane.f32.xlu0 %v1305
    %v1307 = vpop.xlane.xlu0 %1306
    %v1308 = vrcp.pop %v1307
    %v1309 = vmul.f32 %v1304, %v1308
    %v1311 = vsel %vm270, %v1309, 0
    %1313 = vmatprep.subr.mxu0 0.0
    %1314 = vmatpush1.msra.mxu0 %v1212
    %1315 = vmatprep.subr.mxu0 0.0
    %1316 = vmatpush1.msra.mxu0 %v1217
    %1317 = vmatprep.subr.mxu0 0.0
    %1318 = vmatpush1.msra.mxu0 0.0
    %1319 = vmatprep.subr.mxu0 0.0
    %1320 = vmatpush1.msra.mxu0 0.0
    %1321 = vmatprep.subr.mxu0 0.0
    %1322 = vmatpush1.msra.mxu0 0.0
    %1323 = vmatprep.subr.mxu0 0.0
    %1324 = vmatpush1.msra.mxu0 0.0
    %1325 = vmatprep.subr.mxu0 0.0
    %1326 = vmatpush1.msra.mxu0 0.0
    %1327 = vmatprep.subr.mxu0 0.0
    %1328 = vmatpush1.msra.mxu0 0.0
    %1329 = vmatprep.subr.mxu0 0.0
    %1330 = vmatpush1.msra.mxu0 0.0
    %1331 = vmatprep.subr.mxu0 0.0
    %1332 = vmatpush1.msra.mxu0 0.0
    %1333 = vmatprep.subr.mxu0 0.0
    %1334 = vmatpush1.msra.mxu0 0.0
    %1335 = vmatprep.subr.mxu0 0.0
    %1336 = vmatpush1.msra.mxu0 0.0
    %1337 = vmatprep.subr.mxu0 0.0
    %1338 = vmatpush1.msra.mxu0 0.0
    %1339 = vmatprep.subr.mxu0 0.0
    %1340 = vmatpush1.msra.mxu0 0.0
    %1341 = vmatprep.subr.mxu0 0.0
    %1342 = vmatpush1.msra.mxu0 0.0
    %1343 = vmatprep.subr.mxu0 0.0
    %1344 = vmatpush1.msra.mxu0 0.0
    %1345 = vmatprep.subr.mxu0 0.0
    %1346 = vmatpush1.msra.mxu0 0.0
    %1347 = vmatprep.subr.mxu0 0.0
    %1348 = vmatpush1.msra.mxu0 0.0
    %1349 = vmatprep.subr.mxu0 0.0
    %1350 = vmatpush1.msra.mxu0 0.0
    %1351 = vmatprep.subr.mxu0 0.0
    %1352 = vmatpush1.msra.mxu0 0.0
    %1353 = vmatprep.subr.mxu0 0.0
    %1354 = vmatpush1.msra.mxu0 0.0
    %1355 = vmatprep.subr.mxu0 0.0
    %1356 = vmatpush1.msra.mxu0 0.0
    %1357 = vmatprep.subr.mxu0 0.0
    %1358 = vmatpush1.msra.mxu0 0.0
    %1359 = vmatprep.subr.mxu0 0.0
    %1360 = vmatpush1.msra.mxu0 0.0
    %1361 = vmatprep.subr.mxu0 0.0
    %1362 = vmatpush1.msra.mxu0 0.0
    %1363 = vmatprep.subr.mxu0 0.0
    %1364 = vmatpush1.msra.mxu0 0.0
    %1365 = vmatprep.subr.mxu0 0.0
    %1366 = vmatpush1.msra.mxu0 0.0
    %1367 = vmatprep.subr.mxu0 0.0
    %1368 = vmatpush1.msra.mxu0 0.0
    %1369 = vmatprep.subr.mxu0 0.0
    %1370 = vmatpush1.msra.mxu0 0.0
    %1371 = vmatprep.subr.mxu0 0.0
    %1372 = vmatpush1.msra.mxu0 0.0
    %1373 = vmatprep.subr.mxu0 0.0
    %1374 = vmatpush1.msra.mxu0 0.0
    %1375 = vmatprep.subr.mxu0 0.0
    %1376 = vmatpush1.msra.mxu0 0.0
    %1377 = vmatprep.mubr.f32.mxu0 0.0
    %1378 = vmatmul.mubr.f32.gmra.mrb[0].mxu0 %v1311
    %v1379 = vpop.f32.mrb[0].mxu0
    %v1380 = vadd.f32 0.0, %v1379
    %v1381 = vpop.f32.mrb[0].mxu0
    %1382 = vdwg.mxu0
    %s1383 = scalar_lea.vmem %s5, 32
    %v1384 = vld [vmem:[%s1383] sm:$0xff]
    %v1385 = vld [vmem:[%s1383 + $0x8] sm:$0xff]
    %v1387 = vsel %vm270, %v1380, 0
    %1389 = vmatprep.subr.mxu0 0.0
    %1390 = vmatpush1.msra.mxu0 %v1384
    %1391 = vmatprep.subr.mxu0 0.0
    %1392 = vmatpush1.msra.mxu0 %v1385
    %1393 = vmatprep.subr.mxu0 0.0
    %1394 = vmatpush1.msra.mxu0 0.0
    %1395 = vmatprep.subr.mxu0 0.0
    %1396 = vmatpush1.msra.mxu0 0.0
    %1397 = vmatprep.subr.mxu0 0.0
    %1398 = vmatpush1.msra.mxu0 0.0
    %1399 = vmatprep.subr.mxu0 0.0
    %1400 = vmatpush1.msra.mxu0 0.0
    %1401 = vmatprep.subr.mxu0 0.0
    %1402 = vmatpush1.msra.mxu0 0.0
    %1403 = vmatprep.subr.mxu0 0.0
    %1404 = vmatpush1.msra.mxu0 0.0
    %1405 = vmatprep.subr.mxu0 0.0
    %1406 = vmatpush1.msra.mxu0 0.0
    %1407 = vmatprep.subr.mxu0 0.0
    %1408 = vmatpush1.msra.mxu0 0.0
    %1409 = vmatprep.subr.mxu0 0.0
    %1410 = vmatpush1.msra.mxu0 0.0
    %1411 = vmatprep.subr.mxu0 0.0
    %1412 = vmatpush1.msra.mxu0 0.0
    %1413 = vmatprep.subr.mxu0 0.0
    %1414 = vmatpush1.msra.mxu0 0.0
    %1415 = vmatprep.subr.mxu0 0.0
    %1416 = vmatpush1.msra.mxu0 0.0
    %1417 = vmatprep.subr.mxu0 0.0
    %1418 = vmatpush1.msra.mxu0 0.0
    %1419 = vmatprep.subr.mxu0 0.0
    %1420 = vmatpush1.msra.mxu0 0.0
    %1421 = vmatprep.subr.mxu0 0.0
    %1422 = vmatpush1.msra.mxu0 0.0
    %1423 = vmatprep.subr.mxu0 0.0
    %1424 = vmatpush1.msra.mxu0 0.0
    %1425 = vmatprep.subr.mxu0 0.0
    %1426 = vmatpush1.msra.mxu0 0.0
    %1427 = vmatprep.subr.mxu0 0.0
    %1428 = vmatpush1.msra.mxu0 0.0
    %1429 = vmatprep.subr.mxu0 0.0
    %1430 = vmatpush1.msra.mxu0 0.0
    %1431 = vmatprep.subr.mxu0 0.0
    %1432 = vmatpush1.msra.mxu0 0.0
    %1433 = vmatprep.subr.mxu0 0.0
    %1434 = vmatpush1.msra.mxu0 0.0
    %1435 = vmatprep.subr.mxu0 0.0
    %1436 = vmatpush1.msra.mxu0 0.0
    %1437 = vmatprep.subr.mxu0 0.0
    %1438 = vmatpush1.msra.mxu0 0.0
    %1439 = vmatprep.subr.mxu0 0.0
    %1440 = vmatpush1.msra.mxu0 0.0
    %1441 = vmatprep.subr.mxu0 0.0
    %1442 = vmatpush1.msra.mxu0 0.0
    %1443 = vmatprep.subr.mxu0 0.0
    %1444 = vmatpush1.msra.mxu0 0.0
    %1445 = vmatprep.subr.mxu0 0.0
    %1446 = vmatpush1.msra.mxu0 0.0
    %1447 = vmatprep.subr.mxu0 0.0
    %1448 = vmatpush1.msra.mxu0 0.0
    %1449 = vmatprep.subr.mxu0 0.0
    %1450 = vmatpush1.msra.mxu0 0.0
    %1451 = vmatprep.subr.mxu0 0.0
    %1452 = vmatpush1.msra.mxu0 0.0
    %1453 = vmatprep.mubr.f32.mxu0 0.0
    %1454 = vmatmul.mubr.f32.gmra.mrb[0].mxu0 %v1387
    %v1455 = vpop.f32.mrb[0].mxu0
    %v1456 = vadd.f32 0.0, %v1455
    %v1457 = vpop.f32.mrb[0].mxu0
    %1458 = vdwg.mxu0
    %v1459 = vadd.f32 %v981, %v1456
    %s1460 = scalar_lea.vmem %s2, 96
    %v1461 = vld [vmem:[%s1460] sm:$0xff]
    %v1462 = vld [vmem:[%s1460 + $0x8] sm:$0xff]
    %v1463 = vld [vmem:[%s1460 + $0x10] sm:$0xff]
    %v1464 = vld [vmem:[%s1460 + $0x18] sm:$0xff]
    %s1465 = scalar_lea.vmem %s3, 96
    %v1466 = vld [vmem:[%s1465] sm:$0xff]
    %v1467 = vld [vmem:[%s1465 + $0x8] sm:$0xff]
    %v1468 = vld [vmem:[%s1465 + $0x10] sm:$0xff]
    %v1469 = vld [vmem:[%s1465 + $0x18] sm:$0xff]
    %s1470 = scalar_lea.vmem %s4, 96
    %v1471 = vld [vmem:[%s1470] sm:$0xff]
    %v1472 = vld [vmem:[%s1470 + $0x8] sm:$0xff]
    %v1473 = vld [vmem:[%s1470 + $0x10] sm:$0xff]
    %v1474 = vld [vmem:[%s1470 + $0x18] sm:$0xff]
    %1475 = vmatprep.subr.mxu0 0.0
    %1476 = vmatpush1.msra.mxu0 %v1461
    %1477 = vmatprep.subr.mxu0 0.0
    %1478 = vmatpush1.msra.mxu0 %v1462
    %1479 = vmatprep.subr.mxu0 0.0
    %1480 = vmatpush1.msra.mxu0 %v1463
    %1481 = vmatprep.subr.mxu0 0.0
    %1482 = vmatpush1.msra.mxu0 %v1464
    %1483 = vmatprep.subr.mxu0 0.0
    %1484 = vmatpush1.msra.mxu0 0.0
    %1485 = vmatprep.subr.mxu0 0.0
    %1486 = vmatpush1.msra.mxu0 0.0
    %1487 = vmatprep.subr.mxu0 0.0
    %1488 = vmatpush1.msra.mxu0 0.0
    %1489 = vmatprep.subr.mxu0 0.0
    %1490 = vmatpush1.msra.mxu0 0.0
    %1491 = vmatprep.subr.mxu0 0.0
    %1492 = vmatpush1.msra.mxu0 0.0
    %1493 = vmatprep.subr.mxu0 0.0
    %1494 = vmatpush1.msra.mxu0 0.0
    %1495 = vmatprep.subr.mxu0 0.0
    %1496 = vmatpush1.msra.mxu0 0.0
    %1497 = vmatprep.subr.mxu0 0.0
    %1498 = vmatpush1.msra.mxu0 0.0
    %1499 = vmatprep.subr.mxu0 0.0
    %1500 = vmatpush1.msra.mxu0 0.0
    %1501 = vmatprep.subr.mxu0 0.0
    %1502 = vmatpush1.msra.mxu0 0.0
    %1503 = vmatprep.subr.mxu0 0.0
    %1504 = vmatpush1.msra.mxu0 0.0
    %1505 = vmatprep.subr.mxu0 0.0
    %1506 = vmatpush1.msra.mxu0 0.0
    %1507 = vmatprep.subr.mxu0 0.0
    %1508 = vmatpush1.msra.mxu0 0.0
    %1509 = vmatprep.subr.mxu0 0.0
    %1510 = vmatpush1.msra.mxu0 0.0
    %1511 = vmatprep.subr.mxu0 0.0
    %1512 = vmatpush1.msra.mxu0 0.0
    %1513 = vmatprep.subr.mxu0 0.0
    %1514 = vmatpush1.msra.mxu0 0.0
    %1515 = vmatprep.subr.mxu0 0.0
    %1516 = vmatpush1.msra.mxu0 0.0
    %1517 = vmatprep.subr.mxu0 0.0
    %1518 = vmatpush1.msra.mxu0 0.0
    %1519 = vmatprep.subr.mxu0 0.0
    %1520 = vmatpush1.msra.mxu0 0.0
    %1521 = vmatprep.subr.mxu0 0.0
    %1522 = vmatpush1.msra.mxu0 0.0
    %1523 = vmatprep.subr.mxu0 0.0
    %1524 = vmatpush1.msra.mxu0 0.0
    %1525 = vmatprep.subr.mxu0 0.0
    %1526 = vmatpush1.msra.mxu0 0.0
    %1527 = vmatprep.subr.mxu0 0.0
    %1528 = vmatpush1.msra.mxu0 0.0
    %1529 = vmatprep.subr.mxu0 0.0
    %1530 = vmatpush1.msra.mxu0 0.0
    %1531 = vmatprep.subr.mxu0 0.0
    %1532 = vmatpush1.msra.mxu0 0.0
    %1533 = vmatprep.subr.mxu0 0.0
    %1534 = vmatpush1.msra.mxu0 0.0
    %1535 = vmatprep.subr.mxu0 0.0
    %1536 = vmatpush1.msra.mxu0 0.0
    %1537 = vmatprep.subr.mxu0 0.0
    %1538 = vmatpush1.msra.mxu0 0.0
    %1539 = vmatprep.mubr.f32.mxu0 0.0
    %1540 = vmatmul.mubr.f32.gmra.mrb[0].mxu0 %v44
    %v1541 = vpop.f32.mrb[0].mxu0
    %v1542 = vadd.f32 0.0, %v1541
    %v1543 = vpop.f32.mrb[0].mxu0
    %1544 = vdwg.mxu0
    %v1545 = vmul.f32 %v1542, 0.25
    %1546 = vmatprep.subr.mxu0 0.0
    %1547 = vmatpush1.msra.mxu0 %v1466
    %1548 = vmatprep.subr.mxu0 0.0
    %1549 = vmatpush1.msra.mxu0 %v1467
    %1550 = vmatprep.subr.mxu0 0.0
    %1551 = vmatpush1.msra.mxu0 %v1468
    %1552 = vmatprep.subr.mxu0 0.0
    %1553 = vmatpush1.msra.mxu0 %v1469
    %1554 = vmatprep.subr.mxu0 0.0
    %1555 = vmatpush1.msra.mxu0 0.0
    %1556 = vmatprep.subr.mxu0 0.0
    %1557 = vmatpush1.msra.mxu0 0.0
    %1558 = vmatprep.subr.mxu0 0.0
    %1559 = vmatpush1.msra.mxu0 0.0
    %1560 = vmatprep.subr.mxu0 0.0
    %1561 = vmatpush1.msra.mxu0 0.0
    %1562 = vmatprep.subr.mxu0 0.0
    %1563 = vmatpush1.msra.mxu0 0.0
    %1564 = vmatprep.subr.mxu0 0.0
    %1565 = vmatpush1.msra.mxu0 0.0
    %1566 = vmatprep.subr.mxu0 0.0
    %1567 = vmatpush1.msra.mxu0 0.0
    %1568 = vmatprep.subr.mxu0 0.0
    %1569 = vmatpush1.msra.mxu0 0.0
    %1570 = vmatprep.subr.mxu0 0.0
    %1571 = vmatpush1.msra.mxu0 0.0
    %1572 = vmatprep.subr.mxu0 0.0
    %1573 = vmatpush1.msra.mxu0 0.0
    %1574 = vmatprep.subr.mxu0 0.0
    %1575 = vmatpush1.msra.mxu0 0.0
    %1576 = vmatprep.subr.mxu0 0.0
    %1577 = vmatpush1.msra.mxu0 0.0
    %1578 = vmatprep.subr.mxu0 0.0
    %1579 = vmatpush1.msra.mxu0 0.0
    %1580 = vmatprep.subr.mxu0 0.0
    %1581 = vmatpush1.msra.mxu0 0.0
    %1582 = vmatprep.subr.mxu0 0.0
    %1583 = vmatpush1.msra.mxu0 0.0
    %1584 = vmatprep.subr.mxu0 0.0
    %1585 = vmatpush1.msra.mxu0 0.0
    %1586 = vmatprep.subr.mxu0 0.0
    %1587 = vmatpush1.msra.mxu0 0.0
    %1588 = vmatprep.subr.mxu0 0.0
    %1589 = vmatpush1.msra.mxu0 0.0
    %1590 = vmatprep.subr.mxu0 0.0
    %1591 = vmatpush1.msra.mxu0 0.0
    %1592 = vmatprep.subr.mxu0 0.0
    %1593 = vmatpush1.msra.mxu0 0.0
    %1594 = vmatprep.subr.mxu0 0.0
    %1595 = vmatpush1.msra.mxu0 0.0
    %1596 = vmatprep.subr.mxu0 0.0
    %1597 = vmatpush1.msra.mxu0 0.0
    %1598 = vmatprep.subr.mxu0 0.0
    %1599 = vmatpush1.msra.mxu0 0.0
    %1600 = vmatprep.subr.mxu0 0.0
    %1601 = vmatpush1.msra.mxu0 0.0
    %1602 = vmatprep.subr.mxu0 0.0
    %1603 = vmatpush1.msra.mxu0 0.0
    %1604 = vmatprep.subr.mxu0 0.0
    %1605 = vmatpush1.msra.mxu0 0.0
    %1606 = vmatprep.subr.mxu0 0.0
    %1607 = vmatpush1.msra.mxu0 0.0
    %1608 = vmatprep.subr.mxu0 0.0
    %1609 = vmatpush1.msra.mxu0 0.0
    %1610 = vmatprep.mubr.f32.mxu0 0.0
    %1611 = vmatmul.mubr.f32.gmra.mrb[0].mxu0 %v44
    %v1612 = vpop.f32.mrb[0].mxu0
    %v1613 = vadd.f32 0.0, %v1612
    %v1614 = vpop.f32.mrb[0].mxu0
    %1615 = vmatprep.mubr.f32.mxu0 0.0
    %1616 = vmatmul.mubr.f32.gmra.mrb[0].mxu0 %v118
    %v1617 = vpop.f32.mrb[0].mxu0
    %v1618 = vadd.f32 0.0, %v1617
    %v1619 = vpop.f32.mrb[0].mxu0
    %1620 = vdwg.mxu0
    %1621 = vmatprep.subr.mxu0 0.0
    %1622 = vmatpush1.msra.mxu0 %v1471
    %1623 = vmatprep.subr.mxu0 0.0
    %1624 = vmatpush1.msra.mxu0 %v1472
    %1625 = vmatprep.subr.mxu0 0.0
    %1626 = vmatpush1.msra.mxu0 %v1473
    %1627 = vmatprep.subr.mxu0 0.0
    %1628 = vmatpush1.msra.mxu0 %v1474
    %1629 = vmatprep.subr.mxu0 0.0
    %1630 = vmatpush1.msra.mxu0 0.0
    %1631 = vmatprep.subr.mxu0 0.0
    %1632 = vmatpush1.msra.mxu0 0.0
    %1633 = vmatprep.subr.mxu0 0.0
    %1634 = vmatpush1.msra.mxu0 0.0
    %1635 = vmatprep.subr.mxu0 0.0
    %1636 = vmatpush1.msra.mxu0 0.0
    %1637 = vmatprep.subr.mxu0 0.0
    %1638 = vmatpush1.msra.mxu0 0.0
    %1639 = vmatprep.subr.mxu0 0.0
    %1640 = vmatpush1.msra.mxu0 0.0
    %1641 = vmatprep.subr.mxu0 0.0
    %1642 = vmatpush1.msra.mxu0 0.0
    %1643 = vmatprep.subr.mxu0 0.0
    %1644 = vmatpush1.msra.mxu0 0.0
    %1645 = vmatprep.subr.mxu0 0.0
    %1646 = vmatpush1.msra.mxu0 0.0
    %1647 = vmatprep.subr.mxu0 0.0
    %1648 = vmatpush1.msra.mxu0 0.0
    %1649 = vmatprep.subr.mxu0 0.0
    %1650 = vmatpush1.msra.mxu0 0.0
    %1651 = vmatprep.subr.mxu0 0.0
    %1652 = vmatpush1.msra.mxu0 0.0
    %1653 = vmatprep.subr.mxu0 0.0
    %1654 = vmatpush1.msra.mxu0 0.0
    %1655 = vmatprep.subr.mxu0 0.0
    %1656 = vmatpush1.msra.mxu0 0.0
    %1657 = vmatprep.subr.mxu0 0.0
    %1658 = vmatpush1.msra.mxu0 0.0
    %1659 = vmatprep.subr.mxu0 0.0
    %1660 = vmatpush1.msra.mxu0 0.0
    %1661 = vmatprep.subr.mxu0 0.0
    %1662 = vmatpush1.msra.mxu0 0.0
    %1663 = vmatprep.subr.mxu0 0.0
    %1664 = vmatpush1.msra.mxu0 0.0
    %1665 = vmatprep.subr.mxu0 0.0
    %1666 = vmatpush1.msra.mxu0 0.0
    %1667 = vmatprep.subr.mxu0 0.0
    %1668 = vmatpush1.msra.mxu0 0.0
    %1669 = vmatprep.subr.mxu0 0.0
    %1670 = vmatpush1.msra.mxu0 0.0
    %1671 = vmatprep.subr.mxu0 0.0
    %1672 = vmatpush1.msra.mxu0 0.0
    %1673 = vmatprep.subr.mxu0 0.0
    %1674 = vmatpush1.msra.mxu0 0.0
    %1675 = vmatprep.subr.mxu0 0.0
    %1676 = vmatpush1.msra.mxu0 0.0
    %1677 = vmatprep.subr.mxu0 0.0
    %1678 = vmatpush1.msra.mxu0 0.0
    %1679 = vmatprep.subr.mxu0 0.0
    %1680 = vmatpush1.msra.mxu0 0.0
    %1681 = vmatprep.subr.mxu0 0.0
    %1682 = vmatpush1.msra.mxu0 0.0
    %1683 = vmatprep.subr.mxu0 0.0
    %1684 = vmatpush1.msra.mxu0 0.0
    %1685 = vmatprep.mubr.f32.mxu0 0.0
    %1686 = vmatmul.mubr.f32.gmra.mrb[0].mxu0 %v44
    %v1687 = vpop.f32.mrb[0].mxu0
    %v1688 = vadd.f32 0.0, %v1687
    %v1689 = vpop.f32.mrb[0].mxu0
    %1690 = vmatprep.mubr.f32.mxu0 0.0
    %1691 = vmatmul.mubr.f32.gmra.mrb[0].mxu0 %v118
    %v1692 = vpop.f32.mrb[0].mxu0
    %v1693 = vadd.f32 0.0, %v1692
    %v1694 = vpop.f32.mrb[0].mxu0
    %1695 = vdwg.mxu0
    %v1697 = vsel %vm270, %v1545, 0
    %v1700 = vsel %vm270, %v1613, 0
    %v1703 = vsel %vm270, %v1618, 0
    %1705 = vmatprep.subr.mxu0 0.0
    %1706 = vmatpush1.xpose.msra.mxu0 %v1700
    %1707 = vmatprep.subr.mxu0 0.0
    %1708 = vmatpush1.xpose.msra.mxu0 %v1703
    %1709 = vmatprep.subr.mxu0 0.0
    %1710 = vmatpush1.xpose.msra.mxu0 0.0
    %1711 = vmatprep.subr.mxu0 0.0
    %1712 = vmatpush1.xpose.msra.mxu0 0.0
    %1713 = vmatprep.subr.mxu0 0.0
    %1714 = vmatpush1.xpose.msra.mxu0 0.0
    %1715 = vmatprep.subr.mxu0 0.0
    %1716 = vmatpush1.xpose.msra.mxu0 0.0
    %1717 = vmatprep.subr.mxu0 0.0
    %1718 = vmatpush1.xpose.msra.mxu0 0.0
    %1719 = vmatprep.subr.mxu0 0.0
    %1720 = vmatpush1.xpose.msra.mxu0 0.0
    %1721 = vmatprep.subr.mxu0 0.0
    %1722 = vmatpush1.xpose.msra.mxu0 0.0
    %1723 = vmatprep.subr.mxu0 0.0
    %1724 = vmatpush1.xpose.msra.mxu0 0.0
    %1725 = vmatprep.subr.mxu0 0.0
    %1726 = vmatpush1.xpose.msra.mxu0 0.0
    %1727 = vmatprep.subr.mxu0 0.0
    %1728 = vmatpush1.xpose.msra.mxu0 0.0
    %1729 = vmatprep.subr.mxu0 0.0
    %1730 = vmatpush1.xpose.msra.mxu0 0.0
    %1731 = vmatprep.subr.mxu0 0.0
    %1732 = vmatpush1.xpose.msra.mxu0 0.0
    %1733 = vmatprep.subr.mxu0 0.0
    %1734 = vmatpush1.xpose.msra.mxu0 0.0
    %1735 = vmatprep.subr.mxu0 0.0
    %1736 = vmatpush1.xpose.msra.mxu0 0.0
    %1737 = vmatprep.subr.mxu0 0.0
    %1738 = vmatpush1.xpose.msra.mxu0 0.0
    %1739 = vmatprep.subr.mxu0 0.0
    %1740 = vmatpush1.xpose.msra.mxu0 0.0
    %1741 = vmatprep.subr.mxu0 0.0
    %1742 = vmatpush1.xpose.msra.mxu0 0.0
    %1743 = vmatprep.subr.mxu0 0.0
    %1744 = vmatpush1.xpose.msra.mxu0 0.0
    %1745 = vmatprep.subr.mxu0 0.0
    %1746 = vmatpush1.xpose.msra.mxu0 0.0
    %1747 = vmatprep.subr.mxu0 0.0
    %1748 = vmatpush1.xpose.msra.mxu0 0.0
    %1749 = vmatprep.subr.mxu0 0.0
    %1750 = vmatpush1.xpose.msra.mxu0 0.0
    %1751 = vmatprep.subr.mxu0 0.0
    %1752 = vmatpush1.xpose.msra.mxu0 0.0
    %1753 = vmatprep.subr.mxu0 0.0
    %1754 = vmatpush1.xpose.msra.mxu0 0.0
    %1755 = vmatprep.subr.mxu0 0.0
    %1756 = vmatpush1.xpose.msra.mxu0 0.0
    %1757 = vmatprep.subr.mxu0 0.0
    %1758 = vmatpush1.xpose.msra.mxu0 0.0
    %1759 = vmatprep.subr.mxu0 0.0
    %1760 = vmatpush1.xpose.msra.mxu0 0.0
    %1761 = vmatprep.subr.mxu0 0.0
    %1762 = vmatpush1.xpose.msra.mxu0 0.0
    %1763 = vmatprep.subr.mxu0 0.0
    %1764 = vmatpush1.xpose.msra.mxu0 0.0
    %1765 = vmatprep.subr.mxu0 0.0
    %1766 = vmatpush1.xpose.msra.mxu0 0.0
    %1767 = vmatprep.subr.mxu0 0.0
    %1768 = vmatpush1.xpose.msra.mxu0 0.0
    %1769 = vmatprep.mubr.f32.mxu0 0.0
    %1770 = vmatmul.mubr.f32.gmra.mrb[0].mxu0 %v1697
    %v1771 = vpop.f32.mrb[0].mxu0
    %v1772 = vadd.f32 0.0, %v1771
    %v1773 = vpop.f32.mrb[0].mxu0
    %1774 = vdwg.mxu0
    %v1775 = vsel %vm270, %v1772, -inf
    %1776 = vmax.xlane.f32.xlu0 %v1775
    %v1777 = vpop.xlane.xlu0 %1776
    %v1778 = vsub.f32 %v1772, %v1777
    %v1779 = vmul.f32 %v1778, 1.442695
    %v1780 = vpow.pop %v1779
    %v1781 = vsel %vm270, %v1780, 0.0
    %1782 = vadd.xlane.f32.xlu0 %v1781
    %v1783 = vpop.xlane.xlu0 %1782
    %v1784 = vrcp.pop %v1783
    %v1785 = vmul.f32 %v1780, %v1784
    %v1787 = vsel %vm270, %v1785, 0
    %1789 = vmatprep.subr.mxu0 0.0
    %1790 = vmatpush1.msra.mxu0 %v1688
    %1791 = vmatprep.subr.mxu0 0.0
    %1792 = vmatpush1.msra.mxu0 %v1693
    %1793 = vmatprep.subr.mxu0 0.0
    %1794 = vmatpush1.msra.mxu0 0.0
    %1795 = vmatprep.subr.mxu0 0.0
    %1796 = vmatpush1.msra.mxu0 0.0
    %1797 = vmatprep.subr.mxu0 0.0
    %1798 = vmatpush1.msra.mxu0 0.0
    %1799 = vmatprep.subr.mxu0 0.0
    %1800 = vmatpush1.msra.mxu0 0.0
    %1801 = vmatprep.subr.mxu0 0.0
    %1802 = vmatpush1.msra.mxu0 0.0
    %1803 = vmatprep.subr.mxu0 0.0
    %1804 = vmatpush1.msra.mxu0 0.0
    %1805 = vmatprep.subr.mxu0 0.0
    %1806 = vmatpush1.msra.mxu0 0.0
    %1807 = vmatprep.subr.mxu0 0.0
    %1808 = vmatpush1.msra.mxu0 0.0
    %1809 = vmatprep.subr.mxu0 0.0
    %1810 = vmatpush1.msra.mxu0 0.0
    %1811 = vmatprep.subr.mxu0 0.0
    %1812 = vmatpush1.msra.mxu0 0.0
    %1813 = vmatprep.subr.mxu0 0.0
    %1814 = vmatpush1.msra.mxu0 0.0
    %1815 = vmatprep.subr.mxu0 0.0
    %1816 = vmatpush1.msra.mxu0 0.0
    %1817 = vmatprep.subr.mxu0 0.0
    %1818 = vmatpush1.msra.mxu0 0.0
    %1819 = vmatprep.subr.mxu0 0.0
    %1820 = vmatpush1.msra.mxu0 0.0
    %1821 = vmatprep.subr.mxu0 0.0
    %1822 = vmatpush1.msra.mxu0 0.0
    %1823 = vmatprep.subr.mxu0 0.0
    %1824 = vmatpush1.msra.mxu0 0.0
    %1825 = vmatprep.subr.mxu0 0.0
    %1826 = vmatpush1.msra.mxu0 0.0
    %1827 = vmatprep.subr.mxu0 0.0
    %1828 = vmatpush1.msra.mxu0 0.0
    %1829 = vmatprep.subr.mxu0 0.0
    %1830 = vmatpush1.msra.mxu0 0.0
    %1831 = vmatprep.subr.mxu0 0.0
    %1832 = vmatpush1.msra.mxu0 0.0
    %1833 = vmatprep.subr.mxu0 0.0
    %1834 = vmatpush1.msra.mxu0 0.0
    %1835 = vmatprep.subr.mxu0 0.0
    %1836 = vmatpush1.msra.mxu0 0.0
    %1837 = vmatprep.subr.mxu0 0.0
    %1838 = vmatpush1.msra.mxu0 0.0
    %1839 = vmatprep.subr.mxu0 0.0
    %1840 = vmatpush1.msra.mxu0 0.0
    %1841 = vmatprep.subr.mxu0 0.0
    %1842 = vmatpush1.msra.mxu0 0.0
    %1843 = vmatprep.subr.mxu0 0.0
    %1844 = vmatpush1.msra.mxu0 0.0
    %1845 = vmatprep.subr.mxu0 0.0
    %1846 = vmatpush1.msra.mxu0 0.0
    %1847 = vmatprep.subr.mxu0 0.0
    %1848 = vmatpush1.msra.mxu0 0.0
    %1849 = vmatprep.subr.mxu0 0.0
    %1850 = vmatpush1.msra.mxu0 0.0
    %1851 = vmatprep.subr.mxu0 0.0
    %1852 = vmatpush1.msra.mxu0 0.0
    %1853 = vmatprep.mubr.f32.mxu0 0.0
    %1854 = vmatmul.mubr.f32.gmra.mrb[0].mxu0 %v1787
    %v1855 = vpop.f32.mrb[0].mxu0
    %v1856 = vadd.f32 0.0, %v1855
    %v1857 = vpop.f32.mrb[0].mxu0
    %1858 = vdwg.mxu0
    %s1859 = scalar_lea.vmem %s5, 48
    %v1860 = vld [vmem:[%s1859] sm:$0xff]
    %v1861 = vld [vmem:[%s1859 + $0x8] sm:$0xff]
    %v1863 = vsel %vm270, %v1856, 0
    %1865 = vmatprep.subr.mxu0 0.0
    %1866 = vmatpush1.msra.mxu0 %v1860
    %1867 = vmatprep.subr.mxu0 0.0
    %1868 = vmatpush1.msra.mxu0 %v1861
    %1869 = vmatprep.subr.mxu0 0.0
    %1870 = vmatpush1.msra.mxu0 0.0
    %1871 = vmatprep.subr.mxu0 0.0
    %1872 = vmatpush1.msra.mxu0 0.0
    %1873 = vmatprep.subr.mxu0 0.0
    %1874 = vmatpush1.msra.mxu0 0.0
    %1875 = vmatprep.subr.mxu0 0.0
    %1876 = vmatpush1.msra.mxu0 0.0
    %1877 = vmatprep.subr.mxu0 0.0
    %1878 = vmatpush1.msra.mxu0 0.0
    %1879 = vmatprep.subr.mxu0 0.0
    %1880 = vmatpush1.msra.mxu0 0.0
    %1881 = vmatprep.subr.mxu0 0.0
    %1882 = vmatpush1.msra.mxu0 0.0
    %1883 = vmatprep.subr.mxu0 0.0
    %1884 = vmatpush1.msra.mxu0 0.0
    %1885 = vmatprep.subr.mxu0 0.0
    %1886 = vmatpush1.msra.mxu0 0.0
    %1887 = vmatprep.subr.mxu0 0.0
    %1888 = vmatpush1.msra.mxu0 0.0
    %1889 = vmatprep.subr.mxu0 0.0
    %1890 = vmatpush1.msra.mxu0 0.0
    %1891 = vmatprep.subr.mxu0 0.0
    %1892 = vmatpush1.msra.mxu0 0.0
    %1893 = vmatprep.subr.mxu0 0.0
    %1894 = vmatpush1.msra.mxu0 0.0
    %1895 = vmatprep.subr.mxu0 0.0
    %1896 = vmatpush1.msra.mxu0 0.0
    %1897 = vmatprep.subr.mxu0 0.0
    %1898 = vmatpush1.msra.mxu0 0.0
    %1899 = vmatprep.subr.mxu0 0.0
    %1900 = vmatpush1.msra.mxu0 0.0
    %1901 = vmatprep.subr.mxu0 0.0
    %1902 = vmatpush1.msra.mxu0 0.0
    %1903 = vmatprep.subr.mxu0 0.0
    %1904 = vmatpush1.msra.mxu0 0.0
    %1905 = vmatprep.subr.mxu0 0.0
    %1906 = vmatpush1.msra.mxu0 0.0
    %1907 = vmatprep.subr.mxu0 0.0
    %1908 = vmatpush1.msra.mxu0 0.0
    %1909 = vmatprep.subr.mxu0 0.0
    %1910 = vmatpush1.msra.mxu0 0.0
    %1911 = vmatprep.subr.mxu0 0.0
    %1912 = vmatpush1.msra.mxu0 0.0
    %1913 = vmatprep.subr.mxu0 0.0
    %1914 = vmatpush1.msra.mxu0 0.0
    %1915 = vmatprep.subr.mxu0 0.0
    %1916 = vmatpush1.msra.mxu0 0.0
    %1917 = vmatprep.subr.mxu0 0.0
    %1918 = vmatpush1.msra.mxu0 0.0
    %1919 = vmatprep.subr.mxu0 0.0
    %1920 = vmatpush1.msra.mxu0 0.0
    %1921 = vmatprep.subr.mxu0 0.0
    %1922 = vmatpush1.msra.mxu0 0.0
    %1923 = vmatprep.subr.mxu0 0.0
    %1924 = vmatpush1.msra.mxu0 0.0
    %1925 = vmatprep.subr.mxu0 0.0
    %1926 = vmatpush1.msra.mxu0 0.0
    %1927 = vmatprep.subr.mxu0 0.0
    %1928 = vmatpush1.msra.mxu0 0.0
    %1929 = vmatprep.mubr.f32.mxu0 0.0
    %1930 = vmatmul.mubr.f32.gmra.mrb[0].mxu0 %v1863
    %v1931 = vpop.f32.mrb[0].mxu0
    %v1932 = vadd.f32 0.0, %v1931
    %v1933 = vpop.f32.mrb[0].mxu0
    %1934 = vdwg.mxu0
    %v1935 = vadd.f32 %v1459, %v1932
    %v1937 = vlaneseq
    %v1938 = vshrl.u32 %v1937, 7
    %v1939 = vsub.s32 0, %v1938
    %v1940 = vrot.slane %v27, %v1939
    %v1942 = vadd.f32 %v1935, %v1940
    %1943 = vst.msk [vmem:[#allocation2] sm:$0xff] %vm42, %v1942
    %s1944 = scalar_lea.vmem %s0, 8
    %v1945 = vld [vmem:[%s1944] sm:$0xff]
    %s1946 = scalar_lea.vmem %s1, 8
    %v1947 = vld [vmem:[%s1946] sm:$0xff]
    %v1948 = vld [vmem:[%s2] sm:$0xff]
    %v1949 = vld [vmem:[%s2 + $0x8] sm:$0xff]
    %v1950 = vld [vmem:[%s2 + $0x10] sm:$0xff]
    %v1951 = vld [vmem:[%s2 + $0x18] sm:$0xff]
    %v1952 = vld [vmem:[%s3] sm:$0xff]
    %v1953 = vld [vmem:[%s3 + $0x8] sm:$0xff]
    %v1954 = vld [vmem:[%s3 + $0x10] sm:$0xff]
    %v1955 = vld [vmem:[%s3 + $0x18] sm:$0xff]
    %v1956 = vld [vmem:[%s4] sm:$0xff]
    %v1957 = vld [vmem:[%s4 + $0x8] sm:$0xff]
    %v1958 = vld [vmem:[%s4 + $0x10] sm:$0xff]
    %v1959 = vld [vmem:[%s4 + $0x18] sm:$0xff]
    %v1961 = vsel %vm42, %v1945, 0
    %1963 = vmatprep.subr.mxu0 0.0
    %1964 = vmatpush1.msra.mxu0 %v1948
    %1965 = vmatprep.subr.mxu0 0.0
    %1966 = vmatpush1.msra.mxu0 %v1949
    %1967 = vmatprep.subr.mxu0 0.0
    %1968 = vmatpush1.msra.mxu0 %v1950
    %1969 = vmatprep.subr.mxu0 0.0
    %1970 = vmatpush1.msra.mxu0 %v1951
    %1971 = vmatprep.subr.mxu0 0.0
    %1972 = vmatpush1.msra.mxu0 0.0
    %1973 = vmatprep.subr.mxu0 0.0
    %1974 = vmatpush1.msra.mxu0 0.0
    %1975 = vmatprep.subr.mxu0 0.0
    %1976 = vmatpush1.msra.mxu0 0.0
    %1977 = vmatprep.subr.mxu0 0.0
    %1978 = vmatpush1.msra.mxu0 0.0
    %1979 = vmatprep.subr.mxu0 0.0
    %1980 = vmatpush1.msra.mxu0 0.0
    %1981 = vmatprep.subr.mxu0 0.0
    %1982 = vmatpush1.msra.mxu0 0.0
    %1983 = vmatprep.subr.mxu0 0.0
    %1984 = vmatpush1.msra.mxu0 0.0
    %1985 = vmatprep.subr.mxu0 0.0
    %1986 = vmatpush1.msra.mxu0 0.0
    %1987 = vmatprep.subr.mxu0 0.0
    %1988 = vmatpush1.msra.mxu0 0.0
    %1989 = vmatprep.subr.mxu0 0.0
    %1990 = vmatpush1.msra.mxu0 0.0
    %1991 = vmatprep.subr.mxu0 0.0
    %1992 = vmatpush1.msra.mxu0 0.0
    %1993 = vmatprep.subr.mxu0 0.0
    %1994 = vmatpush1.msra.mxu0 0.0
    %1995 = vmatprep.subr.mxu0 0.0
    %1996 = vmatpush1.msra.mxu0 0.0
    %1997 = vmatprep.subr.mxu0 0.0
    %1998 = vmatpush1.msra.mxu0 0.0
    %1999 = vmatprep.subr.mxu0 0.0
    %2000 = vmatpush1.msra.mxu0 0.0
    %2001 = vmatprep.subr.mxu0 0.0
    %2002 = vmatpush1.msra.mxu0 0.0
    %2003 = vmatprep.subr.mxu0 0.0
    %2004 = vmatpush1.msra.mxu0 0.0
    %2005 = vmatprep.subr.mxu0 0.0
    %2006 = vmatpush1.msra.mxu0 0.0
    %2007 = vmatprep.subr.mxu0 0.0
    %2008 = vmatpush1.msra.mxu0 0.0
    %2009 = vmatprep.subr.mxu0 0.0
    %2010 = vmatpush1.msra.mxu0 0.0
    %2011 = vmatprep.subr.mxu0 0.0
    %2012 = vmatpush1.msra.mxu0 0.0
    %2013 = vmatprep.subr.mxu0 0.0
    %2014 = vmatpush1.msra.mxu0 0.0
    %2015 = vmatprep.subr.mxu0 0.0
    %2016 = vmatpush1.msra.mxu0 0.0
    %2017 = vmatprep.subr.mxu0 0.0
    %2018 = vmatpush1.msra.mxu0 0.0
    %2019 = vmatprep.subr.mxu0 0.0
    %2020 = vmatpush1.msra.mxu0 0.0
    %2021 = vmatprep.subr.mxu0 0.0
    %2022 = vmatpush1.msra.mxu0 0.0
    %2023 = vmatprep.subr.mxu0 0.0
    %2024 = vmatpush1.msra.mxu0 0.0
    %2025 = vmatprep.subr.mxu0 0.0
    %2026 = vmatpush1.msra.mxu0 0.0
    %2027 = vmatprep.mubr.f32.mxu0 0.0
    %2028 = vmatmul.mubr.f32.gmra.mrb[0].mxu0 %v1961
    %v2029 = vpop.f32.mrb[0].mxu0
    %v2030 = vadd.f32 0.0, %v2029
    %v2031 = vpop.f32.mrb[0].mxu0
    %2032 = vdwg.mxu0
    %v2033 = vmul.f32 %v2030, 0.25
    %v2035 = vsel %vm42, %v1947, 0
    %2037 = vmatprep.subr.mxu0 0.0
    %2038 = vmatpush1.msra.mxu0 %v1952
    %2039 = vmatprep.subr.mxu0 0.0
    %2040 = vmatpush1.msra.mxu0 %v1953
    %2041 = vmatprep.subr.mxu0 0.0
    %2042 = vmatpush1.msra.mxu0 %v1954
    %2043 = vmatprep.subr.mxu0 0.0
    %2044 = vmatpush1.msra.mxu0 %v1955
    %2045 = vmatprep.subr.mxu0 0.0
    %2046 = vmatpush1.msra.mxu0 0.0
    %2047 = vmatprep.subr.mxu0 0.0
    %2048 = vmatpush1.msra.mxu0 0.0
    %2049 = vmatprep.subr.mxu0 0.0
    %2050 = vmatpush1.msra.mxu0 0.0
    %2051 = vmatprep.subr.mxu0 0.0
    %2052 = vmatpush1.msra.mxu0 0.0
    %2053 = vmatprep.subr.mxu0 0.0
    %2054 = vmatpush1.msra.mxu0 0.0
    %2055 = vmatprep.subr.mxu0 0.0
    %2056 = vmatpush1.msra.mxu0 0.0
    %2057 = vmatprep.subr.mxu0 0.0
    %2058 = vmatpush1.msra.mxu0 0.0
    %2059 = vmatprep.subr.mxu0 0.0
    %2060 = vmatpush1.msra.mxu0 0.0
    %2061 = vmatprep.subr.mxu0 0.0
    %2062 = vmatpush1.msra.mxu0 0.0
    %2063 = vmatprep.subr.mxu0 0.0
    %2064 = vmatpush1.msra.mxu0 0.0
    %2065 = vmatprep.subr.mxu0 0.0
    %2066 = vmatpush1.msra.mxu0 0.0
    %2067 = vmatprep.subr.mxu0 0.0
    %2068 = vmatpush1.msra.mxu0 0.0
    %2069 = vmatprep.subr.mxu0 0.0
    %2070 = vmatpush1.msra.mxu0 0.0
    %2071 = vmatprep.subr.mxu0 0.0
    %2072 = vmatpush1.msra.mxu0 0.0
    %2073 = vmatprep.subr.mxu0 0.0
    %2074 = vmatpush1.msra.mxu0 0.0
    %2075 = vmatprep.subr.mxu0 0.0
    %2076 = vmatpush1.msra.mxu0 0.0
    %2077 = vmatprep.subr.mxu0 0.0
    %2078 = vmatpush1.msra.mxu0 0.0
    %2079 = vmatprep.subr.mxu0 0.0
    %2080 = vmatpush1.msra.mxu0 0.0
    %2081 = vmatprep.subr.mxu0 0.0
    %2082 = vmatpush1.msra.mxu0 0.0
    %2083 = vmatprep.subr.mxu0 0.0
    %2084 = vmatpush1.msra.mxu0 0.0
    %2085 = vmatprep.subr.mxu0 0.0
    %2086 = vmatpush1.msra.mxu0 0.0
    %2087 = vmatprep.subr.mxu0 0.0
    %2088 = vmatpush1.msra.mxu0 0.0
    %2089 = vmatprep.subr.mxu0 0.0
    %2090 = vmatpush1.msra.mxu0 0.0
    %2091 = vmatprep.subr.mxu0 0.0
    %2092 = vmatpush1.msra.mxu0 0.0
    %2093 = vmatprep.subr.mxu0 0.0
    %2094 = vmatpush1.msra.mxu0 0.0
    %2095 = vmatprep.subr.mxu0 0.0
    %2096 = vmatpush1.msra.mxu0 0.0
    %2097 = vmatprep.subr.mxu0 0.0
    %2098 = vmatpush1.msra.mxu0 0.0
    %2099 = vmatprep.subr.mxu0 0.0
    %2100 = vmatpush1.msra.mxu0 0.0
    %2101 = vmatprep.mubr.f32.mxu0 0.0
    %2102 = vmatmul.mubr.f32.gmra.mrb[0].mxu0 %v1961
    %v2103 = vpop.f32.mrb[0].mxu0
    %v2104 = vadd.f32 0.0, %v2103
    %v2105 = vpop.f32.mrb[0].mxu0
    %2106 = vmatprep.mubr.f32.mxu0 0.0
    %2107 = vmatmul.mubr.f32.gmra.mrb[0].mxu0 %v2035
    %v2108 = vpop.f32.mrb[0].mxu0
    %v2109 = vadd.f32 0.0, %v2108
    %v2110 = vpop.f32.mrb[0].mxu0
    %2111 = vdwg.mxu0
    %2112 = vmatprep.subr.mxu0 0.0
    %2113 = vmatpush1.msra.mxu0 %v1956
    %2114 = vmatprep.subr.mxu0 0.0
    %2115 = vmatpush1.msra.mxu0 %v1957
    %2116 = vmatprep.subr.mxu0 0.0
    %2117 = vmatpush1.msra.mxu0 %v1958
    %2118 = vmatprep.subr.mxu0 0.0
    %2119 = vmatpush1.msra.mxu0 %v1959
    %2120 = vmatprep.subr.mxu0 0.0
    %2121 = vmatpush1.msra.mxu0 0.0
    %2122 = vmatprep.subr.mxu0 0.0
    %2123 = vmatpush1.msra.mxu0 0.0
    %2124 = vmatprep.subr.mxu0 0.0
    %2125 = vmatpush1.msra.mxu0 0.0
    %2126 = vmatprep.subr.mxu0 0.0
    %2127 = vmatpush1.msra.mxu0 0.0
    %2128 = vmatprep.subr.mxu0 0.0
    %2129 = vmatpush1.msra.mxu0 0.0
    %2130 = vmatprep.subr.mxu0 0.0
    %2131 = vmatpush1.msra.mxu0 0.0
    %2132 = vmatprep.subr.mxu0 0.0
    %2133 = vmatpush1.msra.mxu0 0.0
    %2134 = vmatprep.subr.mxu0 0.0
    %2135 = vmatpush1.msra.mxu0 0.0
    %2136 = vmatprep.subr.mxu0 0.0
    %2137 = vmatpush1.msra.mxu0 0.0
    %2138 = vmatprep.subr.mxu0 0.0
    %2139 = vmatpush1.msra.mxu0 0.0
    %2140 = vmatprep.subr.mxu0 0.0
    %2141 = vmatpush1.msra.mxu0 0.0
    %2142 = vmatprep.subr.mxu0 0.0
    %2143 = vmatpush1.msra.mxu0 0.0
    %2144 = vmatprep.subr.mxu0 0.0
    %2145 = vmatpush1.msra.mxu0 0.0
    %2146 = vmatprep.subr.mxu0 0.0
    %2147 = vmatpush1.msra.mxu0 0.0
    %2148 = vmatprep.subr.mxu0 0.0
    %2149 = vmatpush1.msra.mxu0 0.0
    %2150 = vmatprep.subr.mxu0 0.0
    %2151 = vmatpush1.msra.mxu0 0.0
    %2152 = vmatprep.subr.mxu0 0.0
    %2153 = vmatpush1.msra.mxu0 0.0
    %2154 = vmatprep.subr.mxu0 0.0
    %2155 = vmatpush1.msra.mxu0 0.0
    %2156 = vmatprep.subr.mxu0 0.0
    %2157 = vmatpush1.msra.mxu0 0.0
    %2158 = vmatprep.subr.mxu0 0.0
    %2159 = vmatpush1.msra.mxu0 0.0
    %2160 = vmatprep.subr.mxu0 0.0
    %2161 = vmatpush1.msra.mxu0 0.0
    %2162 = vmatprep.subr.mxu0 0.0
    %2163 = vmatpush1.msra.mxu0 0.0
    %2164 = vmatprep.subr.mxu0 0.0
    %2165 = vmatpush1.msra.mxu0 0.0
    %2166 = vmatprep.subr.mxu0 0.0
    %2167 = vmatpush1.msra.mxu0 0.0
    %2168 = vmatprep.subr.mxu0 0.0
    %2169 = vmatpush1.msra.mxu0 0.0
    %2170 = vmatprep.subr.mxu0 0.0
    %2171 = vmatpush1.msra.mxu0 0.0
    %2172 = vmatprep.subr.mxu0 0.0
    %2173 = vmatpush1.msra.mxu0 0.0
    %2174 = vmatprep.subr.mxu0 0.0
    %2175 = vmatpush1.msra.mxu0 0.0
    %2176 = vmatprep.mubr.f32.mxu0 0.0
    %2177 = vmatmul.mubr.f32.gmra.mrb[0].mxu0 %v1961
    %v2178 = vpop.f32.mrb[0].mxu0
    %v2179 = vadd.f32 0.0, %v2178
    %v2180 = vpop.f32.mrb[0].mxu0
    %2181 = vmatprep.mubr.f32.mxu0 0.0
    %2182 = vmatmul.mubr.f32.gmra.mrb[0].mxu0 %v2035
    %v2183 = vpop.f32.mrb[0].mxu0
    %v2184 = vadd.f32 0.0, %v2183
    %v2185 = vpop.f32.mrb[0].mxu0
    %2186 = vdwg.mxu0
    %v2188 = vsel %vm270, %v2033, 0
    %v2191 = vsel %vm270, %v2104, 0
    %v2194 = vsel %vm270, %v2109, 0
    %2196 = vmatprep.subr.mxu0 0.0
    %2197 = vmatpush1.xpose.msra.mxu0 %v2191
    %2198 = vmatprep.subr.mxu0 0.0
    %2199 = vmatpush1.xpose.msra.mxu0 %v2194
    %2200 = vmatprep.subr.mxu0 0.0
    %2201 = vmatpush1.xpose.msra.mxu0 0.0
    %2202 = vmatprep.subr.mxu0 0.0
    %2203 = vmatpush1.xpose.msra.mxu0 0.0
    %2204 = vmatprep.subr.mxu0 0.0
    %2205 = vmatpush1.xpose.msra.mxu0 0.0
    %2206 = vmatprep.subr.mxu0 0.0
    %2207 = vmatpush1.xpose.msra.mxu0 0.0
    %2208 = vmatprep.subr.mxu0 0.0
    %2209 = vmatpush1.xpose.msra.mxu0 0.0
    %2210 = vmatprep.subr.mxu0 0.0
    %2211 = vmatpush1.xpose.msra.mxu0 0.0
    %2212 = vmatprep.subr.mxu0 0.0
    %2213 = vmatpush1.xpose.msra.mxu0 0.0
    %2214 = vmatprep.subr.mxu0 0.0
    %2215 = vmatpush1.xpose.msra.mxu0 0.0
    %2216 = vmatprep.subr.mxu0 0.0
    %2217 = vmatpush1.xpose.msra.mxu0 0.0
    %2218 = vmatprep.subr.mxu0 0.0
    %2219 = vmatpush1.xpose.msra.mxu0 0.0
    %2220 = vmatprep.subr.mxu0 0.0
    %2221 = vmatpush1.xpose.msra.mxu0 0.0
    %2222 = vmatprep.subr.mxu0 0.0
    %2223 = vmatpush1.xpose.msra.mxu0 0.0
    %2224 = vmatprep.subr.mxu0 0.0
    %2225 = vmatpush1.xpose.msra.mxu0 0.0
    %2226 = vmatprep.subr.mxu0 0.0
    %2227 = vmatpush1.xpose.msra.mxu0 0.0
    %2228 = vmatprep.subr.mxu0 0.0
    %2229 = vmatpush1.xpose.msra.mxu0 0.0
    %2230 = vmatprep.subr.mxu0 0.0
    %2231 = vmatpush1.xpose.msra.mxu0 0.0
    %2232 = vmatprep.subr.mxu0 0.0
    %2233 = vmatpush1.xpose.msra.mxu0 0.0
    %2234 = vmatprep.subr.mxu0 0.0
    %2235 = vmatpush1.xpose.msra.mxu0 0.0
    %2236 = vmatprep.subr.mxu0 0.0
    %2237 = vmatpush1.xpose.msra.mxu0 0.0
    %2238 = vmatprep.subr.mxu0 0.0
    %2239 = vmatpush1.xpose.msra.mxu0 0.0
    %2240 = vmatprep.subr.mxu0 0.0
    %2241 = vmatpush1.xpose.msra.mxu0 0.0
    %2242 = vmatprep.subr.mxu0 0.0
    %2243 = vmatpush1.xpose.msra.mxu0 0.0
    %2244 = vmatprep.subr.mxu0 0.0
    %2245 = vmatpush1.xpose.msra.mxu0 0.0
    %2246 = vmatprep.subr.mxu0 0.0
    %2247 = vmatpush1.xpose.msra.mxu0 0.0
    %2248 = vmatprep.subr.mxu0 0.0
    %2249 = vmatpush1.xpose.msra.mxu0 0.0
    %2250 = vmatprep.subr.mxu0 0.0
    %2251 = vmatpush1.xpose.msra.mxu0 0.0
    %2252 = vmatprep.subr.mxu0 0.0
    %2253 = vmatpush1.xpose.msra.mxu0 0.0
    %2254 = vmatprep.subr.mxu0 0.0
    %2255 = vmatpush1.xpose.msra.mxu0 0.0
    %2256 = vmatprep.subr.mxu0 0.0
    %2257 = vmatpush1.xpose.msra.mxu0 0.0
    %2258 = vmatprep.subr.mxu0 0.0
    %2259 = vmatpush1.xpose.msra.mxu0 0.0
    %2260 = vmatprep.mubr.f32.mxu0 0.0
    %2261 = vmatmul.mubr.f32.gmra.mrb[0].mxu0 %v2188
    %v2262 = vpop.f32.mrb[0].mxu0
    %v2263 = vadd.f32 0.0, %v2262
    %v2264 = vpop.f32.mrb[0].mxu0
    %2265 = vdwg.mxu0
    %v2266 = vsel %vm270, %v2263, -inf
    %2267 = vmax.xlane.f32.xlu0 %v2266
    %v2268 = vpop.xlane.xlu0 %2267
    %v2269 = vsub.f32 %v2263, %v2268
    %v2270 = vmul.f32 %v2269, 1.442695
    %v2271 = vpow.pop %v2270
    %v2272 = vsel %vm270, %v2271, 0.0
    %2273 = vadd.xlane.f32.xlu0 %v2272
    %v2274 = vpop.xlane.xlu0 %2273
    %v2275 = vrcp.pop %v2274
    %v2276 = vmul.f32 %v2271, %v2275
    %v2278 = vsel %vm270, %v2276, 0
    %2280 = vmatprep.subr.mxu0 0.0
    %2281 = vmatpush1.msra.mxu0 %v2179
    %2282 = vmatprep.subr.mxu0 0.0
    %2283 = vmatpush1.msra.mxu0 %v2184
    %2284 = vmatprep.subr.mxu0 0.0
    %2285 = vmatpush1.msra.mxu0 0.0
    %2286 = vmatprep.subr.mxu0 0.0
    %2287 = vmatpush1.msra.mxu0 0.0
    %2288 = vmatprep.subr.mxu0 0.0
    %2289 = vmatpush1.msra.mxu0 0.0
    %2290 = vmatprep.subr.mxu0 0.0
    %2291 = vmatpush1.msra.mxu0 0.0
    %2292 = vmatprep.subr.mxu0 0.0
    %2293 = vmatpush1.msra.mxu0 0.0
    %2294 = vmatprep.subr.mxu0 0.0
    %2295 = vmatpush1.msra.mxu0 0.0
    %2296 = vmatprep.subr.mxu0 0.0
    %2297 = vmatpush1.msra.mxu0 0.0
    %2298 = vmatprep.subr.mxu0 0.0
    %2299 = vmatpush1.msra.mxu0 0.0
    %2300 = vmatprep.subr.mxu0 0.0
    %2301 = vmatpush1.msra.mxu0 0.0
    %2302 = vmatprep.subr.mxu0 0.0
    %2303 = vmatpush1.msra.mxu0 0.0
    %2304 = vmatprep.subr.mxu0 0.0
    %2305 = vmatpush1.msra.mxu0 0.0
    %2306 = vmatprep.subr.mxu0 0.0
    %2307 = vmatpush1.msra.mxu0 0.0
    %2308 = vmatprep.subr.mxu0 0.0
    %2309 = vmatpush1.msra.mxu0 0.0
    %2310 = vmatprep.subr.mxu0 0.0
    %2311 = vmatpush1.msra.mxu0 0.0
    %2312 = vmatprep.subr.mxu0 0.0
    %2313 = vmatpush1.msra.mxu0 0.0
    %2314 = vmatprep.subr.mxu0 0.0
    %2315 = vmatpush1.msra.mxu0 0.0
    %2316 = vmatprep.subr.mxu0 0.0
    %2317 = vmatpush1.msra.mxu0 0.0
    %2318 = vmatprep.subr.mxu0 0.0
    %2319 = vmatpush1.msra.mxu0 0.0
    %2320 = vmatprep.subr.mxu0 0.0
    %2321 = vmatpush1.msra.mxu0 0.0
    %2322 = vmatprep.subr.mxu0 0.0
    %2323 = vmatpush1.msra.mxu0 0.0
    %2324 = vmatprep.subr.mxu0 0.0
    %2325 = vmatpush1.msra.mxu0 0.0
    %2326 = vmatprep.subr.mxu0 0.0
    %2327 = vmatpush1.msra.mxu0 0.0
    %2328 = vmatprep.subr.mxu0 0.0
    %2329 = vmatpush1.msra.mxu0 0.0
    %2330 = vmatprep.subr.mxu0 0.0
    %2331 = vmatpush1.msra.mxu0 0.0
    %2332 = vmatprep.subr.mxu0 0.0
    %2333 = vmatpush1.msra.mxu0 0.0
    %2334 = vmatprep.subr.mxu0 0.0
    %2335 = vmatpush1.msra.mxu0 0.0
    %2336 = vmatprep.subr.mxu0 0.0
    %2337 = vmatpush1.msra.mxu0 0.0
    %2338 = vmatprep.subr.mxu0 0.0
    %2339 = vmatpush1.msra.mxu0 0.0
    %2340 = vmatprep.subr.mxu0 0.0
    %2341 = vmatpush1.msra.mxu0 0.0
    %2342 = vmatprep.subr.mxu0 0.0
    %2343 = vmatpush1.msra.mxu0 0.0
    %2344 = vmatprep.mubr.f32.mxu0 0.0
    %2345 = vmatmul.mubr.f32.gmra.mrb[0].mxu0 %v2278
    %v2346 = vpop.f32.mrb[0].mxu0
    %v2347 = vadd.f32 0.0, %v2346
    %v2348 = vpop.f32.mrb[0].mxu0
    %2349 = vdwg.mxu0
    %v2350 = vld [vmem:[%s5] sm:$0xff]
    %v2351 = vld [vmem:[%s5 + $0x8] sm:$0xff]
    %v2352 = vld [vmem:[%s436] sm:$0xff]
    %v2353 = vld [vmem:[%s436 + $0x8] sm:$0xff]
    %v2354 = vld [vmem:[%s436 + $0x10] sm:$0xff]
    %v2355 = vld [vmem:[%s436 + $0x18] sm:$0xff]
    %v2356 = vld [vmem:[%s441] sm:$0xff]
    %v2357 = vld [vmem:[%s441 + $0x8] sm:$0xff]
    %v2358 = vld [vmem:[%s441 + $0x10] sm:$0xff]
    %v2359 = vld [vmem:[%s441 + $0x18] sm:$0xff]
    %v2360 = vld [vmem:[%s446] sm:$0xff]
    %v2361 = vld [vmem:[%s446 + $0x8] sm:$0xff]
    %v2362 = vld [vmem:[%s446 + $0x10] sm:$0xff]
    %v2363 = vld [vmem:[%s446 + $0x18] sm:$0xff]
    %2364 = vmatprep.subr.mxu0 0.0
    %2365 = vmatpush1.msra.mxu0 %v2352
    %2366 = vmatprep.subr.mxu0 0.0
    %2367 = vmatpush1.msra.mxu0 %v2353
    %2368 = vmatprep.subr.mxu0 0.0
    %2369 = vmatpush1.msra.mxu0 %v2354
    %2370 = vmatprep.subr.mxu0 0.0
    %2371 = vmatpush1.msra.mxu0 %v2355
    %2372 = vmatprep.subr.mxu0 0.0
    %2373 = vmatpush1.msra.mxu0 0.0
    %2374 = vmatprep.subr.mxu0 0.0
    %2375 = vmatpush1.msra.mxu0 0.0
    %2376 = vmatprep.subr.mxu0 0.0
    %2377 = vmatpush1.msra.mxu0 0.0
    %2378 = vmatprep.subr.mxu0 0.0
    %2379 = vmatpush1.msra.mxu0 0.0
    %2380 = vmatprep.subr.mxu0 0.0
    %2381 = vmatpush1.msra.mxu0 0.0
    %2382 = vmatprep.subr.mxu0 0.0
    %2383 = vmatpush1.msra.mxu0 0.0
    %2384 = vmatprep.subr.mxu0 0.0
    %2385 = vmatpush1.msra.mxu0 0.0
    %2386 = vmatprep.subr.mxu0 0.0
    %2387 = vmatpush1.msra.mxu0 0.0
    %2388 = vmatprep.subr.mxu0 0.0
    %2389 = vmatpush1.msra.mxu0 0.0
    %2390 = vmatprep.subr.mxu0 0.0
    %2391 = vmatpush1.msra.mxu0 0.0
    %2392 = vmatprep.subr.mxu0 0.0
    %2393 = vmatpush1.msra.mxu0 0.0
    %2394 = vmatprep.subr.mxu0 0.0
    %2395 = vmatpush1.msra.mxu0 0.0
    %2396 = vmatprep.subr.mxu0 0.0
    %2397 = vmatpush1.msra.mxu0 0.0
    %2398 = vmatprep.subr.mxu0 0.0
    %2399 = vmatpush1.msra.mxu0 0.0
    %2400 = vmatprep.subr.mxu0 0.0
    %2401 = vmatpush1.msra.mxu0 0.0
    %2402 = vmatprep.subr.mxu0 0.0
    %2403 = vmatpush1.msra.mxu0 0.0
    %2404 = vmatprep.subr.mxu0 0.0
    %2405 = vmatpush1.msra.mxu0 0.0
    %2406 = vmatprep.subr.mxu0 0.0
    %2407 = vmatpush1.msra.mxu0 0.0
    %2408 = vmatprep.subr.mxu0 0.0
    %2409 = vmatpush1.msra.mxu0 0.0
    %2410 = vmatprep.subr.mxu0 0.0
    %2411 = vmatpush1.msra.mxu0 0.0
    %2412 = vmatprep.subr.mxu0 0.0
    %2413 = vmatpush1.msra.mxu0 0.0
    %2414 = vmatprep.subr.mxu0 0.0
    %2415 = vmatpush1.msra.mxu0 0.0
    %2416 = vmatprep.subr.mxu0 0.0
    %2417 = vmatpush1.msra.mxu0 0.0
    %2418 = vmatprep.subr.mxu0 0.0
    %2419 = vmatpush1.msra.mxu0 0.0
    %2420 = vmatprep.subr.mxu0 0.0
    %2421 = vmatpush1.msra.mxu0 0.0
    %2422 = vmatprep.subr.mxu0 0.0
    %2423 = vmatpush1.msra.mxu0 0.0
    %2424 = vmatprep.subr.mxu0 0.0
    %2425 = vmatpush1.msra.mxu0 0.0
    %2426 = vmatprep.subr.mxu0 0.0
    %2427 = vmatpush1.msra.mxu0 0.0
    %2428 = vmatprep.mubr.f32.mxu0 0.0
    %2429 = vmatmul.mubr.f32.gmra.mrb[0].mxu0 %v1961
    %v2430 = vpop.f32.mrb[0].mxu0
    %v2431 = vadd.f32 0.0, %v2430
    %v2432 = vpop.f32.mrb[0].mxu0
    %2433 = vdwg.mxu0
    %v2434 = vmul.f32 %v2431, 0.25
    %2435 = vmatprep.subr.mxu0 0.0
    %2436 = vmatpush1.msra.mxu0 %v2356
    %2437 = vmatprep.subr.mxu0 0.0
    %2438 = vmatpush1.msra.mxu0 %v2357
    %2439 = vmatprep.subr.mxu0 0.0
    %2440 = vmatpush1.msra.mxu0 %v2358
    %2441 = vmatprep.subr.mxu0 0.0
    %2442 = vmatpush1.msra.mxu0 %v2359
    %2443 = vmatprep.subr.mxu0 0.0
    %2444 = vmatpush1.msra.mxu0 0.0
    %2445 = vmatprep.subr.mxu0 0.0
    %2446 = vmatpush1.msra.mxu0 0.0
    %2447 = vmatprep.subr.mxu0 0.0
    %2448 = vmatpush1.msra.mxu0 0.0
    %2449 = vmatprep.subr.mxu0 0.0
    %2450 = vmatpush1.msra.mxu0 0.0
    %2451 = vmatprep.subr.mxu0 0.0
    %2452 = vmatpush1.msra.mxu0 0.0
    %2453 = vmatprep.subr.mxu0 0.0
    %2454 = vmatpush1.msra.mxu0 0.0
    %2455 = vmatprep.subr.mxu0 0.0
    %2456 = vmatpush1.msra.mxu0 0.0
    %2457 = vmatprep.subr.mxu0 0.0
    %2458 = vmatpush1.msra.mxu0 0.0
    %2459 = vmatprep.subr.mxu0 0.0
    %2460 = vmatpush1.msra.mxu0 0.0
    %2461 = vmatprep.subr.mxu0 0.0
    %2462 = vmatpush1.msra.mxu0 0.0
    %2463 = vmatprep.subr.mxu0 0.0
    %2464 = vmatpush1.msra.mxu0 0.0
    %2465 = vmatprep.subr.mxu0 0.0
    %2466 = vmatpush1.msra.mxu0 0.0
    %2467 = vmatprep.subr.mxu0 0.0
    %2468 = vmatpush1.msra.mxu0 0.0
    %2469 = vmatprep.subr.mxu0 0.0
    %2470 = vmatpush1.msra.mxu0 0.0
    %2471 = vmatprep.subr.mxu0 0.0
    %2472 = vmatpush1.msra.mxu0 0.0
    %2473 = vmatprep.subr.mxu0 0.0
    %2474 = vmatpush1.msra.mxu0 0.0
    %2475 = vmatprep.subr.mxu0 0.0
    %2476 = vmatpush1.msra.mxu0 0.0
    %2477 = vmatprep.subr.mxu0 0.0
    %2478 = vmatpush1.msra.mxu0 0.0
    %2479 = vmatprep.subr.mxu0 0.0
    %2480 = vmatpush1.msra.mxu0 0.0
    %2481 = vmatprep.subr.mxu0 0.0
    %2482 = vmatpush1.msra.mxu0 0.0
    %2483 = vmatprep.subr.mxu0 0.0
    %2484 = vmatpush1.msra.mxu0 0.0
    %2485 = vmatprep.subr.mxu0 0.0
    %2486 = vmatpush1.msra.mxu0 0.0
    %2487 = vmatprep.subr.mxu0 0.0
    %2488 = vmatpush1.msra.mxu0 0.0
    %2489 = vmatprep.subr.mxu0 0.0
    %2490 = vmatpush1.msra.mxu0 0.0
    %2491 = vmatprep.subr.mxu0 0.0
    %2492 = vmatpush1.msra.mxu0 0.0
    %2493 = vmatprep.subr.mxu0 0.0
    %2494 = vmatpush1.msra.mxu0 0.0
    %2495 = vmatprep.subr.mxu0 0.0
    %2496 = vmatpush1.msra.mxu0 0.0
    %2497 = vmatprep.subr.mxu0 0.0
    %2498 = vmatpush1.msra.mxu0 0.0
    %2499 = vmatprep.mubr.f32.mxu0 0.0
    %2500 = vmatmul.mubr.f32.gmra.mrb[0].mxu0 %v1961
    %v2501 = vpop.f32.mrb[0].mxu0
    %v2502 = vadd.f32 0.0, %v2501
    %v2503 = vpop.f32.mrb[0].mxu0
    %2504 = vmatprep.mubr.f32.mxu0 0.0
    %2505 = vmatmul.mubr.f32.gmra.mrb[0].mxu0 %v2035
    %v2506 = vpop.f32.mrb[0].mxu0
    %v2507 = vadd.f32 0.0, %v2506
    %v2508 = vpop.f32.mrb[0].mxu0
    %2509 = vdwg.mxu0
    %2510 = vmatprep.subr.mxu0 0.0
    %2511 = vmatpush1.msra.mxu0 %v2360
    %2512 = vmatprep.subr.mxu0 0.0
    %2513 = vmatpush1.msra.mxu0 %v2361
    %2514 = vmatprep.subr.mxu0 0.0
    %2515 = vmatpush1.msra.mxu0 %v2362
    %2516 = vmatprep.subr.mxu0 0.0
    %2517 = vmatpush1.msra.mxu0 %v2363
    %2518 = vmatprep.subr.mxu0 0.0
    %2519 = vmatpush1.msra.mxu0 0.0
    %2520 = vmatprep.subr.mxu0 0.0
    %2521 = vmatpush1.msra.mxu0 0.0
    %2522 = vmatprep.subr.mxu0 0.0
    %2523 = vmatpush1.msra.mxu0 0.0
    %2524 = vmatprep.subr.mxu0 0.0
    %2525 = vmatpush1.msra.mxu0 0.0
    %2526 = vmatprep.subr.mxu0 0.0
    %2527 = vmatpush1.msra.mxu0 0.0
    %2528 = vmatprep.subr.mxu0 0.0
    %2529 = vmatpush1.msra.mxu0 0.0
    %2530 = vmatprep.subr.mxu0 0.0
    %2531 = vmatpush1.msra.mxu0 0.0
    %2532 = vmatprep.subr.mxu0 0.0
    %2533 = vmatpush1.msra.mxu0 0.0
    %2534 = vmatprep.subr.mxu0 0.0
    %2535 = vmatpush1.msra.mxu0 0.0
    %2536 = vmatprep.subr.mxu0 0.0
    %2537 = vmatpush1.msra.mxu0 0.0
    %2538 = vmatprep.subr.mxu0 0.0
    %2539 = vmatpush1.msra.mxu0 0.0
    %2540 = vmatprep.subr.mxu0 0.0
    %2541 = vmatpush1.msra.mxu0 0.0
    %2542 = vmatprep.subr.mxu0 0.0
    %2543 = vmatpush1.msra.mxu0 0.0
    %2544 = vmatprep.subr.mxu0 0.0
    %2545 = vmatpush1.msra.mxu0 0.0
    %2546 = vmatprep.subr.mxu0 0.0
    %2547 = vmatpush1.msra.mxu0 0.0
    %2548 = vmatprep.subr.mxu0 0.0
    %2549 = vmatpush1.msra.mxu0 0.0
    %2550 = vmatprep.subr.mxu0 0.0
    %2551 = vmatpush1.msra.mxu0 0.0
    %2552 = vmatprep.subr.mxu0 0.0
    %2553 = vmatpush1.msra.mxu0 0.0
    %2554 = vmatprep.subr.mxu0 0.0
    %2555 = vmatpush1.msra.mxu0 0.0
    %2556 = vmatprep.subr.mxu0 0.0
    %2557 = vmatpush1.msra.mxu0 0.0
    %2558 = vmatprep.subr.mxu0 0.0
    %2559 = vmatpush1.msra.mxu0 0.0
    %2560 = vmatprep.subr.mxu0 0.0
    %2561 = vmatpush1.msra.mxu0 0.0
    %2562 = vmatprep.subr.mxu0 0.0
    %2563 = vmatpush1.msra.mxu0 0.0
    %2564 = vmatprep.subr.mxu0 0.0
    %2565 = vmatpush1.msra.mxu0 0.0
    %2566 = vmatprep.subr.mxu0 0.0
    %2567 = vmatpush1.msra.mxu0 0.0
    %2568 = vmatprep.subr.mxu0 0.0
    %2569 = vmatpush1.msra.mxu0 0.0
    %2570 = vmatprep.subr.mxu0 0.0
    %2571 = vmatpush1.msra.mxu0 0.0
    %2572 = vmatprep.subr.mxu0 0.0
    %2573 = vmatpush1.msra.mxu0 0.0
    %2574 = vmatprep.mubr.f32.mxu0 0.0
    %2575 = vmatmul.mubr.f32.gmra.mrb[0].mxu0 %v1961
    %v2576 = vpop.f32.mrb[0].mxu0
    %v2577 = vadd.f32 0.0, %v2576
    %v2578 = vpop.f32.mrb[0].mxu0
    %2579 = vmatprep.mubr.f32.mxu0 0.0
    %2580 = vmatmul.mubr.f32.gmra.mrb[0].mxu0 %v2035
    %v2581 = vpop.f32.mrb[0].mxu0
    %v2582 = vadd.f32 0.0, %v2581
    %v2583 = vpop.f32.mrb[0].mxu0
    %2584 = vdwg.mxu0
    %v2586 = vsel %vm270, %v2434, 0
    %v2589 = vsel %vm270, %v2502, 0
    %v2592 = vsel %vm270, %v2507, 0
    %2594 = vmatprep.subr.mxu0 0.0
    %2595 = vmatpush1.xpose.msra.mxu0 %v2589
    %2596 = vmatprep.subr.mxu0 0.0
    %2597 = vmatpush1.xpose.msra.mxu0 %v2592
    %2598 = vmatprep.subr.mxu0 0.0
    %2599 = vmatpush1.xpose.msra.mxu0 0.0
    %2600 = vmatprep.subr.mxu0 0.0
    %2601 = vmatpush1.xpose.msra.mxu0 0.0
    %2602 = vmatprep.subr.mxu0 0.0
    %2603 = vmatpush1.xpose.msra.mxu0 0.0
    %2604 = vmatprep.subr.mxu0 0.0
    %2605 = vmatpush1.xpose.msra.mxu0 0.0
    %2606 = vmatprep.subr.mxu0 0.0
    %2607 = vmatpush1.xpose.msra.mxu0 0.0
    %2608 = vmatprep.subr.mxu0 0.0
    %2609 = vmatpush1.xpose.msra.mxu0 0.0
    %2610 = vmatprep.subr.mxu0 0.0
    %2611 = vmatpush1.xpose.msra.mxu0 0.0
    %2612 = vmatprep.subr.mxu0 0.0
    %2613 = vmatpush1.xpose.msra.mxu0 0.0
    %2614 = vmatprep.subr.mxu0 0.0
    %2615 = vmatpush1.xpose.msra.mxu0 0.0
    %2616 = vmatprep.subr.mxu0 0.0
    %2617 = vmatpush1.xpose.msra.mxu0 0.0
    %2618 = vmatprep.subr.mxu0 0.0
    %2619 = vmatpush1.xpose.msra.mxu0 0.0
    %2620 = vmatprep.subr.mxu0 0.0
    %2621 = vmatpush1.xpose.msra.mxu0 0.0
    %2622 = vmatprep.subr.mxu0 0.0
    %2623 = vmatpush1.xpose.msra.mxu0 0.0
    %2624 = vmatprep.subr.mxu0 0.0
    %2625 = vmatpush1.xpose.msra.mxu0 0.0
    %2626 = vmatprep.subr.mxu0 0.0
    %2627 = vmatpush1.xpose.msra.mxu0 0.0
    %2628 = vmatprep.subr.mxu0 0.0
    %2629 = vmatpush1.xpose.msra.mxu0 0.0
    %2630 = vmatprep.subr.mxu0 0.0
    %2631 = vmatpush1.xpose.msra.mxu0 0.0
    %2632 = vmatprep.subr.mxu0 0.0
    %2633 = vmatpush1.xpose.msra.mxu0 0.0
    %2634 = vmatprep.subr.mxu0 0.0
    %2635 = vmatpush1.xpose.msra.mxu0 0.0
    %2636 = vmatprep.subr.mxu0 0.0
    %2637 = vmatpush1.xpose.msra.mxu0 0.0
    %2638 = vmatprep.subr.mxu0 0.0
    %2639 = vmatpush1.xpose.msra.mxu0 0.0
    %2640 = vmatprep.subr.mxu0 0.0
    %2641 = vmatpush1.xpose.msra.mxu0 0.0
    %2642 = vmatprep.subr.mxu0 0.0
    %2643 = vmatpush1.xpose.msra.mxu0 0.0
    %2644 = vmatprep.subr.mxu0 0.0
    %2645 = vmatpush1.xpose.msra.mxu0 0.0
    %2646 = vmatprep.subr.mxu0 0.0
    %2647 = vmatpush1.xpose.msra.mxu0 0.0
    %2648 = vmatprep.subr.mxu0 0.0
    %2649 = vmatpush1.xpose.msra.mxu0 0.0
    %2650 = vmatprep.subr.mxu0 0.0
    %2651 = vmatpush1.xpose.msra.mxu0 0.0
    %2652 = vmatprep.subr.mxu0 0.0
    %2653 = vmatpush1.xpose.msra.mxu0 0.0
    %2654 = vmatprep.subr.mxu0 0.0
    %2655 = vmatpush1.xpose.msra.mxu0 0.0
    %2656 = vmatprep.subr.mxu0 0.0
    %2657 = vmatpush1.xpose.msra.mxu0 0.0
    %2658 = vmatprep.mubr.f32.mxu0 0.0
    %2659 = vmatmul.mubr.f32.gmra.mrb[0].mxu0 %v2586
    %v2660 = vpop.f32.mrb[0].mxu0
    %v2661 = vadd.f32 0.0, %v2660
    %v2662 = vpop.f32.mrb[0].mxu0
    %2663 = vdwg.mxu0
    %v2664 = vsel %vm270, %v2661, -inf
    %2665 = vmax.xlane.f32.xlu0 %v2664
    %v2666 = vpop.xlane.xlu0 %2665
    %v2667 = vsub.f32 %v2661, %v2666
    %v2668 = vmul.f32 %v2667, 1.442695
    %v2669 = vpow.pop %v2668
    %v2670 = vsel %vm270, %v2669, 0.0
    %2671 = vadd.xlane.f32.xlu0 %v2670
    %v2672 = vpop.xlane.xlu0 %2671
    %v2673 = vrcp.pop %v2672
    %v2674 = vmul.f32 %v2669, %v2673
    %v2676 = vsel %vm270, %v2674, 0
    %2678 = vmatprep.subr.mxu0 0.0
    %2679 = vmatpush1.msra.mxu0 %v2577
    %2680 = vmatprep.subr.mxu0 0.0
    %2681 = vmatpush1.msra.mxu0 %v2582
    %2682 = vmatprep.subr.mxu0 0.0
    %2683 = vmatpush1.msra.mxu0 0.0
    %2684 = vmatprep.subr.mxu0 0.0
    %2685 = vmatpush1.msra.mxu0 0.0
    %2686 = vmatprep.subr.mxu0 0.0
    %2687 = vmatpush1.msra.mxu0 0.0
    %2688 = vmatprep.subr.mxu0 0.0
    %2689 = vmatpush1.msra.mxu0 0.0
    %2690 = vmatprep.subr.mxu0 0.0
    %2691 = vmatpush1.msra.mxu0 0.0
    %2692 = vmatprep.subr.mxu0 0.0
    %2693 = vmatpush1.msra.mxu0 0.0
    %2694 = vmatprep.subr.mxu0 0.0
    %2695 = vmatpush1.msra.mxu0 0.0
    %2696 = vmatprep.subr.mxu0 0.0
    %2697 = vmatpush1.msra.mxu0 0.0
    %2698 = vmatprep.subr.mxu0 0.0
    %2699 = vmatpush1.msra.mxu0 0.0
    %2700 = vmatprep.subr.mxu0 0.0
    %2701 = vmatpush1.msra.mxu0 0.0
    %2702 = vmatprep.subr.mxu0 0.0
    %2703 = vmatpush1.msra.mxu0 0.0
    %2704 = vmatprep.subr.mxu0 0.0
    %2705 = vmatpush1.msra.mxu0 0.0
    %2706 = vmatprep.subr.mxu0 0.0
    %2707 = vmatpush1.msra.mxu0 0.0
    %2708 = vmatprep.subr.mxu0 0.0
    %2709 = vmatpush1.msra.mxu0 0.0
    %2710 = vmatprep.subr.mxu0 0.0
    %2711 = vmatpush1.msra.mxu0 0.0
    %2712 = vmatprep.subr.mxu0 0.0
    %2713 = vmatpush1.msra.mxu0 0.0
    %2714 = vmatprep.subr.mxu0 0.0
    %2715 = vmatpush1.msra.mxu0 0.0
    %2716 = vmatprep.subr.mxu0 0.0
    %2717 = vmatpush1.msra.mxu0 0.0
    %2718 = vmatprep.subr.mxu0 0.0
    %2719 = vmatpush1.msra.mxu0 0.0
    %2720 = vmatprep.subr.mxu0 0.0
    %2721 = vmatpush1.msra.mxu0 0.0
    %2722 = vmatprep.subr.mxu0 0.0
    %2723 = vmatpush1.msra.mxu0 0.0
    %2724 = vmatprep.subr.mxu0 0.0
    %2725 = vmatpush1.msra.mxu0 0.0
    %2726 = vmatprep.subr.mxu0 0.0
    %2727 = vmatpush1.msra.mxu0 0.0
    %2728 = vmatprep.subr.mxu0 0.0
    %2729 = vmatpush1.msra.mxu0 0.0
    %2730 = vmatprep.subr.mxu0 0.0
    %2731 = vmatpush1.msra.mxu0 0.0
    %2732 = vmatprep.subr.mxu0 0.0
    %2733 = vmatpush1.msra.mxu0 0.0
    %2734 = vmatprep.subr.mxu0 0.0
    %2735 = vmatpush1.msra.mxu0 0.0
    %2736 = vmatprep.subr.mxu0 0.0
    %2737 = vmatpush1.msra.mxu0 0.0
    %2738 = vmatprep.subr.mxu0 0.0
    %2739 = vmatpush1.msra.mxu0 0.0
    %2740 = vmatprep.subr.mxu0 0.0
    %2741 = vmatpush1.msra.mxu0 0.0
    %2742 = vmatprep.mubr.f32.mxu0 0.0
    %2743 = vmatmul.mubr.f32.gmra.mrb[0].mxu0 %v2676
    %v2744 = vpop.f32.mrb[0].mxu0
    %v2745 = vadd.f32 0.0, %v2744
    %v2746 = vpop.f32.mrb[0].mxu0
    %2747 = vdwg.mxu0
    %v2748 = vld [vmem:[%s835] sm:$0xff]
    %v2749 = vld [vmem:[%s835 + $0x8] sm:$0xff]
    %v2751 = vsel %vm270, %v2745, 0
    %2753 = vmatprep.subr.mxu0 0.0
    %2754 = vmatpush1.msra.mxu0 %v2748
    %2755 = vmatprep.subr.mxu0 0.0
    %2756 = vmatpush1.msra.mxu0 %v2749
    %2757 = vmatprep.subr.mxu0 0.0
    %2758 = vmatpush1.msra.mxu0 0.0
    %2759 = vmatprep.subr.mxu0 0.0
    %2760 = vmatpush1.msra.mxu0 0.0
    %2761 = vmatprep.subr.mxu0 0.0
    %2762 = vmatpush1.msra.mxu0 0.0
    %2763 = vmatprep.subr.mxu0 0.0
    %2764 = vmatpush1.msra.mxu0 0.0
    %2765 = vmatprep.subr.mxu0 0.0
    %2766 = vmatpush1.msra.mxu0 0.0
    %2767 = vmatprep.subr.mxu0 0.0
    %2768 = vmatpush1.msra.mxu0 0.0
    %2769 = vmatprep.subr.mxu0 0.0
    %2770 = vmatpush1.msra.mxu0 0.0
    %2771 = vmatprep.subr.mxu0 0.0
    %2772 = vmatpush1.msra.mxu0 0.0
    %2773 = vmatprep.subr.mxu0 0.0
    %2774 = vmatpush1.msra.mxu0 0.0
    %2775 = vmatprep.subr.mxu0 0.0
    %2776 = vmatpush1.msra.mxu0 0.0
    %2777 = vmatprep.subr.mxu0 0.0
    %2778 = vmatpush1.msra.mxu0 0.0
    %2779 = vmatprep.subr.mxu0 0.0
    %2780 = vmatpush1.msra.mxu0 0.0
    %2781 = vmatprep.subr.mxu0 0.0
    %2782 = vmatpush1.msra.mxu0 0.0
    %2783 = vmatprep.subr.mxu0 0.0
    %2784 = vmatpush1.msra.mxu0 0.0
    %2785 = vmatprep.subr.mxu0 0.0
    %2786 = vmatpush1.msra.mxu0 0.0
    %2787 = vmatprep.subr.mxu0 0.0
    %2788 = vmatpush1.msra.mxu0 0.0
    %2789 = vmatprep.subr.mxu0 0.0
    %2790 = vmatpush1.msra.mxu0 0.0
    %2791 = vmatprep.subr.mxu0 0.0
    %2792 = vmatpush1.msra.mxu0 0.0
    %2793 = vmatprep.subr.mxu0 0.0
    %2794 = vmatpush1.msra.mxu0 0.0
    %2795 = vmatprep.subr.mxu0 0.0
    %2796 = vmatpush1.msra.mxu0 0.0
    %2797 = vmatprep.subr.mxu0 0.0
    %2798 = vmatpush1.msra.mxu0 0.0
    %2799 = vmatprep.subr.mxu0 0.0
    %2800 = vmatpush1.msra.mxu0 0.0
    %2801 = vmatprep.subr.mxu0 0.0
    %2802 = vmatpush1.msra.mxu0 0.0
    %2803 = vmatprep.subr.mxu0 0.0
    %2804 = vmatpush1.msra.mxu0 0.0
    %2805 = vmatprep.subr.mxu0 0.0
    %2806 = vmatpush1.msra.mxu0 0.0
    %2807 = vmatprep.subr.mxu0 0.0
    %2808 = vmatpush1.msra.mxu0 0.0
    %2809 = vmatprep.subr.mxu0 0.0
    %2810 = vmatpush1.msra.mxu0 0.0
    %2811 = vmatprep.subr.mxu0 0.0
    %2812 = vmatpush1.msra.mxu0 0.0
    %2813 = vmatprep.subr.mxu0 0.0
    %2814 = vmatpush1.msra.mxu0 0.0
    %2815 = vmatprep.subr.mxu0 0.0
    %2816 = vmatpush1.msra.mxu0 0.0
    %2817 = vmatprep.mubr.f32.mxu0 0.0
    %2818 = vmatmul.mubr.f32.gmra.mrb[0].mxu0 %v2751
    %v2819 = vpop.f32.mrb[0].mxu0
    %v2820 = vadd.f32 0.0, %v2819
    %v2821 = vpop.f32.mrb[0].mxu0
    %2822 = vdwg.mxu0
    %v2824 = vsel %vm270, %v2347, 0
    %2826 = vmatprep.subr.mxu0 0.0
    %2827 = vmatpush1.msra.mxu0 %v2350
    %2828 = vmatprep.subr.mxu0 0.0
    %2829 = vmatpush1.msra.mxu0 %v2351
    %2830 = vmatprep.subr.mxu0 0.0
    %2831 = vmatpush1.msra.mxu0 0.0
    %2832 = vmatprep.subr.mxu0 0.0
    %2833 = vmatpush1.msra.mxu0 0.0
    %2834 = vmatprep.subr.mxu0 0.0
    %2835 = vmatpush1.msra.mxu0 0.0
    %2836 = vmatprep.subr.mxu0 0.0
    %2837 = vmatpush1.msra.mxu0 0.0
    %2838 = vmatprep.subr.mxu0 0.0
    %2839 = vmatpush1.msra.mxu0 0.0
    %2840 = vmatprep.subr.mxu0 0.0
    %2841 = vmatpush1.msra.mxu0 0.0
    %2842 = vmatprep.subr.mxu0 0.0
    %2843 = vmatpush1.msra.mxu0 0.0
    %2844 = vmatprep.subr.mxu0 0.0
    %2845 = vmatpush1.msra.mxu0 0.0
    %2846 = vmatprep.subr.mxu0 0.0
    %2847 = vmatpush1.msra.mxu0 0.0
    %2848 = vmatprep.subr.mxu0 0.0
    %2849 = vmatpush1.msra.mxu0 0.0
    %2850 = vmatprep.subr.mxu0 0.0
    %2851 = vmatpush1.msra.mxu0 0.0
    %2852 = vmatprep.subr.mxu0 0.0
    %2853 = vmatpush1.msra.mxu0 0.0
    %2854 = vmatprep.subr.mxu0 0.0
    %2855 = vmatpush1.msra.mxu0 0.0
    %2856 = vmatprep.subr.mxu0 0.0
    %2857 = vmatpush1.msra.mxu0 0.0
    %2858 = vmatprep.subr.mxu0 0.0
    %2859 = vmatpush1.msra.mxu0 0.0
    %2860 = vmatprep.subr.mxu0 0.0
    %2861 = vmatpush1.msra.mxu0 0.0
    %2862 = vmatprep.subr.mxu0 0.0
    %2863 = vmatpush1.msra.mxu0 0.0
    %2864 = vmatprep.subr.mxu0 0.0
    %2865 = vmatpush1.msra.mxu0 0.0
    %2866 = vmatprep.subr.mxu0 0.0
    %2867 = vmatpush1.msra.mxu0 0.0
    %2868 = vmatprep.subr.mxu0 0.0
    %2869 = vmatpush1.msra.mxu0 0.0
    %2870 = vmatprep.subr.mxu0 0.0
    %2871 = vmatpush1.msra.mxu0 0.0
    %2872 = vmatprep.subr.mxu0 0.0
    %2873 = vmatpush1.msra.mxu0 0.0
    %2874 = vmatprep.subr.mxu0 0.0
    %2875 = vmatpush1.msra.mxu0 0.0
    %2876 = vmatprep.subr.mxu0 0.0
    %2877 = vmatpush1.msra.mxu0 0.0
    %2878 = vmatprep.subr.mxu0 0.0
    %2879 = vmatpush1.msra.mxu0 0.0
    %2880 = vmatprep.subr.mxu0 0.0
    %2881 = vmatpush1.msra.mxu0 0.0
    %2882 = vmatprep.subr.mxu0 0.0
    %2883 = vmatpush1.msra.mxu0 0.0
    %2884 = vmatprep.subr.mxu0 0.0
    %2885 = vmatpush1.msra.mxu0 0.0
    %2886 = vmatprep.subr.mxu0 0.0
    %2887 = vmatpush1.msra.mxu0 0.0
    %2888 = vmatprep.subr.mxu0 0.0
    %2889 = vmatpush1.msra.mxu0 0.0
    %2890 = vmatprep.mubr.f32.mxu0 0.0
    %2891 = vmatmul.mubr.f32.gmra.mrb[0].mxu0 %v2824
    %v2892 = vpop.f32.mrb[0].mxu0
    %v2893 = vadd.f32 %v2820, %v2892
    %v2894 = vpop.f32.mrb[0].mxu0
    %2895 = vdwg.mxu0
    %v2896 = vld [vmem:[%s984] sm:$0xff]
    %v2897 = vld [vmem:[%s984 + $0x8] sm:$0xff]
    %v2898 = vld [vmem:[%s984 + $0x10] sm:$0xff]
    %v2899 = vld [vmem:[%s984 + $0x18] sm:$0xff]
    %v2900 = vld [vmem:[%s989] sm:$0xff]
    %v2901 = vld [vmem:[%s989 + $0x8] sm:$0xff]
    %v2902 = vld [vmem:[%s989 + $0x10] sm:$0xff]
    %v2903 = vld [vmem:[%s989 + $0x18] sm:$0xff]
    %v2904 = vld [vmem:[%s994] sm:$0xff]
    %v2905 = vld [vmem:[%s994 + $0x8] sm:$0xff]
    %v2906 = vld [vmem:[%s994 + $0x10] sm:$0xff]
    %v2907 = vld [vmem:[%s994 + $0x18] sm:$0xff]
    %2908 = vmatprep.subr.mxu0 0.0
    %2909 = vmatpush1.msra.mxu0 %v2896
    %2910 = vmatprep.subr.mxu0 0.0
    %2911 = vmatpush1.msra.mxu0 %v2897
    %2912 = vmatprep.subr.mxu0 0.0
    %2913 = vmatpush1.msra.mxu0 %v2898
    %2914 = vmatprep.subr.mxu0 0.0
    %2915 = vmatpush1.msra.mxu0 %v2899
    %2916 = vmatprep.subr.mxu0 0.0
    %2917 = vmatpush1.msra.mxu0 0.0
    %2918 = vmatprep.subr.mxu0 0.0
    %2919 = vmatpush1.msra.mxu0 0.0
    %2920 = vmatprep.subr.mxu0 0.0
    %2921 = vmatpush1.msra.mxu0 0.0
    %2922 = vmatprep.subr.mxu0 0.0
    %2923 = vmatpush1.msra.mxu0 0.0
    %2924 = vmatprep.subr.mxu0 0.0
    %2925 = vmatpush1.msra.mxu0 0.0
    %2926 = vmatprep.subr.mxu0 0.0
    %2927 = vmatpush1.msra.mxu0 0.0
    %2928 = vmatprep.subr.mxu0 0.0
    %2929 = vmatpush1.msra.mxu0 0.0
    %2930 = vmatprep.subr.mxu0 0.0
    %2931 = vmatpush1.msra.mxu0 0.0
    %2932 = vmatprep.subr.mxu0 0.0
    %2933 = vmatpush1.msra.mxu0 0.0
    %2934 = vmatprep.subr.mxu0 0.0
    %2935 = vmatpush1.msra.mxu0 0.0
    %2936 = vmatprep.subr.mxu0 0.0
    %2937 = vmatpush1.msra.mxu0 0.0
    %2938 = vmatprep.subr.mxu0 0.0
    %2939 = vmatpush1.msra.mxu0 0.0
    %2940 = vmatprep.subr.mxu0 0.0
    %2941 = vmatpush1.msra.mxu0 0.0
    %2942 = vmatprep.subr.mxu0 0.0
    %2943 = vmatpush1.msra.mxu0 0.0
    %2944 = vmatprep.subr.mxu0 0.0
    %2945 = vmatpush1.msra.mxu0 0.0
    %2946 = vmatprep.subr.mxu0 0.0
    %2947 = vmatpush1.msra.mxu0 0.0
    %2948 = vmatprep.subr.mxu0 0.0
    %2949 = vmatpush1.msra.mxu0 0.0
    %2950 = vmatprep.subr.mxu0 0.0
    %2951 = vmatpush1.msra.mxu0 0.0
    %2952 = vmatprep.subr.mxu0 0.0
    %2953 = vmatpush1.msra.mxu0 0.0
    %2954 = vmatprep.subr.mxu0 0.0
    %2955 = vmatpush1.msra.mxu0 0.0
    %2956 = vmatprep.subr.mxu0 0.0
    %2957 = vmatpush1.msra.mxu0 0.0
    %2958 = vmatprep.subr.mxu0 0.0
    %2959 = vmatpush1.msra.mxu0 0.0
    %2960 = vmatprep.subr.mxu0 0.0
    %2961 = vmatpush1.msra.mxu0 0.0
    %2962 = vmatprep.subr.mxu0 0.0
    %2963 = vmatpush1.msra.mxu0 0.0
    %2964 = vmatprep.subr.mxu0 0.0
    %2965 = vmatpush1.msra.mxu0 0.0
    %2966 = vmatprep.subr.mxu0 0.0
    %2967 = vmatpush1.msra.mxu0 0.0
    %2968 = vmatprep.subr.mxu0 0.0
    %2969 = vmatpush1.msra.mxu0 0.0
    %2970 = vmatprep.subr.mxu0 0.0
    %2971 = vmatpush1.msra.mxu0 0.0
    %2972 = vmatprep.mubr.f32.mxu0 0.0
    %2973 = vmatmul.mubr.f32.gmra.mrb[0].mxu0 %v1961
    %v2974 = vpop.f32.mrb[0].mxu0
    %v2975 = vadd.f32 0.0, %v2974
    %v2976 = vpop.f32.mrb[0].mxu0
    %2977 = vdwg.mxu0
    %v2978 = vmul.f32 %v2975, 0.25
    %2979 = vmatprep.subr.mxu0 0.0
    %2980 = vmatpush1.msra.mxu0 %v2900
    %2981 = vmatprep.subr.mxu0 0.0
    %2982 = vmatpush1.msra.mxu0 %v2901
    %2983 = vmatprep.subr.mxu0 0.0
    %2984 = vmatpush1.msra.mxu0 %v2902
    %2985 = vmatprep.subr.mxu0 0.0
    %2986 = vmatpush1.msra.mxu0 %v2903
    %2987 = vmatprep.subr.mxu0 0.0
    %2988 = vmatpush1.msra.mxu0 0.0
    %2989 = vmatprep.subr.mxu0 0.0
    %2990 = vmatpush1.msra.mxu0 0.0
    %2991 = vmatprep.subr.mxu0 0.0
    %2992 = vmatpush1.msra.mxu0 0.0
    %2993 = vmatprep.subr.mxu0 0.0
    %2994 = vmatpush1.msra.mxu0 0.0
    %2995 = vmatprep.subr.mxu0 0.0
    %2996 = vmatpush1.msra.mxu0 0.0
    %2997 = vmatprep.subr.mxu0 0.0
    %2998 = vmatpush1.msra.mxu0 0.0
    %2999 = vmatprep.subr.mxu0 0.0
    %3000 = vmatpush1.msra.mxu0 0.0
    %3001 = vmatprep.subr.mxu0 0.0
    %3002 = vmatpush1.msra.mxu0 0.0
    %3003 = vmatprep.subr.mxu0 0.0
    %3004 = vmatpush1.msra.mxu0 0.0
    %3005 = vmatprep.subr.mxu0 0.0
    %3006 = vmatpush1.msra.mxu0 0.0
    %3007 = vmatprep.subr.mxu0 0.0
    %3008 = vmatpush1.msra.mxu0 0.0
    %3009 = vmatprep.subr.mxu0 0.0
    %3010 = vmatpush1.msra.mxu0 0.0
    %3011 = vmatprep.subr.mxu0 0.0
    %3012 = vmatpush1.msra.mxu0 0.0
    %3013 = vmatprep.subr.mxu0 0.0
    %3014 = vmatpush1.msra.mxu0 0.0
    %3015 = vmatprep.subr.mxu0 0.0
    %3016 = vmatpush1.msra.mxu0 0.0
    %3017 = vmatprep.subr.mxu0 0.0
    %3018 = vmatpush1.msra.mxu0 0.0
    %3019 = vmatprep.subr.mxu0 0.0
    %3020 = vmatpush1.msra.mxu0 0.0
    %3021 = vmatprep.subr.mxu0 0.0
    %3022 = vmatpush1.msra.mxu0 0.0
    %3023 = vmatprep.subr.mxu0 0.0
    %3024 = vmatpush1.msra.mxu0 0.0
    %3025 = vmatprep.subr.mxu0 0.0
    %3026 = vmatpush1.msra.mxu0 0.0
    %3027 = vmatprep.subr.mxu0 0.0
    %3028 = vmatpush1.msra.mxu0 0.0
    %3029 = vmatprep.subr.mxu0 0.0
    %3030 = vmatpush1.msra.mxu0 0.0
    %3031 = vmatprep.subr.mxu0 0.0
    %3032 = vmatpush1.msra.mxu0 0.0
    %3033 = vmatprep.subr.mxu0 0.0
    %3034 = vmatpush1.msra.mxu0 0.0
    %3035 = vmatprep.subr.mxu0 0.0
    %3036 = vmatpush1.msra.mxu0 0.0
    %3037 = vmatprep.subr.mxu0 0.0
    %3038 = vmatpush1.msra.mxu0 0.0
    %3039 = vmatprep.subr.mxu0 0.0
    %3040 = vmatpush1.msra.mxu0 0.0
    %3041 = vmatprep.subr.mxu0 0.0
    %3042 = vmatpush1.msra.mxu0 0.0
    %3043 = vmatprep.mubr.f32.mxu0 0.0
    %3044 = vmatmul.mubr.f32.gmra.mrb[0].mxu0 %v1961
    %v3045 = vpop.f32.mrb[0].mxu0
    %v3046 = vadd.f32 0.0, %v3045
    %v3047 = vpop.f32.mrb[0].mxu0
    %3048 = vmatprep.mubr.f32.mxu0 0.0
    %3049 = vmatmul.mubr.f32.gmra.mrb[0].mxu0 %v2035
    %v3050 = vpop.f32.mrb[0].mxu0
    %v3051 = vadd.f32 0.0, %v3050
    %v3052 = vpop.f32.mrb[0].mxu0
    %3053 = vdwg.mxu0
    %3054 = vmatprep.subr.mxu0 0.0
    %3055 = vmatpush1.msra.mxu0 %v2904
    %3056 = vmatprep.subr.mxu0 0.0
    %3057 = vmatpush1.msra.mxu0 %v2905
    %3058 = vmatprep.subr.mxu0 0.0
    %3059 = vmatpush1.msra.mxu0 %v2906
    %3060 = vmatprep.subr.mxu0 0.0
    %3061 = vmatpush1.msra.mxu0 %v2907
    %3062 = vmatprep.subr.mxu0 0.0
    %3063 = vmatpush1.msra.mxu0 0.0
    %3064 = vmatprep.subr.mxu0 0.0
    %3065 = vmatpush1.msra.mxu0 0.0
    %3066 = vmatprep.subr.mxu0 0.0
    %3067 = vmatpush1.msra.mxu0 0.0
    %3068 = vmatprep.subr.mxu0 0.0
    %3069 = vmatpush1.msra.mxu0 0.0
    %3070 = vmatprep.subr.mxu0 0.0
    %3071 = vmatpush1.msra.mxu0 0.0
    %3072 = vmatprep.subr.mxu0 0.0
    %3073 = vmatpush1.msra.mxu0 0.0
    %3074 = vmatprep.subr.mxu0 0.0
    %3075 = vmatpush1.msra.mxu0 0.0
    %3076 = vmatprep.subr.mxu0 0.0
    %3077 = vmatpush1.msra.mxu0 0.0
    %3078 = vmatprep.subr.mxu0 0.0
    %3079 = vmatpush1.msra.mxu0 0.0
    %3080 = vmatprep.subr.mxu0 0.0
    %3081 = vmatpush1.msra.mxu0 0.0
    %3082 = vmatprep.subr.mxu0 0.0
    %3083 = vmatpush1.msra.mxu0 0.0
    %3084 = vmatprep.subr.mxu0 0.0
    %3085 = vmatpush1.msra.mxu0 0.0
    %3086 = vmatprep.subr.mxu0 0.0
    %3087 = vmatpush1.msra.mxu0 0.0
    %3088 = vmatprep.subr.mxu0 0.0
    %3089 = vmatpush1.msra.mxu0 0.0
    %3090 = vmatprep.subr.mxu0 0.0
    %3091 = vmatpush1.msra.mxu0 0.0
    %3092 = vmatprep.subr.mxu0 0.0
    %3093 = vmatpush1.msra.mxu0 0.0
    %3094 = vmatprep.subr.mxu0 0.0
    %3095 = vmatpush1.msra.mxu0 0.0
    %3096 = vmatprep.subr.mxu0 0.0
    %3097 = vmatpush1.msra.mxu0 0.0
    %3098 = vmatprep.subr.mxu0 0.0
    %3099 = vmatpush1.msra.mxu0 0.0
    %3100 = vmatprep.subr.mxu0 0.0
    %3101 = vmatpush1.msra.mxu0 0.0
    %3102 = vmatprep.subr.mxu0 0.0
    %3103 = vmatpush1.msra.mxu0 0.0
    %3104 = vmatprep.subr.mxu0 0.0
    %3105 = vmatpush1.msra.mxu0 0.0
    %3106 = vmatprep.subr.mxu0 0.0
    %3107 = vmatpush1.msra.mxu0 0.0
    %3108 = vmatprep.subr.mxu0 0.0
    %3109 = vmatpush1.msra.mxu0 0.0
    %3110 = vmatprep.subr.mxu0 0.0
    %3111 = vmatpush1.msra.mxu0 0.0
    %3112 = vmatprep.subr.mxu0 0.0
    %3113 = vmatpush1.msra.mxu0 0.0
    %3114 = vmatprep.subr.mxu0 0.0
    %3115 = vmatpush1.msra.mxu0 0.0
    %3116 = vmatprep.subr.mxu0 0.0
    %3117 = vmatpush1.msra.mxu0 0.0
    %3118 = vmatprep.mubr.f32.mxu0 0.0
    %3119 = vmatmul.mubr.f32.gmra.mrb[0].mxu0 %v1961
    %v3120 = vpop.f32.mrb[0].mxu0
    %v3121 = vadd.f32 0.0, %v3120
    %v3122 = vpop.f32.mrb[0].mxu0
    %3123 = vmatprep.mubr.f32.mxu0 0.0
    %3124 = vmatmul.mubr.f32.gmra.mrb[0].mxu0 %v2035
    %v3125 = vpop.f32.mrb[0].mxu0
    %v3126 = vadd.f32 0.0, %v3125
    %v3127 = vpop.f32.mrb[0].mxu0
    %3128 = vdwg.mxu0
    %v3130 = vsel %vm270, %v2978, 0
    %v3133 = vsel %vm270, %v3046, 0
    %v3136 = vsel %vm270, %v3051, 0
    %3138 = vmatprep.subr.mxu0 0.0
    %3139 = vmatpush1.xpose.msra.mxu0 %v3133
    %3140 = vmatprep.subr.mxu0 0.0
    %3141 = vmatpush1.xpose.msra.mxu0 %v3136
    %3142 = vmatprep.subr.mxu0 0.0
    %3143 = vmatpush1.xpose.msra.mxu0 0.0
    %3144 = vmatprep.subr.mxu0 0.0
    %3145 = vmatpush1.xpose.msra.mxu0 0.0
    %3146 = vmatprep.subr.mxu0 0.0
    %3147 = vmatpush1.xpose.msra.mxu0 0.0
    %3148 = vmatprep.subr.mxu0 0.0
    %3149 = vmatpush1.xpose.msra.mxu0 0.0
    %3150 = vmatprep.subr.mxu0 0.0
    %3151 = vmatpush1.xpose.msra.mxu0 0.0
    %3152 = vmatprep.subr.mxu0 0.0
    %3153 = vmatpush1.xpose.msra.mxu0 0.0
    %3154 = vmatprep.subr.mxu0 0.0
    %3155 = vmatpush1.xpose.msra.mxu0 0.0
    %3156 = vmatprep.subr.mxu0 0.0
    %3157 = vmatpush1.xpose.msra.mxu0 0.0
    %3158 = vmatprep.subr.mxu0 0.0
    %3159 = vmatpush1.xpose.msra.mxu0 0.0
    %3160 = vmatprep.subr.mxu0 0.0
    %3161 = vmatpush1.xpose.msra.mxu0 0.0
    %3162 = vmatprep.subr.mxu0 0.0
    %3163 = vmatpush1.xpose.msra.mxu0 0.0
    %3164 = vmatprep.subr.mxu0 0.0
    %3165 = vmatpush1.xpose.msra.mxu0 0.0
    %3166 = vmatprep.subr.mxu0 0.0
    %3167 = vmatpush1.xpose.msra.mxu0 0.0
    %3168 = vmatprep.subr.mxu0 0.0
    %3169 = vmatpush1.xpose.msra.mxu0 0.0
    %3170 = vmatprep.subr.mxu0 0.0
    %3171 = vmatpush1.xpose.msra.mxu0 0.0
    %3172 = vmatprep.subr.mxu0 0.0
    %3173 = vmatpush1.xpose.msra.mxu0 0.0
    %3174 = vmatprep.subr.mxu0 0.0
    %3175 = vmatpush1.xpose.msra.mxu0 0.0
    %3176 = vmatprep.subr.mxu0 0.0
    %3177 = vmatpush1.xpose.msra.mxu0 0.0
    %3178 = vmatprep.subr.mxu0 0.0
    %3179 = vmatpush1.xpose.msra.mxu0 0.0
    %3180 = vmatprep.subr.mxu0 0.0
    %3181 = vmatpush1.xpose.msra.mxu0 0.0
    %3182 = vmatprep.subr.mxu0 0.0
    %3183 = vmatpush1.xpose.msra.mxu0 0.0
    %3184 = vmatprep.subr.mxu0 0.0
    %3185 = vmatpush1.xpose.msra.mxu0 0.0
    %3186 = vmatprep.subr.mxu0 0.0
    %3187 = vmatpush1.xpose.msra.mxu0 0.0
    %3188 = vmatprep.subr.mxu0 0.0
    %3189 = vmatpush1.xpose.msra.mxu0 0.0
    %3190 = vmatprep.subr.mxu0 0.0
    %3191 = vmatpush1.xpose.msra.mxu0 0.0
    %3192 = vmatprep.subr.mxu0 0.0
    %3193 = vmatpush1.xpose.msra.mxu0 0.0
    %3194 = vmatprep.subr.mxu0 0.0
    %3195 = vmatpush1.xpose.msra.mxu0 0.0
    %3196 = vmatprep.subr.mxu0 0.0
    %3197 = vmatpush1.xpose.msra.mxu0 0.0
    %3198 = vmatprep.subr.mxu0 0.0
    %3199 = vmatpush1.xpose.msra.mxu0 0.0
    %3200 = vmatprep.subr.mxu0 0.0
    %3201 = vmatpush1.xpose.msra.mxu0 0.0
    %3202 = vmatprep.mubr.f32.mxu0 0.0
    %3203 = vmatmul.mubr.f32.gmra.mrb[0].mxu0 %v3130
    %v3204 = vpop.f32.mrb[0].mxu0
    %v3205 = vadd.f32 0.0, %v3204
    %v3206 = vpop.f32.mrb[0].mxu0
    %3207 = vdwg.mxu0
    %v3208 = vsel %vm270, %v3205, -inf
    %3209 = vmax.xlane.f32.xlu0 %v3208
    %v3210 = vpop.xlane.xlu0 %3209
    %v3211 = vsub.f32 %v3205, %v3210
    %v3212 = vmul.f32 %v3211, 1.442695
    %v3213 = vpow.pop %v3212
    %v3214 = vsel %vm270, %v3213, 0.0
    %3215 = vadd.xlane.f32.xlu0 %v3214
    %v3216 = vpop.xlane.xlu0 %3215
    %v3217 = vrcp.pop %v3216
    %v3218 = vmul.f32 %v3213, %v3217
    %v3220 = vsel %vm270, %v3218, 0
    %3222 = vmatprep.subr.mxu0 0.0
    %3223 = vmatpush1.msra.mxu0 %v3121
    %3224 = vmatprep.subr.mxu0 0.0
    %3225 = vmatpush1.msra.mxu0 %v3126
    %3226 = vmatprep.subr.mxu0 0.0
    %3227 = vmatpush1.msra.mxu0 0.0
    %3228 = vmatprep.subr.mxu0 0.0
    %3229 = vmatpush1.msra.mxu0 0.0
    %3230 = vmatprep.subr.mxu0 0.0
    %3231 = vmatpush1.msra.mxu0 0.0
    %3232 = vmatprep.subr.mxu0 0.0
    %3233 = vmatpush1.msra.mxu0 0.0
    %3234 = vmatprep.subr.mxu0 0.0
    %3235 = vmatpush1.msra.mxu0 0.0
    %3236 = vmatprep.subr.mxu0 0.0
    %3237 = vmatpush1.msra.mxu0 0.0
    %3238 = vmatprep.subr.mxu0 0.0
    %3239 = vmatpush1.msra.mxu0 0.0
    %3240 = vmatprep.subr.mxu0 0.0
    %3241 = vmatpush1.msra.mxu0 0.0
    %3242 = vmatprep.subr.mxu0 0.0
    %3243 = vmatpush1.msra.mxu0 0.0
    %3244 = vmatprep.subr.mxu0 0.0
    %3245 = vmatpush1.msra.mxu0 0.0
    %3246 = vmatprep.subr.mxu0 0.0
    %3247 = vmatpush1.msra.mxu0 0.0
    %3248 = vmatprep.subr.mxu0 0.0
    %3249 = vmatpush1.msra.mxu0 0.0
    %3250 = vmatprep.subr.mxu0 0.0
    %3251 = vmatpush1.msra.mxu0 0.0
    %3252 = vmatprep.subr.mxu0 0.0
    %3253 = vmatpush1.msra.mxu0 0.0
    %3254 = vmatprep.subr.mxu0 0.0
    %3255 = vmatpush1.msra.mxu0 0.0
    %3256 = vmatprep.subr.mxu0 0.0
    %3257 = vmatpush1.msra.mxu0 0.0
    %3258 = vmatprep.subr.mxu0 0.0
    %3259 = vmatpush1.msra.mxu0 0.0
    %3260 = vmatprep.subr.mxu0 0.0
    %3261 = vmatpush1.msra.mxu0 0.0
    %3262 = vmatprep.subr.mxu0 0.0
    %3263 = vmatpush1.msra.mxu0 0.0
    %3264 = vmatprep.subr.mxu0 0.0
    %3265 = vmatpush1.msra.mxu0 0.0
    %3266 = vmatprep.subr.mxu0 0.0
    %3267 = vmatpush1.msra.mxu0 0.0
    %3268 = vmatprep.subr.mxu0 0.0
    %3269 = vmatpush1.msra.mxu0 0.0
    %3270 = vmatprep.subr.mxu0 0.0
    %3271 = vmatpush1.msra.mxu0 0.0
    %3272 = vmatprep.subr.mxu0 0.0
    %3273 = vmatpush1.msra.mxu0 0.0
    %3274 = vmatprep.subr.mxu0 0.0
    %3275 = vmatpush1.msra.mxu0 0.0
    %3276 = vmatprep.subr.mxu0 0.0
    %3277 = vmatpush1.msra.mxu0 0.0
    %3278 = vmatprep.subr.mxu0 0.0
    %3279 = vmatpush1.msra.mxu0 0.0
    %3280 = vmatprep.subr.mxu0 0.0
    %3281 = vmatpush1.msra.mxu0 0.0
    %3282 = vmatprep.subr.mxu0 0.0
    %3283 = vmatpush1.msra.mxu0 0.0
    %3284 = vmatprep.subr.mxu0 0.0
    %3285 = vmatpush1.msra.mxu0 0.0
    %3286 = vmatprep.mubr.f32.mxu0 0.0
    %3287 = vmatmul.mubr.f32.gmra.mrb[0].mxu0 %v3220
    %v3288 = vpop.f32.mrb[0].mxu0
    %v3289 = vadd.f32 0.0, %v3288
    %v3290 = vpop.f32.mrb[0].mxu0
    %3291 = vdwg.mxu0
    %v3292 = vld [vmem:[%s1383] sm:$0xff]
    %v3293 = vld [vmem:[%s1383 + $0x8] sm:$0xff]
    %v3295 = vsel %vm270, %v3289, 0
    %3297 = vmatprep.subr.mxu0 0.0
    %3298 = vmatpush1.msra.mxu0 %v3292
    %3299 = vmatprep.subr.mxu0 0.0
    %3300 = vmatpush1.msra.mxu0 %v3293
    %3301 = vmatprep.subr.mxu0 0.0
    %3302 = vmatpush1.msra.mxu0 0.0
    %3303 = vmatprep.subr.mxu0 0.0
    %3304 = vmatpush1.msra.mxu0 0.0
    %3305 = vmatprep.subr.mxu0 0.0
    %3306 = vmatpush1.msra.mxu0 0.0
    %3307 = vmatprep.subr.mxu0 0.0
    %3308 = vmatpush1.msra.mxu0 0.0
    %3309 = vmatprep.subr.mxu0 0.0
    %3310 = vmatpush1.msra.mxu0 0.0
    %3311 = vmatprep.subr.mxu0 0.0
    %3312 = vmatpush1.msra.mxu0 0.0
    %3313 = vmatprep.subr.mxu0 0.0
    %3314 = vmatpush1.msra.mxu0 0.0
    %3315 = vmatprep.subr.mxu0 0.0
    %3316 = vmatpush1.msra.mxu0 0.0
    %3317 = vmatprep.subr.mxu0 0.0
    %3318 = vmatpush1.msra.mxu0 0.0
    %3319 = vmatprep.subr.mxu0 0.0
    %3320 = vmatpush1.msra.mxu0 0.0
    %3321 = vmatprep.subr.mxu0 0.0
    %3322 = vmatpush1.msra.mxu0 0.0
    %3323 = vmatprep.subr.mxu0 0.0
    %3324 = vmatpush1.msra.mxu0 0.0
    %3325 = vmatprep.subr.mxu0 0.0
    %3326 = vmatpush1.msra.mxu0 0.0
    %3327 = vmatprep.subr.mxu0 0.0
    %3328 = vmatpush1.msra.mxu0 0.0
    %3329 = vmatprep.subr.mxu0 0.0
    %3330 = vmatpush1.msra.mxu0 0.0
    %3331 = vmatprep.subr.mxu0 0.0
    %3332 = vmatpush1.msra.mxu0 0.0
    %3333 = vmatprep.subr.mxu0 0.0
    %3334 = vmatpush1.msra.mxu0 0.0
    %3335 = vmatprep.subr.mxu0 0.0
    %3336 = vmatpush1.msra.mxu0 0.0
    %3337 = vmatprep.subr.mxu0 0.0
    %3338 = vmatpush1.msra.mxu0 0.0
    %3339 = vmatprep.subr.mxu0 0.0
    %3340 = vmatpush1.msra.mxu0 0.0
    %3341 = vmatprep.subr.mxu0 0.0
    %3342 = vmatpush1.msra.mxu0 0.0
    %3343 = vmatprep.subr.mxu0 0.0
    %3344 = vmatpush1.msra.mxu0 0.0
    %3345 = vmatprep.subr.mxu0 0.0
    %3346 = vmatpush1.msra.mxu0 0.0
    %3347 = vmatprep.subr.mxu0 0.0
    %3348 = vmatpush1.msra.mxu0 0.0
    %3349 = vmatprep.subr.mxu0 0.0
    %3350 = vmatpush1.msra.mxu0 0.0
    %3351 = vmatprep.subr.mxu0 0.0
    %3352 = vmatpush1.msra.mxu0 0.0
    %3353 = vmatprep.subr.mxu0 0.0
    %3354 = vmatpush1.msra.mxu0 0.0
    %3355 = vmatprep.subr.mxu0 0.0
    %3356 = vmatpush1.msra.mxu0 0.0
    %3357 = vmatprep.subr.mxu0 0.0
    %3358 = vmatpush1.msra.mxu0 0.0
    %3359 = vmatprep.subr.mxu0 0.0
    %3360 = vmatpush1.msra.mxu0 0.0
    %3361 = vmatprep.mubr.f32.mxu0 0.0
    %3362 = vmatmul.mubr.f32.gmra.mrb[0].mxu0 %v3295
    %v3363 = vpop.f32.mrb[0].mxu0
    %v3364 = vadd.f32 0.0, %v3363
    %v3365 = vpop.f32.mrb[0].mxu0
    %3366 = vdwg.mxu0
    %v3367 = vadd.f32 %v2893, %v3364
    %v3368 = vld [vmem:[%s1460] sm:$0xff]
    %v3369 = vld [vmem:[%s1460 + $0x8] sm:$0xff]
    %v3370 = vld [vmem:[%s1460 + $0x10] sm:$0xff]
    %v3371 = vld [vmem:[%s1460 + $0x18] sm:$0xff]
    %v3372 = vld [vmem:[%s1465] sm:$0xff]
    %v3373 = vld [vmem:[%s1465 + $0x8] sm:$0xff]
    %v3374 = vld [vmem:[%s1465 + $0x10] sm:$0xff]
    %v3375 = vld [vmem:[%s1465 + $0x18] sm:$0xff]
    %v3376 = vld [vmem:[%s1470] sm:$0xff]
    %v3377 = vld [vmem:[%s1470 + $0x8] sm:$0xff]
    %v3378 = vld [vmem:[%s1470 + $0x10] sm:$0xff]
    %v3379 = vld [vmem:[%s1470 + $0x18] sm:$0xff]
    %3380 = vmatprep.subr.mxu0 0.0
    %3381 = vmatpush1.msra.mxu0 %v3368
    %3382 = vmatprep.subr.mxu0 0.0
    %3383 = vmatpush1.msra.mxu0 %v3369
    %3384 = vmatprep.subr.mxu0 0.0
    %3385 = vmatpush1.msra.mxu0 %v3370
    %3386 = vmatprep.subr.mxu0 0.0
    %3387 = vmatpush1.msra.mxu0 %v3371
    %3388 = vmatprep.subr.mxu0 0.0
    %3389 = vmatpush1.msra.mxu0 0.0
    %3390 = vmatprep.subr.mxu0 0.0
    %3391 = vmatpush1.msra.mxu0 0.0
    %3392 = vmatprep.subr.mxu0 0.0
    %3393 = vmatpush1.msra.mxu0 0.0
    %3394 = vmatprep.subr.mxu0 0.0
    %3395 = vmatpush1.msra.mxu0 0.0
    %3396 = vmatprep.subr.mxu0 0.0
    %3397 = vmatpush1.msra.mxu0 0.0
    %3398 = vmatprep.subr.mxu0 0.0
    %3399 = vmatpush1.msra.mxu0 0.0
    %3400 = vmatprep.subr.mxu0 0.0
    %3401 = vmatpush1.msra.mxu0 0.0
    %3402 = vmatprep.subr.mxu0 0.0
    %3403 = vmatpush1.msra.mxu0 0.0
    %3404 = vmatprep.subr.mxu0 0.0
    %3405 = vmatpush1.msra.mxu0 0.0
    %3406 = vmatprep.subr.mxu0 0.0
    %3407 = vmatpush1.msra.mxu0 0.0
    %3408 = vmatprep.subr.mxu0 0.0
    %3409 = vmatpush1.msra.mxu0 0.0
    %3410 = vmatprep.subr.mxu0 0.0
    %3411 = vmatpush1.msra.mxu0 0.0
    %3412 = vmatprep.subr.mxu0 0.0
    %3413 = vmatpush1.msra.mxu0 0.0
    %3414 = vmatprep.subr.mxu0 0.0
    %3415 = vmatpush1.msra.mxu0 0.0
    %3416 = vmatprep.subr.mxu0 0.0
    %3417 = vmatpush1.msra.mxu0 0.0
    %3418 = vmatprep.subr.mxu0 0.0
    %3419 = vmatpush1.msra.mxu0 0.0
    %3420 = vmatprep.subr.mxu0 0.0
    %3421 = vmatpush1.msra.mxu0 0.0
    %3422 = vmatprep.subr.mxu0 0.0
    %3423 = vmatpush1.msra.mxu0 0.0
    %3424 = vmatprep.subr.mxu0 0.0
    %3425 = vmatpush1.msra.mxu0 0.0
    %3426 = vmatprep.subr.mxu0 0.0
    %3427 = vmatpush1.msra.mxu0 0.0
    %3428 = vmatprep.subr.mxu0 0.0
    %3429 = vmatpush1.msra.mxu0 0.0
    %3430 = vmatprep.subr.mxu0 0.0
    %3431 = vmatpush1.msra.mxu0 0.0
    %3432 = vmatprep.subr.mxu0 0.0
    %3433 = vmatpush1.msra.mxu0 0.0
    %3434 = vmatprep.subr.mxu0 0.0
    %3435 = vmatpush1.msra.mxu0 0.0
    %3436 = vmatprep.subr.mxu0 0.0
    %3437 = vmatpush1.msra.mxu0 0.0
    %3438 = vmatprep.subr.mxu0 0.0
    %3439 = vmatpush1.msra.mxu0 0.0
    %3440 = vmatprep.subr.mxu0 0.0
    %3441 = vmatpush1.msra.mxu0 0.0
    %3442 = vmatprep.subr.mxu0 0.0
    %3443 = vmatpush1.msra.mxu0 0.0
    %3444 = vmatprep.mubr.f32.mxu0 0.0
    %3445 = vmatmul.mubr.f32.gmra.mrb[0].mxu0 %v1961
    %v3446 = vpop.f32.mrb[0].mxu0
    %v3447 = vadd.f32 0.0, %v3446
    %v3448 = vpop.f32.mrb[0].mxu0
    %3449 = vdwg.mxu0
    %v3450 = vmul.f32 %v3447, 0.25
    %3451 = vmatprep.subr.mxu0 0.0
    %3452 = vmatpush1.msra.mxu0 %v3372
    %3453 = vmatprep.subr.mxu0 0.0
    %3454 = vmatpush1.msra.mxu0 %v3373
    %3455 = vmatprep.subr.mxu0 0.0
    %3456 = vmatpush1.msra.mxu0 %v3374
    %3457 = vmatprep.subr.mxu0 0.0
    %3458 = vmatpush1.msra.mxu0 %v3375
    %3459 = vmatprep.subr.mxu0 0.0
    %3460 = vmatpush1.msra.mxu0 0.0
    %3461 = vmatprep.subr.mxu0 0.0
    %3462 = vmatpush1.msra.mxu0 0.0
    %3463 = vmatprep.subr.mxu0 0.0
    %3464 = vmatpush1.msra.mxu0 0.0
    %3465 = vmatprep.subr.mxu0 0.0
    %3466 = vmatpush1.msra.mxu0 0.0
    %3467 = vmatprep.subr.mxu0 0.0
    %3468 = vmatpush1.msra.mxu0 0.0
    %3469 = vmatprep.subr.mxu0 0.0
    %3470 = vmatpush1.msra.mxu0 0.0
    %3471 = vmatprep.subr.mxu0 0.0
    %3472 = vmatpush1.msra.mxu0 0.0
    %3473 = vmatprep.subr.mxu0 0.0
    %3474 = vmatpush1.msra.mxu0 0.0
    %3475 = vmatprep.subr.mxu0 0.0
    %3476 = vmatpush1.msra.mxu0 0.0
    %3477 = vmatprep.subr.mxu0 0.0
    %3478 = vmatpush1.msra.mxu0 0.0
    %3479 = vmatprep.subr.mxu0 0.0
    %3480 = vmatpush1.msra.mxu0 0.0
    %3481 = vmatprep.subr.mxu0 0.0
    %3482 = vmatpush1.msra.mxu0 0.0
    %3483 = vmatprep.subr.mxu0 0.0
    %3484 = vmatpush1.msra.mxu0 0.0
    %3485 = vmatprep.subr.mxu0 0.0
    %3486 = vmatpush1.msra.mxu0 0.0
    %3487 = vmatprep.subr.mxu0 0.0
    %3488 = vmatpush1.msra.mxu0 0.0
    %3489 = vmatprep.subr.mxu0 0.0
    %3490 = vmatpush1.msra.mxu0 0.0
    %3491 = vmatprep.subr.mxu0 0.0
    %3492 = vmatpush1.msra.mxu0 0.0
    %3493 = vmatprep.subr.mxu0 0.0
    %3494 = vmatpush1.msra.mxu0 0.0
    %3495 = vmatprep.subr.mxu0 0.0
    %3496 = vmatpush1.msra.mxu0 0.0
    %3497 = vmatprep.subr.mxu0 0.0
    %3498 = vmatpush1.msra.mxu0 0.0
    %3499 = vmatprep.subr.mxu0 0.0
    %3500 = vmatpush1.msra.mxu0 0.0
    %3501 = vmatprep.subr.mxu0 0.0
    %3502 = vmatpush1.msra.mxu0 0.0
    %3503 = vmatprep.subr.mxu0 0.0
    %3504 = vmatpush1.msra.mxu0 0.0
    %3505 = vmatprep.subr.mxu0 0.0
    %3506 = vmatpush1.msra.mxu0 0.0
    %3507 = vmatprep.subr.mxu0 0.0
    %3508 = vmatpush1.msra.mxu0 0.0
    %3509 = vmatprep.subr.mxu0 0.0
    %3510 = vmatpush1.msra.mxu0 0.0
    %3511 = vmatprep.subr.mxu0 0.0
    %3512 = vmatpush1.msra.mxu0 0.0
    %3513 = vmatprep.subr.mxu0 0.0
    %3514 = vmatpush1.msra.mxu0 0.0
    %3515 = vmatprep.mubr.f32.mxu0 0.0
    %3516 = vmatmul.mubr.f32.gmra.mrb[0].mxu0 %v1961
    %v3517 = vpop.f32.mrb[0].mxu0
    %v3518 = vadd.f32 0.0, %v3517
    %v3519 = vpop.f32.mrb[0].mxu0
    %3520 = vmatprep.mubr.f32.mxu0 0.0
    %3521 = vmatmul.mubr.f32.gmra.mrb[0].mxu0 %v2035
    %v3522 = vpop.f32.mrb[0].mxu0
    %v3523 = vadd.f32 0.0, %v3522
    %v3524 = vpop.f32.mrb[0].mxu0
    %3525 = vdwg.mxu0
    %3526 = vmatprep.subr.mxu0 0.0
    %3527 = vmatpush1.msra.mxu0 %v3376
    %3528 = vmatprep.subr.mxu0 0.0
    %3529 = vmatpush1.msra.mxu0 %v3377
    %3530 = vmatprep.subr.mxu0 0.0
    %3531 = vmatpush1.msra.mxu0 %v3378
    %3532 = vmatprep.subr.mxu0 0.0
    %3533 = vmatpush1.msra.mxu0 %v3379
    %3534 = vmatprep.subr.mxu0 0.0
    %3535 = vmatpush1.msra.mxu0 0.0
    %3536 = vmatprep.subr.mxu0 0.0
    %3537 = vmatpush1.msra.mxu0 0.0
    %3538 = vmatprep.subr.mxu0 0.0
    %3539 = vmatpush1.msra.mxu0 0.0
    %3540 = vmatprep.subr.mxu0 0.0
    %3541 = vmatpush1.msra.mxu0 0.0
    %3542 = vmatprep.subr.mxu0 0.0
    %3543 = vmatpush1.msra.mxu0 0.0
    %3544 = vmatprep.subr.mxu0 0.0
    %3545 = vmatpush1.msra.mxu0 0.0
    %3546 = vmatprep.subr.mxu0 0.0
    %3547 = vmatpush1.msra.mxu0 0.0
    %3548 = vmatprep.subr.mxu0 0.0
    %3549 = vmatpush1.msra.mxu0 0.0
    %3550 = vmatprep.subr.mxu0 0.0
    %3551 = vmatpush1.msra.mxu0 0.0
    %3552 = vmatprep.subr.mxu0 0.0
    %3553 = vmatpush1.msra.mxu0 0.0
    %3554 = vmatprep.subr.mxu0 0.0
    %3555 = vmatpush1.msra.mxu0 0.0
    %3556 = vmatprep.subr.mxu0 0.0
    %3557 = vmatpush1.msra.mxu0 0.0
    %3558 = vmatprep.subr.mxu0 0.0
    %3559 = vmatpush1.msra.mxu0 0.0
    %3560 = vmatprep.subr.mxu0 0.0
    %3561 = vmatpush1.msra.mxu0 0.0
    %3562 = vmatprep.subr.mxu0 0.0
    %3563 = vmatpush1.msra.mxu0 0.0
    %3564 = vmatprep.subr.mxu0 0.0
    %3565 = vmatpush1.msra.mxu0 0.0
    %3566 = vmatprep.subr.mxu0 0.0
    %3567 = vmatpush1.msra.mxu0 0.0
    %3568 = vmatprep.subr.mxu0 0.0
    %3569 = vmatpush1.msra.mxu0 0.0
    %3570 = vmatprep.subr.mxu0 0.0
    %3571 = vmatpush1.msra.mxu0 0.0
    %3572 = vmatprep.subr.mxu0 0.0
    %3573 = vmatpush1.msra.mxu0 0.0
    %3574 = vmatprep.subr.mxu0 0.0
    %3575 = vmatpush1.msra.mxu0 0.0
    %3576 = vmatprep.subr.mxu0 0.0
    %3577 = vmatpush1.msra.mxu0 0.0
    %3578 = vmatprep.subr.mxu0 0.0
    %3579 = vmatpush1.msra.mxu0 0.0
    %3580 = vmatprep.subr.mxu0 0.0
    %3581 = vmatpush1.msra.mxu0 0.0
    %3582 = vmatprep.subr.mxu0 0.0
    %3583 = vmatpush1.msra.mxu0 0.0
    %3584 = vmatprep.subr.mxu0 0.0
    %3585 = vmatpush1.msra.mxu0 0.0
    %3586 = vmatprep.subr.mxu0 0.0
    %3587 = vmatpush1.msra.mxu0 0.0
    %3588 = vmatprep.subr.mxu0 0.0
    %3589 = vmatpush1.msra.mxu0 0.0
    %3590 = vmatprep.mubr.f32.mxu0 0.0
    %3591 = vmatmul.mubr.f32.gmra.mrb[0].mxu0 %v1961
    %v3592 = vpop.f32.mrb[0].mxu0
    %v3593 = vadd.f32 0.0, %v3592
    %v3594 = vpop.f32.mrb[0].mxu0
    %3595 = vmatprep.mubr.f32.mxu0 0.0
    %3596 = vmatmul.mubr.f32.gmra.mrb[0].mxu0 %v2035
    %v3597 = vpop.f32.mrb[0].mxu0
    %v3598 = vadd.f32 0.0, %v3597
    %v3599 = vpop.f32.mrb[0].mxu0
    %3600 = vdwg.mxu0
    %v3602 = vsel %vm270, %v3450, 0
    %v3605 = vsel %vm270, %v3518, 0
    %v3608 = vsel %vm270, %v3523, 0
    %3610 = vmatprep.subr.mxu0 0.0
    %3611 = vmatpush1.xpose.msra.mxu0 %v3605
    %3612 = vmatprep.subr.mxu0 0.0
    %3613 = vmatpush1.xpose.msra.mxu0 %v3608
    %3614 = vmatprep.subr.mxu0 0.0
    %3615 = vmatpush1.xpose.msra.mxu0 0.0
    %3616 = vmatprep.subr.mxu0 0.0
    %3617 = vmatpush1.xpose.msra.mxu0 0.0
    %3618 = vmatprep.subr.mxu0 0.0
    %3619 = vmatpush1.xpose.msra.mxu0 0.0
    %3620 = vmatprep.subr.mxu0 0.0
    %3621 = vmatpush1.xpose.msra.mxu0 0.0
    %3622 = vmatprep.subr.mxu0 0.0
    %3623 = vmatpush1.xpose.msra.mxu0 0.0
    %3624 = vmatprep.subr.mxu0 0.0
    %3625 = vmatpush1.xpose.msra.mxu0 0.0
    %3626 = vmatprep.subr.mxu0 0.0
    %3627 = vmatpush1.xpose.msra.mxu0 0.0
    %3628 = vmatprep.subr.mxu0 0.0
    %3629 = vmatpush1.xpose.msra.mxu0 0.0
    %3630 = vmatprep.subr.mxu0 0.0
    %3631 = vmatpush1.xpose.msra.mxu0 0.0
    %3632 = vmatprep.subr.mxu0 0.0
    %3633 = vmatpush1.xpose.msra.mxu0 0.0
    %3634 = vmatprep.subr.mxu0 0.0
    %3635 = vmatpush1.xpose.msra.mxu0 0.0
    %3636 = vmatprep.subr.mxu0 0.0
    %3637 = vmatpush1.xpose.msra.mxu0 0.0
    %3638 = vmatprep.subr.mxu0 0.0
    %3639 = vmatpush1.xpose.msra.mxu0 0.0
    %3640 = vmatprep.subr.mxu0 0.0
    %3641 = vmatpush1.xpose.msra.mxu0 0.0
    %3642 = vmatprep.subr.mxu0 0.0
    %3643 = vmatpush1.xpose.msra.mxu0 0.0
    %3644 = vmatprep.subr.mxu0 0.0
    %3645 = vmatpush1.xpose.msra.mxu0 0.0
    %3646 = vmatprep.subr.mxu0 0.0
    %3647 = vmatpush1.xpose.msra.mxu0 0.0
    %3648 = vmatprep.subr.mxu0 0.0
    %3649 = vmatpush1.xpose.msra.mxu0 0.0
    %3650 = vmatprep.subr.mxu0 0.0
    %3651 = vmatpush1.xpose.msra.mxu0 0.0
    %3652 = vmatprep.subr.mxu0 0.0
    %3653 = vmatpush1.xpose.msra.mxu0 0.0
    %3654 = vmatprep.subr.mxu0 0.0
    %3655 = vmatpush1.xpose.msra.mxu0 0.0
    %3656 = vmatprep.subr.mxu0 0.0
    %3657 = vmatpush1.xpose.msra.mxu0 0.0
    %3658 = vmatprep.subr.mxu0 0.0
    %3659 = vmatpush1.xpose.msra.mxu0 0.0
    %3660 = vmatprep.subr.mxu0 0.0
    %3661 = vmatpush1.xpose.msra.mxu0 0.0
    %3662 = vmatprep.subr.mxu0 0.0
    %3663 = vmatpush1.xpose.msra.mxu0 0.0
    %3664 = vmatprep.subr.mxu0 0.0
    %3665 = vmatpush1.xpose.msra.mxu0 0.0
    %3666 = vmatprep.subr.mxu0 0.0
    %3667 = vmatpush1.xpose.msra.mxu0 0.0
    %3668 = vmatprep.subr.mxu0 0.0
    %3669 = vmatpush1.xpose.msra.mxu0 0.0
    %3670 = vmatprep.subr.mxu0 0.0
    %3671 = vmatpush1.xpose.msra.mxu0 0.0
    %3672 = vmatprep.subr.mxu0 0.0
    %3673 = vmatpush1.xpose.msra.mxu0 0.0
    %3674 = vmatprep.mubr.f32.mxu0 0.0
    %3675 = vmatmul.mubr.f32.gmra.mrb[0].mxu0 %v3602
    %v3676 = vpop.f32.mrb[0].mxu0
    %v3677 = vadd.f32 0.0, %v3676
    %v3678 = vpop.f32.mrb[0].mxu0
    %3679 = vdwg.mxu0
    %v3680 = vsel %vm270, %v3677, -inf
    %3681 = vmax.xlane.f32.xlu0 %v3680
    %v3682 = vpop.xlane.xlu0 %3681
    %v3683 = vsub.f32 %v3677, %v3682
    %v3684 = vmul.f32 %v3683, 1.442695
    %v3685 = vpow.pop %v3684
    %v3686 = vsel %vm270, %v3685, 0.0
    %3687 = vadd.xlane.f32.xlu0 %v3686
    %v3688 = vpop.xlane.xlu0 %3687
    %v3689 = vrcp.pop %v3688
    %v3690 = vmul.f32 %v3685, %v3689
    %v3692 = vsel %vm270, %v3690, 0
    %3694 = vmatprep.subr.mxu0 0.0
    %3695 = vmatpush1.msra.mxu0 %v3593
    %3696 = vmatprep.subr.mxu0 0.0
    %3697 = vmatpush1.msra.mxu0 %v3598
    %3698 = vmatprep.subr.mxu0 0.0
    %3699 = vmatpush1.msra.mxu0 0.0
    %3700 = vmatprep.subr.mxu0 0.0
    %3701 = vmatpush1.msra.mxu0 0.0
    %3702 = vmatprep.subr.mxu0 0.0
    %3703 = vmatpush1.msra.mxu0 0.0
    %3704 = vmatprep.subr.mxu0 0.0
    %3705 = vmatpush1.msra.mxu0 0.0
    %3706 = vmatprep.subr.mxu0 0.0
    %3707 = vmatpush1.msra.mxu0 0.0
    %3708 = vmatprep.subr.mxu0 0.0
    %3709 = vmatpush1.msra.mxu0 0.0
    %3710 = vmatprep.subr.mxu0 0.0
    %3711 = vmatpush1.msra.mxu0 0.0
    %3712 = vmatprep.subr.mxu0 0.0
    %3713 = vmatpush1.msra.mxu0 0.0
    %3714 = vmatprep.subr.mxu0 0.0
    %3715 = vmatpush1.msra.mxu0 0.0
    %3716 = vmatprep.subr.mxu0 0.0
    %3717 = vmatpush1.msra.mxu0 0.0
    %3718 = vmatprep.subr.mxu0 0.0
    %3719 = vmatpush1.msra.mxu0 0.0
    %3720 = vmatprep.subr.mxu0 0.0
    %3721 = vmatpush1.msra.mxu0 0.0
    %3722 = vmatprep.subr.mxu0 0.0
    %3723 = vmatpush1.msra.mxu0 0.0
    %3724 = vmatprep.subr.mxu0 0.0
    %3725 = vmatpush1.msra.mxu0 0.0
    %3726 = vmatprep.subr.mxu0 0.0
    %3727 = vmatpush1.msra.mxu0 0.0
    %3728 = vmatprep.subr.mxu0 0.0
    %3729 = vmatpush1.msra.mxu0 0.0
    %3730 = vmatprep.subr.mxu0 0.0
    %3731 = vmatpush1.msra.mxu0 0.0
    %3732 = vmatprep.subr.mxu0 0.0
    %3733 = vmatpush1.msra.mxu0 0.0
    %3734 = vmatprep.subr.mxu0 0.0
    %3735 = vmatpush1.msra.mxu0 0.0
    %3736 = vmatprep.subr.mxu0 0.0
    %3737 = vmatpush1.msra.mxu0 0.0
    %3738 = vmatprep.subr.mxu0 0.0
    %3739 = vmatpush1.msra.mxu0 0.0
    %3740 = vmatprep.subr.mxu0 0.0
    %3741 = vmatpush1.msra.mxu0 0.0
    %3742 = vmatprep.subr.mxu0 0.0
    %3743 = vmatpush1.msra.mxu0 0.0
    %3744 = vmatprep.subr.mxu0 0.0
    %3745 = vmatpush1.msra.mxu0 0.0
    %3746 = vmatprep.subr.mxu0 0.0
    %3747 = vmatpush1.msra.mxu0 0.0
    %3748 = vmatprep.subr.mxu0 0.0
    %3749 = vmatpush1.msra.mxu0 0.0
    %3750 = vmatprep.subr.mxu0 0.0
    %3751 = vmatpush1.msra.mxu0 0.0
    %3752 = vmatprep.subr.mxu0 0.0
    %3753 = vmatpush1.msra.mxu0 0.0
    %3754 = vmatprep.subr.mxu0 0.0
    %3755 = vmatpush1.msra.mxu0 0.0
    %3756 = vmatprep.subr.mxu0 0.0
    %3757 = vmatpush1.msra.mxu0 0.0
    %3758 = vmatprep.mubr.f32.mxu0 0.0
    %3759 = vmatmul.mubr.f32.gmra.mrb[0].mxu0 %v3692
    %v3760 = vpop.f32.mrb[0].mxu0
    %v3761 = vadd.f32 0.0, %v3760
    %v3762 = vpop.f32.mrb[0].mxu0
    %3763 = vdwg.mxu0
    %v3764 = vld [vmem:[%s1859] sm:$0xff]
    %v3765 = vld [vmem:[%s1859 + $0x8] sm:$0xff]
    %v3767 = vsel %vm270, %v3761, 0
    %3769 = vmatprep.subr.mxu0 0.0
    %3770 = vmatpush1.msra.mxu0 %v3764
    %3771 = vmatprep.subr.mxu0 0.0
    %3772 = vmatpush1.msra.mxu0 %v3765
    %3773 = vmatprep.subr.mxu0 0.0
    %3774 = vmatpush1.msra.mxu0 0.0
    %3775 = vmatprep.subr.mxu0 0.0
    %3776 = vmatpush1.msra.mxu0 0.0
    %3777 = vmatprep.subr.mxu0 0.0
    %3778 = vmatpush1.msra.mxu0 0.0
    %3779 = vmatprep.subr.mxu0 0.0
    %3780 = vmatpush1.msra.mxu0 0.0
    %3781 = vmatprep.subr.mxu0 0.0
    %3782 = vmatpush1.msra.mxu0 0.0
    %3783 = vmatprep.subr.mxu0 0.0
    %3784 = vmatpush1.msra.mxu0 0.0
    %3785 = vmatprep.subr.mxu0 0.0
    %3786 = vmatpush1.msra.mxu0 0.0
    %3787 = vmatprep.subr.mxu0 0.0
    %3788 = vmatpush1.msra.mxu0 0.0
    %3789 = vmatprep.subr.mxu0 0.0
    %3790 = vmatpush1.msra.mxu0 0.0
    %3791 = vmatprep.subr.mxu0 0.0
    %3792 = vmatpush1.msra.mxu0 0.0
    %3793 = vmatprep.subr.mxu0 0.0
    %3794 = vmatpush1.msra.mxu0 0.0
    %3795 = vmatprep.subr.mxu0 0.0
    %3796 = vmatpush1.msra.mxu0 0.0
    %3797 = vmatprep.subr.mxu0 0.0
    %3798 = vmatpush1.msra.mxu0 0.0
    %3799 = vmatprep.subr.mxu0 0.0
    %3800 = vmatpush1.msra.mxu0 0.0
    %3801 = vmatprep.subr.mxu0 0.0
    %3802 = vmatpush1.msra.mxu0 0.0
    %3803 = vmatprep.subr.mxu0 0.0
    %3804 = vmatpush1.msra.mxu0 0.0
    %3805 = vmatprep.subr.mxu0 0.0
    %3806 = vmatpush1.msra.mxu0 0.0
    %3807 = vmatprep.subr.mxu0 0.0
    %3808 = vmatpush1.msra.mxu0 0.0
    %3809 = vmatprep.subr.mxu0 0.0
    %3810 = vmatpush1.msra.mxu0 0.0
    %3811 = vmatprep.subr.mxu0 0.0
    %3812 = vmatpush1.msra.mxu0 0.0
    %3813 = vmatprep.subr.mxu0 0.0
    %3814 = vmatpush1.msra.mxu0 0.0
    %3815 = vmatprep.subr.mxu0 0.0
    %3816 = vmatpush1.msra.mxu0 0.0
    %3817 = vmatprep.subr.mxu0 0.0
    %3818 = vmatpush1.msra.mxu0 0.0
    %3819 = vmatprep.subr.mxu0 0.0
    %3820 = vmatpush1.msra.mxu0 0.0
    %3821 = vmatprep.subr.mxu0 0.0
    %3822 = vmatpush1.msra.mxu0 0.0
    %3823 = vmatprep.subr.mxu0 0.0
    %3824 = vmatpush1.msra.mxu0 0.0
    %3825 = vmatprep.subr.mxu0 0.0
    %3826 = vmatpush1.msra.mxu0 0.0
    %3827 = vmatprep.subr.mxu0 0.0
    %3828 = vmatpush1.msra.mxu0 0.0
    %3829 = vmatprep.subr.mxu0 0.0
    %3830 = vmatpush1.msra.mxu0 0.0
    %3831 = vmatprep.subr.mxu0 0.0
    %3832 = vmatpush1.msra.mxu0 0.0
    %3833 = vmatprep.mubr.f32.mxu0 0.0
    %3834 = vmatmul.mubr.f32.gmra.mrb[0].mxu0 %v3767
    %v3835 = vpop.f32.mrb[0].mxu0
    %v3836 = vadd.f32 0.0, %v3835
    %v3837 = vpop.f32.mrb[0].mxu0
    %3838 = vdwg.mxu0
    %v3839 = vadd.f32 %v3367, %v3836
    %v3840 = vadd.f32 %v3839, %v1940
    %s3841 = scalar_lea.vmem [#allocation2], 8
    %3842 = vst.msk [vmem:[%s3841] sm:$0xff] %vm42, %v3840
    // Predicated region
    $region30: #{tpu_custom_call.1} parent=1 // pred_check
      _
    $region31: #{tpu_custom_call.1} parent=1 // pred_check_branch
      %3844 = sbr.rel (0) target = $region33
    $region32: #{tpu_custom_call.1} parent=1 // pred_region
      %s3846 = ssub.s32 256, 256
      %3847 = vsyncadd [#allocation3], %s3846
      %s3848 = sshll.u32 [#allocation2], 4
      %s3849 = int_to_ptr.vmem [resolvable:$true] %s3848
      %3854 = dma.vmem_to_hbm [thread:$0]  %s3849, 256, %s7, [#allocation3], 128, 128, 8
    $region33: #{tpu_custom_call.1} parent=1 // pred_fallthru
      _
    // Predicated region
    $region34: #{tpu_custom_call.1} parent=1 // pred_check
      _
    $region35: #{tpu_custom_call.1} parent=1 // pred_check_branch
      %3856 = sbr.rel (0) target = $region37
    $region36: #{tpu_custom_call.1} parent=1 // pred_region
      %3857 = dma.done [#allocation3], 256
    $region37: #{tpu_custom_call.1} parent=1 // pred_fallthru
      _
    %3858 = vsyncpa [#allocation3], 1

</llo_original>
